<compile_context>
chip_gen: v7x
topology: tpu7x:2x2x1
jax: 0.10.0
libtpu: 0.0.40
codegen_flags: <defaults>
</compile_context>

<pallas_src>
import math
import numpy as np
import jax
import jax.numpy as jnp
from jax.experimental import pallas as pl
from jax.experimental.pallas import tpu as pltpu

# ----------------------------- configuration ---------------------------------
BS = 2                 # batch size
T_LEN = 8              # time_length
CHAN = 19              # num_sensors (region map requires the 19 MODMA channels)
D_IN = 32              # input_dim (feature dim -> TPU lanes)
D_OUT = 8              # output_dim
T_WIN = 4              # time_window_size
STRIDE = 2
K_GCN = 3              # electrode-level GCN order
K_R_GCN = 2            # region-level GCN order
N_REG = 7              # regions (fixed by region_select)
DQ = D_IN // 4
N_WIN = (T_LEN - T_WIN) // STRIDE + 1
N_NODE = T_WIN * CHAN          # 76
R_NODE = N_REG * T_WIN         # 28
B_TOT = BS * N_WIN             # 6
BN_EPS = 1e-5

# grid: 2 "parallel" steps -> one half of the batch per TensorCore on v7x,
# two cheap sequential steps on v5e/v6e (single TC).
N_STEPS = 2
B_BLK = B_TOT // N_STEPS       # 3 window-graphs per grid step

# packed weight-slab row layout (all pieces start at lane 0; every row offset is
# a multiple of 8 sublanes, so in-kernel slices are relayout-free):
ROW_QKE = 0                            # [Wq_e | Wk_e]            (32, 16)
ROW_QKR = D_IN                         # [Wq_r | Wk_r]            (32, 16)
ROW_GE = 2 * D_IN                      # stacked electrode GCN W  (96,  8)
ROW_GR = 2 * D_IN + K_GCN * D_IN       # stacked region GCN W     (64,  8)
SLAB_ROWS = ROW_GR + K_R_GCN * D_IN    # 224
SLAB_COLS = 2 * DQ                     # 16


# ----------------------------- in-kernel helpers ------------------------------
def _mm(a, b):
    # Native MXU path: bf16 operands, f32 accumulation (reference uses the same
    # precision policy, so kernel vs reference agreement stays ~1e-5).
    return jnp.dot(a.astype(jnp.bfloat16), b.astype(jnp.bfloat16),
                   preferred_element_type=jnp.float32)


def _mm_nt(a, b):
    # a @ b.T without materializing a transpose.
    return jax.lax.dot_general(a.astype(jnp.bfloat16), b.astype(jnp.bfloat16),
                               (((1,), (1,)), ((), ())),
                               preferred_element_type=jnp.float32)


def _softmax_last(d):
    m = jnp.max(d, axis=-1, keepdims=True)
    e = jnp.exp(d - m)
    return e / jnp.sum(e, axis=-1, keepdims=True)


# ----------------------------------- kernel -----------------------------------
def dctgcn_kernel(x_ref, bn_ref, w_ref, p_ref, pt_ref, q_ref,
                  xout_ref, ae_ref, ar_ref):
    # Fused: BN normalize + electrode attention/GCN + region attention/GCN +
    # window-time mean, for B_BLK window-graphs per grid step.
    mean = bn_ref[0:1, :]                                # (1, D_IN)
    rstd = bn_ref[1:2, :]                                # (1, D_IN)

    w = w_ref[...]                                       # (224, 16) packed slab
    w_qke = w[ROW_QKE:ROW_QKE + D_IN, :]                 # (32, 16) = [Wq_e|Wk_e]
    w_qkr = w[ROW_QKR:ROW_QKR + D_IN, :]                 # (32, 16) = [Wq_r|Wk_r]
    w_ge = w[ROW_GE:ROW_GE + K_GCN * D_IN, 0:D_OUT]      # (96, 8)
    w_gr = w[ROW_GR:ROW_GR + K_R_GCN * D_IN, 0:D_OUT]    # (64, 8)

    p = p_ref[...]                                       # (R_NODE, N_NODE)
    pt = pt_ref[...]                                     # (N_NODE, R_NODE)
    qpar = q_ref[...]                                    # (N_NODE, D_IN)

    for b in range(B_BLK):                               # short static unroll
        xb = (x_ref[b] - mean) * rstd                    # BatchNorm (batch stats)

        # ------- electrode level: attention adjacency + K-hop GCN -------------
        qk = _mm(xb, w_qke)                              # q|k in one matmul
        dots = _mm_nt(qk[:, 0:DQ], qk[:, DQ:2 * DQ])     # (N, N), scale = 1/Tem = 1
        a_e = _softmax_last(dots)
        ax = _mm(a_e, xb)                                # A x
        aax = _mm(a_e, ax)                               # A^2 x
        # collapsed K-hop GCN: one 96-deep matmul instead of K tiny ones
        out_e = jnp.maximum(
            _mm(jnp.concatenate([xb, ax, aax], axis=-1), w_ge), 0.0)

        # ------- region level: N2R -> R2R -> R2N -------------------------------
        xf = jnp.maximum(qpar * xb, 0.0)                 # relu(Q * x)
        x_reg = _mm(p, xf)                               # (R, D)
        qkr = _mm(x_reg, w_qkr)
        dots_r = _mm_nt(qkr[:, 0:DQ], qkr[:, DQ:2 * DQ])
        a_r = _softmax_last(dots_r)
        arx = _mm(a_r, x_reg)
        out_r = jnp.maximum(
            _mm(jnp.concatenate([x_reg, arx], axis=-1), w_gr), 0.0)
        reg2node = _mm(pt, out_r)                        # (N, D_OUT)

        # ------- combine + mean over the window's time axis (VPU slice-add) ----
        comb = out_e + reg2node                          # (N_NODE, D_OUT)
        acc = comb[0:CHAN]
        for t in range(1, T_WIN):
            acc = acc + comb[t * CHAN:(t + 1) * CHAN]
        xout_ref[b] = acc * (1.0 / T_WIN)
        ae_ref[b] = a_e
        ar_ref[b] = a_r


# --------------------------------- wrappers ------------------------------------
def _conv_graph_st(inp):
    # Conv_GraphST window extraction (pure data rearrangement; node = t*CHAN + s,
    # matching the torch transpose(2,3)+reshape ordering).
    windows = [inp[:, w * STRIDE: w * STRIDE + T_WIN] for w in range(N_WIN)]
    x = jnp.stack(windows, axis=1)                 # (bs, L, twin, chan, D)
    return x.reshape(B_TOT, N_NODE, D_IN)


def _pack_weights(wq_e, wk_e, wq_r, wk_r, wge, wgr):
    pad = lambda m: jnp.pad(m, ((0, 0), (0, SLAB_COLS - m.shape[1])))
    return jnp.concatenate([
        jnp.concatenate([wq_e, wk_e], axis=1),              # rows ROW_QKE
        jnp.concatenate([wq_r, wk_r], axis=1),              # rows ROW_QKR
        pad(wge.reshape(K_GCN * D_IN, D_OUT)),              # rows ROW_GE
        pad(wgr.reshape(K_R_GCN * D_IN, D_OUT)),            # rows ROW_GR
    ], axis=0)                                              # (224, 16)


def dctgcn_forward(inp, params):
    wq_e, wk_e, wge, qpar, p_mat, pt_mat, wq_r, wk_r, wgr = params

    x = _conv_graph_st(inp)                                 # (B_TOT, N_NODE, D_IN)

    # BatchNorm1d batch statistics (training mode, gamma=1, beta=0, biased var):
    # a tiny reduction -> plain JAX; normalization happens inside the kernel.
    mean = jnp.mean(x, axis=(0, 1))
    var = jnp.mean(jnp.square(x - mean), axis=(0, 1))
    bn = jnp.stack([mean, jax.lax.rsqrt(var + BN_EPS)], axis=0)   # (2, D_IN)

    w_slab = _pack_weights(wq_e, wk_e, wq_r, wk_r, wge, wgr)

    xout, a_e, a_r = pl.pallas_call(
        dctgcn_kernel,
        out_shape=[
            jax.ShapeDtypeStruct((B_TOT, CHAN, D_OUT), jnp.float32),
            jax.ShapeDtypeStruct((B_TOT, N_NODE, N_NODE), jnp.float32),
            jax.ShapeDtypeStruct((B_TOT, R_NODE, R_NODE), jnp.float32),
        ],
        grid=(N_STEPS,),
        in_specs=[
            pl.BlockSpec((B_BLK, N_NODE, D_IN), lambda i: (i, 0, 0)),    # x
            pl.BlockSpec((2, D_IN), lambda i: (0, 0)),                   # BN mean/rstd
            pl.BlockSpec((SLAB_ROWS, SLAB_COLS), lambda i: (0, 0)),      # packed weights
            pl.BlockSpec((R_NODE, N_NODE), lambda i: (0, 0)),            # P
            pl.BlockSpec((N_NODE, R_NODE), lambda i: (0, 0)),            # P^T
            pl.BlockSpec((N_NODE, D_IN), lambda i: (0, 0)),              # Q parameter
        ],
        out_specs=[
            pl.BlockSpec((B_BLK, CHAN, D_OUT), lambda i: (i, 0, 0)),
            pl.BlockSpec((B_BLK, N_NODE, N_NODE), lambda i: (i, 0, 0)),
            pl.BlockSpec((B_BLK, R_NODE, R_NODE), lambda i: (i, 0, 0)),
        ],
        compiler_params=pltpu.CompilerParams(dimension_semantics=("parallel",)),
    )(x, bn, w_slab, p_mat, pt_mat, qpar)

    return xout.reshape(BS, N_WIN, CHAN, D_OUT), a_e, a_r


# ------------------------- pure-JAX reference (for check) ----------------------
def reference(inp, params):
    wq_e, wk_e, wge, qpar, p_mat, pt_mat, wq_r, wk_r, wgr = params
    x = _conv_graph_st(inp)
    mean = x.mean(axis=(0, 1), keepdims=True)
    var = jnp.square(x - mean).mean(axis=(0, 1), keepdims=True)
    xb = (x - mean) / jnp.sqrt(var + BN_EPS)

    def mm(a, b):   # same matmul precision policy as the kernel (bf16 in, f32 acc)
        return jnp.matmul(a.astype(jnp.bfloat16), b.astype(jnp.bfloat16),
                          preferred_element_type=jnp.float32)

    def softmax(d):
        m = jnp.max(d, axis=-1, keepdims=True)
        e = jnp.exp(d - m)
        return e / jnp.sum(e, axis=-1, keepdims=True)

    def gcn(xx, a, w, K):   # module-literal K-hop form (kernel uses collapsed form)
        h, out = xx, 0.0
        for kk in range(K):
            out = out + mm(h, w[kk])
            if kk + 1 < K:
                h = mm(a, h)
        return jnp.maximum(out, 0.0)

    q = mm(xb, wq_e)
    k = mm(xb, wk_e)
    a_e = softmax(mm(q, jnp.swapaxes(k, -1, -2)))
    out_e = gcn(xb, a_e, wge, K_GCN)

    xf = jnp.maximum(qpar[None] * xb, 0.0)
    x_reg = mm(p_mat, xf)
    qr = mm(x_reg, wq_r)
    kr = mm(x_reg, wk_r)
    a_r = softmax(mm(qr, jnp.swapaxes(kr, -1, -2)))
    out_r = gcn(x_reg, a_r, wgr, K_R_GCN)
    reg2node = mm(pt_mat, out_r)

    comb = out_e + reg2node
    xout = comb.reshape(B_TOT, T_WIN, CHAN, D_OUT).mean(axis=1)
    return xout.reshape(BS, N_WIN, CHAN, D_OUT), a_e, a_r


# ------------------------------ parameter setup --------------------------------
def make_params(key):
    def xavier(k, shape):
        limit = math.sqrt(6.0 / (shape[0] + shape[1]))
        return jax.random.uniform(k, shape, jnp.float32, -limit, limit)

    ks = jax.random.split(key, 7)
    wq_e = xavier(ks[0], (D_IN, DQ))
    wk_e = xavier(ks[1], (D_IN, DQ))
    wq_r = xavier(ks[2], (D_IN, DQ))
    wk_r = xavier(ks[3], (D_IN, DQ))
    wge = 0.1 * jax.random.normal(ks[4], (K_GCN, D_IN, D_OUT), jnp.float32)
    wgr = 0.1 * jax.random.normal(ks[5], (K_R_GCN, D_IN, D_OUT), jnp.float32)
    qpar = jax.random.normal(ks[6], (N_NODE, D_IN), jnp.float32)

    # region_select('MODMA', opt_idx=1)
    reg2chan = {'R1': [0, 1], 'R2': [3, 4, 2, 5, 6], 'R3': [8, 9],
                'R4': [12, 13, 14], 'R5': [16, 17, 18], 'R6': [7, 11], 'R7': [10, 15]}
    p_small = np.zeros((N_REG, CHAN), np.float32)
    for i, idxs in enumerate(reg2chan.values()):
        p_small[i, idxs] = 1.0
    p_small /= p_small.sum(axis=1, keepdims=True)
    p_expand = np.zeros((R_NODE, N_NODE), np.float32)
    for i in range(T_WIN):
        p_expand[i * N_REG:(i + 1) * N_REG, i * CHAN:(i + 1) * CHAN] = p_small

    p_mat = jnp.asarray(p_expand)
    pt_mat = jnp.asarray(p_expand.T.copy())
    return (wq_e, wk_e, wge, qpar, p_mat, pt_mat, wq_r, wk_r, wgr)


# ----------------------------------- main ---------------------------------------
if __name__ == "__main__":
    key = jax.random.PRNGKey(0)
    k_in, k_par = jax.random.split(key)
    inp = jax.random.normal(k_in, (BS, T_LEN, CHAN, D_IN), jnp.float32)
    params = make_params(k_par)

    fwd = jax.jit(dctgcn_forward)
    x_out, a_e, a_r = fwd(inp, params)
    jax.block_until_ready((x_out, a_e, a_r))

    # sanity check against a pure-JAX reference with the same precision policy
    x_ref, ae_ref, ar_ref = jax.jit(reference)(inp, params)
    jax.block_until_ready((x_ref, ae_ref, ar_ref))
    assert x_out.shape == (BS, N_WIN, CHAN, D_OUT)
    assert a_e.shape == (B_TOT, N_NODE, N_NODE)
    assert a_r.shape == (B_TOT, R_NODE, R_NODE)
    ok = (jnp.allclose(x_out, x_ref, rtol=1e-2, atol=1e-2)
          and jnp.allclose(a_e, ae_ref, rtol=1e-2, atol=1e-2)
          and jnp.allclose(a_r, ar_ref, rtol=1e-2, atol=1e-2))
    if not ok:
        raise RuntimeError("Pallas kernel output mismatch vs JAX reference")
    print("KERNEL_OK")
</pallas_src>

<mosaic_0001>
module attributes {stable_mosaic.version = 11 : i64} {
  func.func @dctgcn_kernel(%arg0: i32, %arg1: memref<3x76x32xf32, #tpu.memory_space<vmem>>, %arg2: memref<2x32xf32, #tpu.memory_space<vmem>>, %arg3: memref<224x16xf32, #tpu.memory_space<vmem>>, %arg4: memref<28x76xf32, #tpu.memory_space<vmem>>, %arg5: memref<76x28xf32, #tpu.memory_space<vmem>>, %arg6: memref<76x32xf32, #tpu.memory_space<vmem>>, %arg7: memref<3x19x8xf32, #tpu.memory_space<vmem>>, %arg8: memref<3x76x76xf32, #tpu.memory_space<vmem>>, %arg9: memref<3x28x28xf32, #tpu.memory_space<vmem>>) attributes {dimension_semantics = [#tpu.dimension_semantics<parallel>], iteration_bounds = array<i64: 2>, scalar_prefetch = 0 : i64, scratch_operands = 0 : i64, tpu.core_type = #tpu.core_type<tc>, window_params = [{transform_indices = @transform_0, window_bounds = array<i64: 3, 76, 32>}, {pipeline_mode = #tpu.pipeline_mode<synchronous>, transform_indices = @transform_1, window_bounds = array<i64: 2, 32>}, {pipeline_mode = #tpu.pipeline_mode<synchronous>, transform_indices = @transform_2, window_bounds = array<i64: 224, 16>}, {pipeline_mode = #tpu.pipeline_mode<synchronous>, transform_indices = @transform_3, window_bounds = array<i64: 28, 76>}, {pipeline_mode = #tpu.pipeline_mode<synchronous>, transform_indices = @transform_4, window_bounds = array<i64: 76, 28>}, {pipeline_mode = #tpu.pipeline_mode<synchronous>, transform_indices = @transform_5, window_bounds = array<i64: 76, 32>}, {transform_indices = @transform_6, window_bounds = array<i64: 3, 19, 8>}, {transform_indices = @transform_7, window_bounds = array<i64: 3, 76, 76>}, {transform_indices = @transform_8, window_bounds = array<i64: 3, 28, 28>}]} {
    %c0 = arith.constant 0 : index
    %c0_0 = arith.constant 0 : index
    %0 = vector.load %arg2[%c0, %c0_0] : memref<2x32xf32, #tpu.memory_space<vmem>>, vector<1x32xf32>
    %c1 = arith.constant 1 : index
    %c0_1 = arith.constant 0 : index
    %1 = vector.load %arg2[%c1, %c0_1] : memref<2x32xf32, #tpu.memory_space<vmem>>, vector<1x32xf32>
    %c0_2 = arith.constant 0 : index
    %c0_3 = arith.constant 0 : index
    %2 = vector.load %arg3[%c0_2, %c0_3] : memref<224x16xf32, #tpu.memory_space<vmem>>, vector<224x16xf32>
    %3 = vector.extract_strided_slice %2 {offsets = [0, 0], sizes = [32, 16], strides = [1, 1]} : vector<224x16xf32> to vector<32x16xf32>
    %4 = vector.extract_strided_slice %2 {offsets = [32, 0], sizes = [32, 16], strides = [1, 1]} : vector<224x16xf32> to vector<32x16xf32>
    %5 = vector.extract_strided_slice %2 {offsets = [64, 0], sizes = [96, 8], strides = [1, 1]} : vector<224x16xf32> to vector<96x8xf32>
    %6 = vector.extract_strided_slice %2 {offsets = [160, 0], sizes = [64, 8], strides = [1, 1]} : vector<224x16xf32> to vector<64x8xf32>
    %c0_4 = arith.constant 0 : index
    %c0_5 = arith.constant 0 : index
    %7 = vector.load %arg4[%c0_4, %c0_5] : memref<28x76xf32, #tpu.memory_space<vmem>>, vector<28x76xf32>
    %c0_6 = arith.constant 0 : index
    %c0_7 = arith.constant 0 : index
    %8 = vector.load %arg5[%c0_6, %c0_7] : memref<76x28xf32, #tpu.memory_space<vmem>>, vector<76x28xf32>
    %c0_8 = arith.constant 0 : index
    %c0_9 = arith.constant 0 : index
    %9 = vector.load %arg6[%c0_8, %c0_9] : memref<76x32xf32, #tpu.memory_space<vmem>>, vector<76x32xf32>
    %c0_10 = arith.constant 0 : index
    %c0_11 = arith.constant 0 : index
    %c0_12 = arith.constant 0 : index
    %10 = vector.load %arg1[%c0_10, %c0_11, %c0_12] : memref<3x76x32xf32, #tpu.memory_space<vmem>>, vector<1x76x32xf32>
    %11 = vector.shape_cast %10 : vector<1x76x32xf32> to vector<76x32xf32>
    %12 = vector.broadcast %0 : vector<1x32xf32> to vector<76x32xf32>
    %13 = arith.subf %11, %12 : vector<76x32xf32>
    %14 = vector.broadcast %1 : vector<1x32xf32> to vector<76x32xf32>
    %15 = arith.mulf %13, %14 : vector<76x32xf32>
    %16 = arith.truncf %15 : vector<76x32xf32> to vector<76x32xbf16>
    %17 = arith.truncf %3 : vector<32x16xf32> to vector<32x16xbf16>
    %cst = arith.constant dense<0.000000e+00> : vector<76x16xf32>
    %18 = tpu.matmul %16, %17, %cst {dimension_numbers = #tpu.dot_dimension_numbers<[1], [0], [0], [1], [0, 0, 1, 1], [], []>} : vector<76x32xbf16>, vector<32x16xbf16>, vector<76x16xf32> -> vector<76x16xf32>
    %19 = vector.extract_strided_slice %18 {offsets = [0, 0], sizes = [76, 8], strides = [1, 1]} : vector<76x16xf32> to vector<76x8xf32>
    %20 = vector.extract_strided_slice %18 {offsets = [0, 8], sizes = [76, 8], strides = [1, 1]} : vector<76x16xf32> to vector<76x8xf32>
    %21 = arith.truncf %19 : vector<76x8xf32> to vector<76x8xbf16>
    %22 = arith.truncf %20 : vector<76x8xf32> to vector<76x8xbf16>
    %cst_13 = arith.constant dense<0.000000e+00> : vector<76x76xf32>
    %23 = tpu.matmul %21, %22, %cst_13 {dimension_numbers = #tpu.dot_dimension_numbers<[1], [1], [0], [0], [0, 0, 1, 0], [], []>} : vector<76x8xbf16>, vector<76x8xbf16>, vector<76x76xf32> -> vector<76x76xf32>
    %cst_14 = arith.constant dense<0xFF800000> : vector<76xf32>
    %24 = vector.multi_reduction <maximumf>, %23, %cst_14 [1] : vector<76x76xf32> to vector<76xf32>
    %25 = vector.shape_cast %24 : vector<76xf32> to vector<76x1xf32>
    %26 = vector.broadcast %25 : vector<76x1xf32> to vector<76x76xf32>
    %27 = arith.subf %23, %26 : vector<76x76xf32>
    %28 = math.exp %27 : vector<76x76xf32>
    %cst_15 = arith.constant dense<0.000000e+00> : vector<76xf32>
    %29 = vector.multi_reduction <add>, %28, %cst_15 [1] : vector<76x76xf32> to vector<76xf32>
    %30 = vector.shape_cast %29 : vector<76xf32> to vector<76x1xf32>
    %31 = vector.broadcast %30 : vector<76x1xf32> to vector<76x76xf32>
    %32 = arith.divf %28, %31 : vector<76x76xf32>
    %33 = arith.truncf %32 : vector<76x76xf32> to vector<76x76xbf16>
    %34 = arith.truncf %15 : vector<76x32xf32> to vector<76x32xbf16>
    %cst_16 = arith.constant dense<0.000000e+00> : vector<76x32xf32>
    %35 = tpu.matmul %33, %34, %cst_16 {dimension_numbers = #tpu.dot_dimension_numbers<[1], [0], [0], [1], [0, 0, 1, 1], [], []>} : vector<76x76xbf16>, vector<76x32xbf16>, vector<76x32xf32> -> vector<76x32xf32>
    %36 = arith.truncf %32 : vector<76x76xf32> to vector<76x76xbf16>
    %37 = arith.truncf %35 : vector<76x32xf32> to vector<76x32xbf16>
    %cst_17 = arith.constant dense<0.000000e+00> : vector<76x32xf32>
    %38 = tpu.matmul %36, %37, %cst_17 {dimension_numbers = #tpu.dot_dimension_numbers<[1], [0], [0], [1], [0, 0, 1, 1], [], []>} : vector<76x76xbf16>, vector<76x32xbf16>, vector<76x32xf32> -> vector<76x32xf32>
    %39 = tpu.concatenate %15, %35, %38 in 1 : vector<76x32xf32>, vector<76x32xf32>, vector<76x32xf32> -> vector<76x96xf32>
    %40 = arith.truncf %39 : vector<76x96xf32> to vector<76x96xbf16>
    %41 = arith.truncf %5 : vector<96x8xf32> to vector<96x8xbf16>
    %cst_18 = arith.constant dense<0.000000e+00> : vector<76x8xf32>
    %42 = tpu.matmul %40, %41, %cst_18 {dimension_numbers = #tpu.dot_dimension_numbers<[1], [0], [0], [1], [0, 0, 1, 1], [], []>} : vector<76x96xbf16>, vector<96x8xbf16>, vector<76x8xf32> -> vector<76x8xf32>
    %cst_19 = arith.constant 0.000000e+00 : f32
    %43 = vector.broadcast %cst_19 : f32 to vector<76x8xf32>
    %44 = arith.maximumf %42, %43 : vector<76x8xf32>
    %45 = arith.mulf %9, %15 : vector<76x32xf32>
    %cst_20 = arith.constant 0.000000e+00 : f32
    %46 = vector.broadcast %cst_20 : f32 to vector<76x32xf32>
    %47 = arith.maximumf %45, %46 : vector<76x32xf32>
    %48 = arith.truncf %7 : vector<28x76xf32> to vector<28x76xbf16>
    %49 = arith.truncf %47 : vector<76x32xf32> to vector<76x32xbf16>
    %cst_21 = arith.constant dense<0.000000e+00> : vector<28x32xf32>
    %50 = tpu.matmul %48, %49, %cst_21 {dimension_numbers = #tpu.dot_dimension_numbers<[1], [0], [0], [1], [0, 0, 1, 1], [], []>} : vector<28x76xbf16>, vector<76x32xbf16>, vector<28x32xf32> -> vector<28x32xf32>
    %51 = arith.truncf %50 : vector<28x32xf32> to vector<28x32xbf16>
    %52 = arith.truncf %4 : vector<32x16xf32> to vector<32x16xbf16>
    %cst_22 = arith.constant dense<0.000000e+00> : vector<28x16xf32>
    %53 = tpu.matmul %51, %52, %cst_22 {dimension_numbers = #tpu.dot_dimension_numbers<[1], [0], [0], [1], [0, 0, 1, 1], [], []>} : vector<28x32xbf16>, vector<32x16xbf16>, vector<28x16xf32> -> vector<28x16xf32>
    %54 = vector.extract_strided_slice %53 {offsets = [0, 0], sizes = [28, 8], strides = [1, 1]} : vector<28x16xf32> to vector<28x8xf32>
    %55 = vector.extract_strided_slice %53 {offsets = [0, 8], sizes = [28, 8], strides = [1, 1]} : vector<28x16xf32> to vector<28x8xf32>
    %56 = arith.truncf %54 : vector<28x8xf32> to vector<28x8xbf16>
    %57 = arith.truncf %55 : vector<28x8xf32> to vector<28x8xbf16>
    %cst_23 = arith.constant dense<0.000000e+00> : vector<28x28xf32>
    %58 = tpu.matmul %56, %57, %cst_23 {dimension_numbers = #tpu.dot_dimension_numbers<[1], [1], [0], [0], [0, 0, 1, 0], [], []>} : vector<28x8xbf16>, vector<28x8xbf16>, vector<28x28xf32> -> vector<28x28xf32>
    %cst_24 = arith.constant dense<0xFF800000> : vector<28xf32>
    %59 = vector.multi_reduction <maximumf>, %58, %cst_24 [1] : vector<28x28xf32> to vector<28xf32>
    %60 = vector.shape_cast %59 : vector<28xf32> to vector<28x1xf32>
    %61 = vector.broadcast %60 : vector<28x1xf32> to vector<28x28xf32>
    %62 = arith.subf %58, %61 : vector<28x28xf32>
    %63 = math.exp %62 : vector<28x28xf32>
    %cst_25 = arith.constant dense<0.000000e+00> : vector<28xf32>
    %64 = vector.multi_reduction <add>, %63, %cst_25 [1] : vector<28x28xf32> to vector<28xf32>
    %65 = vector.shape_cast %64 : vector<28xf32> to vector<28x1xf32>
    %66 = vector.broadcast %65 : vector<28x1xf32> to vector<28x28xf32>
    %67 = arith.divf %63, %66 : vector<28x28xf32>
    %68 = arith.truncf %67 : vector<28x28xf32> to vector<28x28xbf16>
    %69 = arith.truncf %50 : vector<28x32xf32> to vector<28x32xbf16>
    %cst_26 = arith.constant dense<0.000000e+00> : vector<28x32xf32>
    %70 = tpu.matmul %68, %69, %cst_26 {dimension_numbers = #tpu.dot_dimension_numbers<[1], [0], [0], [1], [0, 0, 1, 1], [], []>} : vector<28x28xbf16>, vector<28x32xbf16>, vector<28x32xf32> -> vector<28x32xf32>
    %71 = tpu.concatenate %50, %70 in 1 : vector<28x32xf32>, vector<28x32xf32> -> vector<28x64xf32>
    %72 = arith.truncf %71 : vector<28x64xf32> to vector<28x64xbf16>
    %73 = arith.truncf %6 : vector<64x8xf32> to vector<64x8xbf16>
    %cst_27 = arith.constant dense<0.000000e+00> : vector<28x8xf32>
    %74 = tpu.matmul %72, %73, %cst_27 {dimension_numbers = #tpu.dot_dimension_numbers<[1], [0], [0], [1], [0, 0, 1, 1], [], []>} : vector<28x64xbf16>, vector<64x8xbf16>, vector<28x8xf32> -> vector<28x8xf32>
    %cst_28 = arith.constant 0.000000e+00 : f32
    %75 = vector.broadcast %cst_28 : f32 to vector<28x8xf32>
    %76 = arith.maximumf %74, %75 : vector<28x8xf32>
    %77 = arith.truncf %8 : vector<76x28xf32> to vector<76x28xbf16>
    %78 = arith.truncf %76 : vector<28x8xf32> to vector<28x8xbf16>
    %cst_29 = arith.constant dense<0.000000e+00> : vector<76x8xf32>
    %79 = tpu.matmul %77, %78, %cst_29 {dimension_numbers = #tpu.dot_dimension_numbers<[1], [0], [0], [1], [0, 0, 1, 1], [], []>} : vector<76x28xbf16>, vector<28x8xbf16>, vector<76x8xf32> -> vector<76x8xf32>
    %80 = arith.addf %44, %79 : vector<76x8xf32>
    %81 = vector.extract_strided_slice %80 {offsets = [0, 0], sizes = [19, 8], strides = [1, 1]} : vector<76x8xf32> to vector<19x8xf32>
    %82 = vector.extract_strided_slice %80 {offsets = [19, 0], sizes = [19, 8], strides = [1, 1]} : vector<76x8xf32> to vector<19x8xf32>
    %83 = arith.addf %81, %82 : vector<19x8xf32>
    %84 = vector.extract_strided_slice %80 {offsets = [38, 0], sizes = [19, 8], strides = [1, 1]} : vector<76x8xf32> to vector<19x8xf32>
    %85 = arith.addf %83, %84 : vector<19x8xf32>
    %86 = vector.extract_strided_slice %80 {offsets = [57, 0], sizes = [19, 8], strides = [1, 1]} : vector<76x8xf32> to vector<19x8xf32>
    %87 = arith.addf %85, %86 : vector<19x8xf32>
    %cst_30 = arith.constant 2.500000e-01 : f32
    %88 = vector.broadcast %cst_30 : f32 to vector<19x8xf32>
    %89 = arith.mulf %87, %88 : vector<19x8xf32>
    %c0_31 = arith.constant 0 : index
    %c0_32 = arith.constant 0 : index
    %c0_33 = arith.constant 0 : index
    %90 = vector.load %arg7[%c0_31, %c0_32, %c0_33] : memref<3x19x8xf32, #tpu.memory_space<vmem>>, vector<1x19x8xf32>
    %91 = vector.shape_cast %90 : vector<1x19x8xf32> to vector<19x8xf32>
    %92 = vector.shape_cast %89 : vector<19x8xf32> to vector<1x19x8xf32>
    tpu.vector_store %arg7[%c0_31, %c0_32, %c0_33], %92 {strides = array<i32>} : memref<3x19x8xf32, #tpu.memory_space<vmem>>, vector<1x19x8xf32>,
    %c0_34 = arith.constant 0 : index
    %c0_35 = arith.constant 0 : index
    %c0_36 = arith.constant 0 : index
    %93 = vector.load %arg8[%c0_34, %c0_35, %c0_36] : memref<3x76x76xf32, #tpu.memory_space<vmem>>, vector<1x76x76xf32>
    %94 = vector.shape_cast %93 : vector<1x76x76xf32> to vector<76x76xf32>
    %95 = vector.shape_cast %32 : vector<76x76xf32> to vector<1x76x76xf32>
    tpu.vector_store %arg8[%c0_34, %c0_35, %c0_36], %95 {strides = array<i32>} : memref<3x76x76xf32, #tpu.memory_space<vmem>>, vector<1x76x76xf32>,
    %c0_37 = arith.constant 0 : index
    %c0_38 = arith.constant 0 : index
    %c0_39 = arith.constant 0 : index
    %96 = vector.load %arg9[%c0_37, %c0_38, %c0_39] : memref<3x28x28xf32, #tpu.memory_space<vmem>>, vector<1x28x28xf32>
    %97 = vector.shape_cast %96 : vector<1x28x28xf32> to vector<28x28xf32>
    %98 = vector.shape_cast %67 : vector<28x28xf32> to vector<1x28x28xf32>
    tpu.vector_store %arg9[%c0_37, %c0_38, %c0_39], %98 {strides = array<i32>} : memref<3x28x28xf32, #tpu.memory_space<vmem>>, vector<1x28x28xf32>,
    %c1_40 = arith.constant 1 : index
    %c0_41 = arith.constant 0 : index
    %c0_42 = arith.constant 0 : index
    %99 = vector.load %arg1[%c1_40, %c0_41, %c0_42] : memref<3x76x32xf32, #tpu.memory_space<vmem>>, vector<1x76x32xf32>
    %100 = vector.shape_cast %99 : vector<1x76x32xf32> to vector<76x32xf32>
    %101 = vector.broadcast %0 : vector<1x32xf32> to vector<76x32xf32>
    %102 = arith.subf %100, %101 : vector<76x32xf32>
    %103 = vector.broadcast %1 : vector<1x32xf32> to vector<76x32xf32>
    %104 = arith.mulf %102, %103 : vector<76x32xf32>
    %105 = arith.truncf %104 : vector<76x32xf32> to vector<76x32xbf16>
    %106 = arith.truncf %3 : vector<32x16xf32> to vector<32x16xbf16>
    %cst_43 = arith.constant dense<0.000000e+00> : vector<76x16xf32>
    %107 = tpu.matmul %105, %106, %cst_43 {dimension_numbers = #tpu.dot_dimension_numbers<[1], [0], [0], [1], [0, 0, 1, 1], [], []>} : vector<76x32xbf16>, vector<32x16xbf16>, vector<76x16xf32> -> vector<76x16xf32>
    %108 = vector.extract_strided_slice %107 {offsets = [0, 0], sizes = [76, 8], strides = [1, 1]} : vector<76x16xf32> to vector<76x8xf32>
    %109 = vector.extract_strided_slice %107 {offsets = [0, 8], sizes = [76, 8], strides = [1, 1]} : vector<76x16xf32> to vector<76x8xf32>
    %110 = arith.truncf %108 : vector<76x8xf32> to vector<76x8xbf16>
    %111 = arith.truncf %109 : vector<76x8xf32> to vector<76x8xbf16>
    %cst_44 = arith.constant dense<0.000000e+00> : vector<76x76xf32>
    %112 = tpu.matmul %110, %111, %cst_44 {dimension_numbers = #tpu.dot_dimension_numbers<[1], [1], [0], [0], [0, 0, 1, 0], [], []>} : vector<76x8xbf16>, vector<76x8xbf16>, vector<76x76xf32> -> vector<76x76xf32>
    %cst_45 = arith.constant dense<0xFF800000> : vector<76xf32>
    %113 = vector.multi_reduction <maximumf>, %112, %cst_45 [1] : vector<76x76xf32> to vector<76xf32>
    %114 = vector.shape_cast %113 : vector<76xf32> to vector<76x1xf32>
    %115 = vector.broadcast %114 : vector<76x1xf32> to vector<76x76xf32>
    %116 = arith.subf %112, %115 : vector<76x76xf32>
    %117 = math.exp %116 : vector<76x76xf32>
    %cst_46 = arith.constant dense<0.000000e+00> : vector<76xf32>
    %118 = vector.multi_reduction <add>, %117, %cst_46 [1] : vector<76x76xf32> to vector<76xf32>
    %119 = vector.shape_cast %118 : vector<76xf32> to vector<76x1xf32>
    %120 = vector.broadcast %119 : vector<76x1xf32> to vector<76x76xf32>
    %121 = arith.divf %117, %120 : vector<76x76xf32>
    %122 = arith.truncf %121 : vector<76x76xf32> to vector<76x76xbf16>
    %123 = arith.truncf %104 : vector<76x32xf32> to vector<76x32xbf16>
    %cst_47 = arith.constant dense<0.000000e+00> : vector<76x32xf32>
    %124 = tpu.matmul %122, %123, %cst_47 {dimension_numbers = #tpu.dot_dimension_numbers<[1], [0], [0], [1], [0, 0, 1, 1], [], []>} : vector<76x76xbf16>, vector<76x32xbf16>, vector<76x32xf32> -> vector<76x32xf32>
    %125 = arith.truncf %121 : vector<76x76xf32> to vector<76x76xbf16>
    %126 = arith.truncf %124 : vector<76x32xf32> to vector<76x32xbf16>
    %cst_48 = arith.constant dense<0.000000e+00> : vector<76x32xf32>
    %127 = tpu.matmul %125, %126, %cst_48 {dimension_numbers = #tpu.dot_dimension_numbers<[1], [0], [0], [1], [0, 0, 1, 1], [], []>} : vector<76x76xbf16>, vector<76x32xbf16>, vector<76x32xf32> -> vector<76x32xf32>
    %128 = tpu.concatenate %104, %124, %127 in 1 : vector<76x32xf32>, vector<76x32xf32>, vector<76x32xf32> -> vector<76x96xf32>
    %129 = arith.truncf %128 : vector<76x96xf32> to vector<76x96xbf16>
    %130 = arith.truncf %5 : vector<96x8xf32> to vector<96x8xbf16>
    %cst_49 = arith.constant dense<0.000000e+00> : vector<76x8xf32>
    %131 = tpu.matmul %129, %130, %cst_49 {dimension_numbers = #tpu.dot_dimension_numbers<[1], [0], [0], [1], [0, 0, 1, 1], [], []>} : vector<76x96xbf16>, vector<96x8xbf16>, vector<76x8xf32> -> vector<76x8xf32>
    %cst_50 = arith.constant 0.000000e+00 : f32
    %132 = vector.broadcast %cst_50 : f32 to vector<76x8xf32>
    %133 = arith.maximumf %131, %132 : vector<76x8xf32>
    %134 = arith.mulf %9, %104 : vector<76x32xf32>
    %cst_51 = arith.constant 0.000000e+00 : f32
    %135 = vector.broadcast %cst_51 : f32 to vector<76x32xf32>
    %136 = arith.maximumf %134, %135 : vector<76x32xf32>
    %137 = arith.truncf %7 : vector<28x76xf32> to vector<28x76xbf16>
    %138 = arith.truncf %136 : vector<76x32xf32> to vector<76x32xbf16>
    %cst_52 = arith.constant dense<0.000000e+00> : vector<28x32xf32>
    %139 = tpu.matmul %137, %138, %cst_52 {dimension_numbers = #tpu.dot_dimension_numbers<[1], [0], [0], [1], [0, 0, 1, 1], [], []>} : vector<28x76xbf16>, vector<76x32xbf16>, vector<28x32xf32> -> vector<28x32xf32>
    %140 = arith.truncf %139 : vector<28x32xf32> to vector<28x32xbf16>
    %141 = arith.truncf %4 : vector<32x16xf32> to vector<32x16xbf16>
    %cst_53 = arith.constant dense<0.000000e+00> : vector<28x16xf32>
    %142 = tpu.matmul %140, %141, %cst_53 {dimension_numbers = #tpu.dot_dimension_numbers<[1], [0], [0], [1], [0, 0, 1, 1], [], []>} : vector<28x32xbf16>, vector<32x16xbf16>, vector<28x16xf32> -> vector<28x16xf32>
    %143 = vector.extract_strided_slice %142 {offsets = [0, 0], sizes = [28, 8], strides = [1, 1]} : vector<28x16xf32> to vector<28x8xf32>
    %144 = vector.extract_strided_slice %142 {offsets = [0, 8], sizes = [28, 8], strides = [1, 1]} : vector<28x16xf32> to vector<28x8xf32>
    %145 = arith.truncf %143 : vector<28x8xf32> to vector<28x8xbf16>
    %146 = arith.truncf %144 : vector<28x8xf32> to vector<28x8xbf16>
    %cst_54 = arith.constant dense<0.000000e+00> : vector<28x28xf32>
    %147 = tpu.matmul %145, %146, %cst_54 {dimension_numbers = #tpu.dot_dimension_numbers<[1], [1], [0], [0], [0, 0, 1, 0], [], []>} : vector<28x8xbf16>, vector<28x8xbf16>, vector<28x28xf32> -> vector<28x28xf32>
    %cst_55 = arith.constant dense<0xFF800000> : vector<28xf32>
    %148 = vector.multi_reduction <maximumf>, %147, %cst_55 [1] : vector<28x28xf32> to vector<28xf32>
    %149 = vector.shape_cast %148 : vector<28xf32> to vector<28x1xf32>
    %150 = vector.broadcast %149 : vector<28x1xf32> to vector<28x28xf32>
    %151 = arith.subf %147, %150 : vector<28x28xf32>
    %152 = math.exp %151 : vector<28x28xf32>
    %cst_56 = arith.constant dense<0.000000e+00> : vector<28xf32>
    %153 = vector.multi_reduction <add>, %152, %cst_56 [1] : vector<28x28xf32> to vector<28xf32>
    %154 = vector.shape_cast %153 : vector<28xf32> to vector<28x1xf32>
    %155 = vector.broadcast %154 : vector<28x1xf32> to vector<28x28xf32>
    %156 = arith.divf %152, %155 : vector<28x28xf32>
    %157 = arith.truncf %156 : vector<28x28xf32> to vector<28x28xbf16>
    %158 = arith.truncf %139 : vector<28x32xf32> to vector<28x32xbf16>
    %cst_57 = arith.constant dense<0.000000e+00> : vector<28x32xf32>
    %159 = tpu.matmul %157, %158, %cst_57 {dimension_numbers = #tpu.dot_dimension_numbers<[1], [0], [0], [1], [0, 0, 1, 1], [], []>} : vector<28x28xbf16>, vector<28x32xbf16>, vector<28x32xf32> -> vector<28x32xf32>
    %160 = tpu.concatenate %139, %159 in 1 : vector<28x32xf32>, vector<28x32xf32> -> vector<28x64xf32>
    %161 = arith.truncf %160 : vector<28x64xf32> to vector<28x64xbf16>
    %162 = arith.truncf %6 : vector<64x8xf32> to vector<64x8xbf16>
    %cst_58 = arith.constant dense<0.000000e+00> : vector<28x8xf32>
    %163 = tpu.matmul %161, %162, %cst_58 {dimension_numbers = #tpu.dot_dimension_numbers<[1], [0], [0], [1], [0, 0, 1, 1], [], []>} : vector<28x64xbf16>, vector<64x8xbf16>, vector<28x8xf32> -> vector<28x8xf32>
    %cst_59 = arith.constant 0.000000e+00 : f32
    %164 = vector.broadcast %cst_59 : f32 to vector<28x8xf32>
    %165 = arith.maximumf %163, %164 : vector<28x8xf32>
    %166 = arith.truncf %8 : vector<76x28xf32> to vector<76x28xbf16>
    %167 = arith.truncf %165 : vector<28x8xf32> to vector<28x8xbf16>
    %cst_60 = arith.constant dense<0.000000e+00> : vector<76x8xf32>
    %168 = tpu.matmul %166, %167, %cst_60 {dimension_numbers = #tpu.dot_dimension_numbers<[1], [0], [0], [1], [0, 0, 1, 1], [], []>} : vector<76x28xbf16>, vector<28x8xbf16>, vector<76x8xf32> -> vector<76x8xf32>
    %169 = arith.addf %133, %168 : vector<76x8xf32>
    %170 = vector.extract_strided_slice %169 {offsets = [0, 0], sizes = [19, 8], strides = [1, 1]} : vector<76x8xf32> to vector<19x8xf32>
    %171 = vector.extract_strided_slice %169 {offsets = [19, 0], sizes = [19, 8], strides = [1, 1]} : vector<76x8xf32> to vector<19x8xf32>
    %172 = arith.addf %170, %171 : vector<19x8xf32>
    %173 = vector.extract_strided_slice %169 {offsets = [38, 0], sizes = [19, 8], strides = [1, 1]} : vector<76x8xf32> to vector<19x8xf32>
    %174 = arith.addf %172, %173 : vector<19x8xf32>
    %175 = vector.extract_strided_slice %169 {offsets = [57, 0], sizes = [19, 8], strides = [1, 1]} : vector<76x8xf32> to vector<19x8xf32>
    %176 = arith.addf %174, %175 : vector<19x8xf32>
    %cst_61 = arith.constant 2.500000e-01 : f32
    %177 = vector.broadcast %cst_61 : f32 to vector<19x8xf32>
    %178 = arith.mulf %176, %177 : vector<19x8xf32>
    %c1_62 = arith.constant 1 : index
    %c0_63 = arith.constant 0 : index
    %c0_64 = arith.constant 0 : index
    %179 = vector.load %arg7[%c1_62, %c0_63, %c0_64] : memref<3x19x8xf32, #tpu.memory_space<vmem>>, vector<1x19x8xf32>
    %180 = vector.shape_cast %179 : vector<1x19x8xf32> to vector<19x8xf32>
    %181 = vector.shape_cast %178 : vector<19x8xf32> to vector<1x19x8xf32>
    tpu.vector_store %arg7[%c1_62, %c0_63, %c0_64], %181 {strides = array<i32>} : memref<3x19x8xf32, #tpu.memory_space<vmem>>, vector<1x19x8xf32>,
    %c1_65 = arith.constant 1 : index
    %c0_66 = arith.constant 0 : index
    %c0_67 = arith.constant 0 : index
    %182 = vector.load %arg8[%c1_65, %c0_66, %c0_67] : memref<3x76x76xf32, #tpu.memory_space<vmem>>, vector<1x76x76xf32>
    %183 = vector.shape_cast %182 : vector<1x76x76xf32> to vector<76x76xf32>
    %184 = vector.shape_cast %121 : vector<76x76xf32> to vector<1x76x76xf32>
    tpu.vector_store %arg8[%c1_65, %c0_66, %c0_67], %184 {strides = array<i32>} : memref<3x76x76xf32, #tpu.memory_space<vmem>>, vector<1x76x76xf32>,
    %c1_68 = arith.constant 1 : index
    %c0_69 = arith.constant 0 : index
    %c0_70 = arith.constant 0 : index
    %185 = vector.load %arg9[%c1_68, %c0_69, %c0_70] : memref<3x28x28xf32, #tpu.memory_space<vmem>>, vector<1x28x28xf32>
    %186 = vector.shape_cast %185 : vector<1x28x28xf32> to vector<28x28xf32>
    %187 = vector.shape_cast %156 : vector<28x28xf32> to vector<1x28x28xf32>
    tpu.vector_store %arg9[%c1_68, %c0_69, %c0_70], %187 {strides = array<i32>} : memref<3x28x28xf32, #tpu.memory_space<vmem>>, vector<1x28x28xf32>,
    %c2 = arith.constant 2 : index
    %c0_71 = arith.constant 0 : index
    %c0_72 = arith.constant 0 : index
    %188 = vector.load %arg1[%c2, %c0_71, %c0_72] : memref<3x76x32xf32, #tpu.memory_space<vmem>>, vector<1x76x32xf32>
    %189 = vector.shape_cast %188 : vector<1x76x32xf32> to vector<76x32xf32>
    %190 = vector.broadcast %0 : vector<1x32xf32> to vector<76x32xf32>
    %191 = arith.subf %189, %190 : vector<76x32xf32>
    %192 = vector.broadcast %1 : vector<1x32xf32> to vector<76x32xf32>
    %193 = arith.mulf %191, %192 : vector<76x32xf32>
    %194 = arith.truncf %193 : vector<76x32xf32> to vector<76x32xbf16>
    %195 = arith.truncf %3 : vector<32x16xf32> to vector<32x16xbf16>
    %cst_73 = arith.constant dense<0.000000e+00> : vector<76x16xf32>
    %196 = tpu.matmul %194, %195, %cst_73 {dimension_numbers = #tpu.dot_dimension_numbers<[1], [0], [0], [1], [0, 0, 1, 1], [], []>} : vector<76x32xbf16>, vector<32x16xbf16>, vector<76x16xf32> -> vector<76x16xf32>
    %197 = vector.extract_strided_slice %196 {offsets = [0, 0], sizes = [76, 8], strides = [1, 1]} : vector<76x16xf32> to vector<76x8xf32>
    %198 = vector.extract_strided_slice %196 {offsets = [0, 8], sizes = [76, 8], strides = [1, 1]} : vector<76x16xf32> to vector<76x8xf32>
    %199 = arith.truncf %197 : vector<76x8xf32> to vector<76x8xbf16>
    %200 = arith.truncf %198 : vector<76x8xf32> to vector<76x8xbf16>
    %cst_74 = arith.constant dense<0.000000e+00> : vector<76x76xf32>
    %201 = tpu.matmul %199, %200, %cst_74 {dimension_numbers = #tpu.dot_dimension_numbers<[1], [1], [0], [0], [0, 0, 1, 0], [], []>} : vector<76x8xbf16>, vector<76x8xbf16>, vector<76x76xf32> -> vector<76x76xf32>
    %cst_75 = arith.constant dense<0xFF800000> : vector<76xf32>
    %202 = vector.multi_reduction <maximumf>, %201, %cst_75 [1] : vector<76x76xf32> to vector<76xf32>
    %203 = vector.shape_cast %202 : vector<76xf32> to vector<76x1xf32>
    %204 = vector.broadcast %203 : vector<76x1xf32> to vector<76x76xf32>
    %205 = arith.subf %201, %204 : vector<76x76xf32>
    %206 = math.exp %205 : vector<76x76xf32>
    %cst_76 = arith.constant dense<0.000000e+00> : vector<76xf32>
    %207 = vector.multi_reduction <add>, %206, %cst_76 [1] : vector<76x76xf32> to vector<76xf32>
    %208 = vector.shape_cast %207 : vector<76xf32> to vector<76x1xf32>
    %209 = vector.broadcast %208 : vector<76x1xf32> to vector<76x76xf32>
    %210 = arith.divf %206, %209 : vector<76x76xf32>
    %211 = arith.truncf %210 : vector<76x76xf32> to vector<76x76xbf16>
    %212 = arith.truncf %193 : vector<76x32xf32> to vector<76x32xbf16>
    %cst_77 = arith.constant dense<0.000000e+00> : vector<76x32xf32>
    %213 = tpu.matmul %211, %212, %cst_77 {dimension_numbers = #tpu.dot_dimension_numbers<[1], [0], [0], [1], [0, 0, 1, 1], [], []>} : vector<76x76xbf16>, vector<76x32xbf16>, vector<76x32xf32> -> vector<76x32xf32>
    %214 = arith.truncf %210 : vector<76x76xf32> to vector<76x76xbf16>
    %215 = arith.truncf %213 : vector<76x32xf32> to vector<76x32xbf16>
    %cst_78 = arith.constant dense<0.000000e+00> : vector<76x32xf32>
    %216 = tpu.matmul %214, %215, %cst_78 {dimension_numbers = #tpu.dot_dimension_numbers<[1], [0], [0], [1], [0, 0, 1, 1], [], []>} : vector<76x76xbf16>, vector<76x32xbf16>, vector<76x32xf32> -> vector<76x32xf32>
    %217 = tpu.concatenate %193, %213, %216 in 1 : vector<76x32xf32>, vector<76x32xf32>, vector<76x32xf32> -> vector<76x96xf32>
    %218 = arith.truncf %217 : vector<76x96xf32> to vector<76x96xbf16>
    %219 = arith.truncf %5 : vector<96x8xf32> to vector<96x8xbf16>
    %cst_79 = arith.constant dense<0.000000e+00> : vector<76x8xf32>
    %220 = tpu.matmul %218, %219, %cst_79 {dimension_numbers = #tpu.dot_dimension_numbers<[1], [0], [0], [1], [0, 0, 1, 1], [], []>} : vector<76x96xbf16>, vector<96x8xbf16>, vector<76x8xf32> -> vector<76x8xf32>
    %cst_80 = arith.constant 0.000000e+00 : f32
    %221 = vector.broadcast %cst_80 : f32 to vector<76x8xf32>
    %222 = arith.maximumf %220, %221 : vector<76x8xf32>
    %223 = arith.mulf %9, %193 : vector<76x32xf32>
    %cst_81 = arith.constant 0.000000e+00 : f32
    %224 = vector.broadcast %cst_81 : f32 to vector<76x32xf32>
    %225 = arith.maximumf %223, %224 : vector<76x32xf32>
    %226 = arith.truncf %7 : vector<28x76xf32> to vector<28x76xbf16>
    %227 = arith.truncf %225 : vector<76x32xf32> to vector<76x32xbf16>
    %cst_82 = arith.constant dense<0.000000e+00> : vector<28x32xf32>
    %228 = tpu.matmul %226, %227, %cst_82 {dimension_numbers = #tpu.dot_dimension_numbers<[1], [0], [0], [1], [0, 0, 1, 1], [], []>} : vector<28x76xbf16>, vector<76x32xbf16>, vector<28x32xf32> -> vector<28x32xf32>
    %229 = arith.truncf %228 : vector<28x32xf32> to vector<28x32xbf16>
    %230 = arith.truncf %4 : vector<32x16xf32> to vector<32x16xbf16>
    %cst_83 = arith.constant dense<0.000000e+00> : vector<28x16xf32>
    %231 = tpu.matmul %229, %230, %cst_83 {dimension_numbers = #tpu.dot_dimension_numbers<[1], [0], [0], [1], [0, 0, 1, 1], [], []>} : vector<28x32xbf16>, vector<32x16xbf16>, vector<28x16xf32> -> vector<28x16xf32>
    %232 = vector.extract_strided_slice %231 {offsets = [0, 0], sizes = [28, 8], strides = [1, 1]} : vector<28x16xf32> to vector<28x8xf32>
    %233 = vector.extract_strided_slice %231 {offsets = [0, 8], sizes = [28, 8], strides = [1, 1]} : vector<28x16xf32> to vector<28x8xf32>
    %234 = arith.truncf %232 : vector<28x8xf32> to vector<28x8xbf16>
    %235 = arith.truncf %233 : vector<28x8xf32> to vector<28x8xbf16>
    %cst_84 = arith.constant dense<0.000000e+00> : vector<28x28xf32>
    %236 = tpu.matmul %234, %235, %cst_84 {dimension_numbers = #tpu.dot_dimension_numbers<[1], [1], [0], [0], [0, 0, 1, 0], [], []>} : vector<28x8xbf16>, vector<28x8xbf16>, vector<28x28xf32> -> vector<28x28xf32>
    %cst_85 = arith.constant dense<0xFF800000> : vector<28xf32>
    %237 = vector.multi_reduction <maximumf>, %236, %cst_85 [1] : vector<28x28xf32> to vector<28xf32>
    %238 = vector.shape_cast %237 : vector<28xf32> to vector<28x1xf32>
    %239 = vector.broadcast %238 : vector<28x1xf32> to vector<28x28xf32>
    %240 = arith.subf %236, %239 : vector<28x28xf32>
    %241 = math.exp %240 : vector<28x28xf32>
    %cst_86 = arith.constant dense<0.000000e+00> : vector<28xf32>
    %242 = vector.multi_reduction <add>, %241, %cst_86 [1] : vector<28x28xf32> to vector<28xf32>
    %243 = vector.shape_cast %242 : vector<28xf32> to vector<28x1xf32>
    %244 = vector.broadcast %243 : vector<28x1xf32> to vector<28x28xf32>
    %245 = arith.divf %241, %244 : vector<28x28xf32>
    %246 = arith.truncf %245 : vector<28x28xf32> to vector<28x28xbf16>
    %247 = arith.truncf %228 : vector<28x32xf32> to vector<28x32xbf16>
    %cst_87 = arith.constant dense<0.000000e+00> : vector<28x32xf32>
    %248 = tpu.matmul %246, %247, %cst_87 {dimension_numbers = #tpu.dot_dimension_numbers<[1], [0], [0], [1], [0, 0, 1, 1], [], []>} : vector<28x28xbf16>, vector<28x32xbf16>, vector<28x32xf32> -> vector<28x32xf32>
    %249 = tpu.concatenate %228, %248 in 1 : vector<28x32xf32>, vector<28x32xf32> -> vector<28x64xf32>
    %250 = arith.truncf %249 : vector<28x64xf32> to vector<28x64xbf16>
    %251 = arith.truncf %6 : vector<64x8xf32> to vector<64x8xbf16>
    %cst_88 = arith.constant dense<0.000000e+00> : vector<28x8xf32>
    %252 = tpu.matmul %250, %251, %cst_88 {dimension_numbers = #tpu.dot_dimension_numbers<[1], [0], [0], [1], [0, 0, 1, 1], [], []>} : vector<28x64xbf16>, vector<64x8xbf16>, vector<28x8xf32> -> vector<28x8xf32>
    %cst_89 = arith.constant 0.000000e+00 : f32
    %253 = vector.broadcast %cst_89 : f32 to vector<28x8xf32>
    %254 = arith.maximumf %252, %253 : vector<28x8xf32>
    %255 = arith.truncf %8 : vector<76x28xf32> to vector<76x28xbf16>
    %256 = arith.truncf %254 : vector<28x8xf32> to vector<28x8xbf16>
    %cst_90 = arith.constant dense<0.000000e+00> : vector<76x8xf32>
    %257 = tpu.matmul %255, %256, %cst_90 {dimension_numbers = #tpu.dot_dimension_numbers<[1], [0], [0], [1], [0, 0, 1, 1], [], []>} : vector<76x28xbf16>, vector<28x8xbf16>, vector<76x8xf32> -> vector<76x8xf32>
    %258 = arith.addf %222, %257 : vector<76x8xf32>
    %259 = vector.extract_strided_slice %258 {offsets = [0, 0], sizes = [19, 8], strides = [1, 1]} : vector<76x8xf32> to vector<19x8xf32>
    %260 = vector.extract_strided_slice %258 {offsets = [19, 0], sizes = [19, 8], strides = [1, 1]} : vector<76x8xf32> to vector<19x8xf32>
    %261 = arith.addf %259, %260 : vector<19x8xf32>
    %262 = vector.extract_strided_slice %258 {offsets = [38, 0], sizes = [19, 8], strides = [1, 1]} : vector<76x8xf32> to vector<19x8xf32>
    %263 = arith.addf %261, %262 : vector<19x8xf32>
    %264 = vector.extract_strided_slice %258 {offsets = [57, 0], sizes = [19, 8], strides = [1, 1]} : vector<76x8xf32> to vector<19x8xf32>
    %265 = arith.addf %263, %264 : vector<19x8xf32>
    %cst_91 = arith.constant 2.500000e-01 : f32
    %266 = vector.broadcast %cst_91 : f32 to vector<19x8xf32>
    %267 = arith.mulf %265, %266 : vector<19x8xf32>
    %c2_92 = arith.constant 2 : index
    %c0_93 = arith.constant 0 : index
    %c0_94 = arith.constant 0 : index
    %268 = vector.load %arg7[%c2_92, %c0_93, %c0_94] : memref<3x19x8xf32, #tpu.memory_space<vmem>>, vector<1x19x8xf32>
    %269 = vector.shape_cast %268 : vector<1x19x8xf32> to vector<19x8xf32>
    %270 = vector.shape_cast %267 : vector<19x8xf32> to vector<1x19x8xf32>
    tpu.vector_store %arg7[%c2_92, %c0_93, %c0_94], %270 {strides = array<i32>} : memref<3x19x8xf32, #tpu.memory_space<vmem>>, vector<1x19x8xf32>,
    %c2_95 = arith.constant 2 : index
    %c0_96 = arith.constant 0 : index
    %c0_97 = arith.constant 0 : index
    %271 = vector.load %arg8[%c2_95, %c0_96, %c0_97] : memref<3x76x76xf32, #tpu.memory_space<vmem>>, vector<1x76x76xf32>
    %272 = vector.shape_cast %271 : vector<1x76x76xf32> to vector<76x76xf32>
    %273 = vector.shape_cast %210 : vector<76x76xf32> to vector<1x76x76xf32>
    tpu.vector_store %arg8[%c2_95, %c0_96, %c0_97], %273 {strides = array<i32>} : memref<3x76x76xf32, #tpu.memory_space<vmem>>, vector<1x76x76xf32>,
    %c2_98 = arith.constant 2 : index
    %c0_99 = arith.constant 0 : index
    %c0_100 = arith.constant 0 : index
    %274 = vector.load %arg9[%c2_98, %c0_99, %c0_100] : memref<3x28x28xf32, #tpu.memory_space<vmem>>, vector<1x28x28xf32>
    %275 = vector.shape_cast %274 : vector<1x28x28xf32> to vector<28x28xf32>
    %276 = vector.shape_cast %245 : vector<28x28xf32> to vector<1x28x28xf32>
    tpu.vector_store %arg9[%c2_98, %c0_99, %c0_100], %276 {strides = array<i32>} : memref<3x28x28xf32, #tpu.memory_space<vmem>>, vector<1x28x28xf32>,
    return
  }
  func.func @transform_0(%arg0: i32) -> (i32, i32, i32) {
    %c0_i32 = arith.constant 0 : i32
    %c0_i32_0 = arith.constant 0 : i32
    %c0_i32_1 = arith.constant 0 : i32
    return %arg0, %c0_i32, %c0_i32_0 : i32, i32, i32
  }
  func.func @transform_1(%arg0: i32) -> (i32, i32) {
    %c0_i32 = arith.constant 0 : i32
    %c0_i32_0 = arith.constant 0 : i32
    %c0_i32_1 = arith.constant 0 : i32
    return %c0_i32, %c0_i32_0 : i32, i32
  }
  func.func @transform_2(%arg0: i32) -> (i32, i32) {
    %c0_i32 = arith.constant 0 : i32
    %c0_i32_0 = arith.constant 0 : i32
    %c0_i32_1 = arith.constant 0 : i32
    return %c0_i32, %c0_i32_0 : i32, i32
  }
  func.func @transform_3(%arg0: i32) -> (i32, i32) {
    %c0_i32 = arith.constant 0 : i32
    %c0_i32_0 = arith.constant 0 : i32
    %c0_i32_1 = arith.constant 0 : i32
    return %c0_i32, %c0_i32_0 : i32, i32
  }
  func.func @transform_4(%arg0: i32) -> (i32, i32) {
    %c0_i32 = arith.constant 0 : i32
    %c0_i32_0 = arith.constant 0 : i32
    %c0_i32_1 = arith.constant 0 : i32
    return %c0_i32, %c0_i32_0 : i32, i32
  }
  func.func @transform_5(%arg0: i32) -> (i32, i32) {
    %c0_i32 = arith.constant 0 : i32
    %c0_i32_0 = arith.constant 0 : i32
    %c0_i32_1 = arith.constant 0 : i32
    return %c0_i32, %c0_i32_0 : i32, i32
  }
  func.func @transform_6(%arg0: i32) -> (i32, i32, i32) {
    %c0_i32 = arith.constant 0 : i32
    %c0_i32_0 = arith.constant 0 : i32
    %c0_i32_1 = arith.constant 0 : i32
    return %arg0, %c0_i32, %c0_i32_0 : i32, i32, i32
  }
  func.func @transform_7(%arg0: i32) -> (i32, i32, i32) {
    %c0_i32 = arith.constant 0 : i32
    %c0_i32_0 = arith.constant 0 : i32
    %c0_i32_1 = arith.constant 0 : i32
    return %arg0, %c0_i32, %c0_i32_0 : i32, i32, i32
  }
  func.func @transform_8(%arg0: i32) -> (i32, i32, i32) {
    %c0_i32 = arith.constant 0 : i32
    %c0_i32_0 = arith.constant 0 : i32
    %c0_i32_1 = arith.constant 0 : i32
    return %arg0, %c0_i32, %c0_i32_0 : i32, i32, i32
  }
}

</mosaic_0001>

<llo_original>
// kernel: dctgcn_forward.1
$region0: #{dctgcn_forward.1}
  #allocation0 [shape = 'u32[]', space=smem, size = 0x4, offset = 0x4, fixed_abs, tag = 'smem constant byte address 0x4 - core index']
  #allocation1 [shape = 'u32[144,128]{1,0:T(1,128)}', space=vmem, size = 0x12000, scoped, tag = 'internal scratch']
  %s0 = inlined_call_operand.vmem [shape: f32[6,76,32], index: 0, kind: input, shape index: {}]
  %s1 = inlined_call_operand.vmem [shape: f32[2,32], index: 1, kind: input, shape index: {}]
  %s2 = inlined_call_operand.vmem [shape: f32[224,16], index: 2, kind: input, shape index: {}]
  %s3 = inlined_call_operand.vmem [shape: f32[28,76], index: 3, kind: input, shape index: {}]
  %s4 = inlined_call_operand.vmem [shape: f32[76,28], index: 4, kind: input, shape index: {}]
  %s5 = inlined_call_operand.vmem [shape: f32[76,32], index: 5, kind: input, shape index: {}]
  %s6 = inlined_call_operand.vmem [shape: f32[6,19,8], index: 6, kind: output, shape index: {0}]
  %s7 = inlined_call_operand.hbm [shape: f32[6,76,76], index: 7, kind: output, shape index: {1}]
  %s8 = inlined_call_operand.hbm [shape: f32[6,28,28], index: 8, kind: output, shape index: {2}]
  %9 = xla_tuple %s6, %s7, %s8
  %s10 = sld [smem:[#allocation0]]
  $region73: #{dctgcn_forward.1} parent=0
    _
  %s12 = ssub.s32 1, %s10
  %s13 = scalar_select 0, %s12, %s10
  $region1: #{dctgcn_forward.1} parent=0
    #allocation2 [shape = 'u8[245760]{0}', space=vmem, size = 0x3c000, scoped, tag = 'output window, operand 1']
    #allocation3 [shape = 's32[2]{0}', space=sflag, size = 0x8, scoped, tag = 'scoped memory for dctgcn_forward.1']
    #allocation4 [shape = 'u8[98304]{0}', space=vmem, size = 0x18000, scoped, tag = 'output window, operand 2']
    #allocation5 [shape = 's32[2]{0}', space=sflag, size = 0x8, scoped, tag = 'scoped memory for dctgcn_forward.1']
    %14 = vsyncpa [#allocation3], 0
    %s15 = scalar_lea.sflag [#allocation3], 1
    %16 = vsyncpa %s15, 0
    %17 = vsyncpa [#allocation5], 0
    %s18 = scalar_lea.sflag [#allocation5], 1
    %19 = vsyncpa %s18, 0
    loop: start=0, step=1, limit=4
    $region2: #{dctgcn_forward.1} parent=1 // loop_pre_header
      _
    $region3: #{dctgcn_forward.1} parent=1 // loop_header
      %s21 = sphi 0, %s25
      %p22 = scmp.ge.s32.totalorder %s21, 4
      %s31 = sphi 0, %s33
      %s34 = sphi 0, %s31
      %s35 = sphi 0, %s34
      %s51 = sphi 0, %s35
      %s55 = sphi 0, %s55
      %s57 = sphi 0, %s55
      %s58 = sphi 0, %s57
      %s72 = sphi 0, %s58
      %s76 = sphi 0, %s76
      %s78 = sphi 0, %s76
      %s79 = sphi 0, %s78
      %s93 = sphi 0, %s79
      %s97 = sphi 0, %s97
      %s99 = sphi 0, %s97
      %s100 = sphi 0, %s99
      %s114 = sphi 0, %s100
      %s118 = sphi 0, %s118
      %s120 = sphi 0, %s118
      %s121 = sphi 0, %s120
      %s135 = sphi 0, %s121
      %s139 = sphi 0, %s139
      %s141 = sphi 0, %s139
      %s142 = sphi 0, %s141
      %s156 = sphi 0, %s142
      %s162 = sphi 0, %s164
      %s165 = sphi 0, %s162
      %s166 = sphi 0, %s165
      %s182 = sphi 0, %s166
      %s188 = sphi 0, %s190
      %s191 = sphi 0, %s188
      %s192 = sphi 0, %s191
      %s208 = sphi 0, %s192
      %s214 = sphi 0, %s216
      %s217 = sphi 0, %s214
      %s218 = sphi 0, %s217
      %s234 = sphi 0, %s218
    $region4: #{dctgcn_forward.1} parent=1 // loop_header_branch
      %24 = sbr.rel (%p22) target = $region8
    $region5: #{dctgcn_forward.1} parent=1 // loop_body
      %s26 = ssub.s32 %s21, 1
      %s27 = ssub.s32 %s21, 2
      %s28 = sadd.s32 %s21, 1
      %s29 = ssub.s32 %s21, %s28
      %p30 = scmp.eq.s32.totalorder %s29, 0
      %s32 = sadd.s32 %s31, 1
      %s33 = scalar_select %p30, %s31, %s32
      %p36 = pneg %p30
      %p37 = scmp.eq.s32.totalorder %s21, 1
      %p38 = por %p36, %p37
      %p39 = scmp.ne.s32.totalorder %s31, %s34
      %p40 = scmp.eq.s32.totalorder %s21, 0
      %p41 = por %p39, %p40
      %p42 = scmp.ne.s32.totalorder %s31, %s34
      %p43 = scmp.eq.s32.totalorder %s26, 1
      %p44 = por %p42, %p43
      %p45 = scmp.ne.s32.totalorder %s34, %s35
      %p46 = scmp.eq.s32.totalorder %s26, 0
      %p47 = por %p45, %p46
      %p48 = scmp.ne.s32.totalorder %s34, %s35
      %p49 = scmp.eq.s32.totalorder %s27, 1
      %p50 = por %p48, %p49
      %p52 = scmp.ne.s32.totalorder %s35, %s51
      %p53 = scmp.eq.s32.totalorder %s27, 0
      %p54 = por %p52, %p53
      %s56 = sadd.s32 %s55, 1
      %p59 = scmp.eq.s32.totalorder %s21, 1
      %p60 = scmp.ne.s32.totalorder %s55, %s57
      %p61 = scmp.eq.s32.totalorder %s21, 0
      %p62 = por %p60, %p61
      %p63 = scmp.ne.s32.totalorder %s55, %s57
      %p64 = scmp.eq.s32.totalorder %s26, 1
      %p65 = por %p63, %p64
      %p66 = scmp.ne.s32.totalorder %s57, %s58
      %p67 = scmp.eq.s32.totalorder %s26, 0
      %p68 = por %p66, %p67
      %p69 = scmp.ne.s32.totalorder %s57, %s58
      %p70 = scmp.eq.s32.totalorder %s27, 1
      %p71 = por %p69, %p70
      %p73 = scmp.ne.s32.totalorder %s58, %s72
      %p74 = scmp.eq.s32.totalorder %s27, 0
      %p75 = por %p73, %p74
      %s77 = sadd.s32 %s76, 1
      %p80 = scmp.eq.s32.totalorder %s21, 1
      %p81 = scmp.ne.s32.totalorder %s76, %s78
      %p82 = scmp.eq.s32.totalorder %s21, 0
      %p83 = por %p81, %p82
      %p84 = scmp.ne.s32.totalorder %s76, %s78
      %p85 = scmp.eq.s32.totalorder %s26, 1
      %p86 = por %p84, %p85
      %p87 = scmp.ne.s32.totalorder %s78, %s79
      %p88 = scmp.eq.s32.totalorder %s26, 0
      %p89 = por %p87, %p88
      %p90 = scmp.ne.s32.totalorder %s78, %s79
      %p91 = scmp.eq.s32.totalorder %s27, 1
      %p92 = por %p90, %p91
      %p94 = scmp.ne.s32.totalorder %s79, %s93
      %p95 = scmp.eq.s32.totalorder %s27, 0
      %p96 = por %p94, %p95
      %s98 = sadd.s32 %s97, 1
      %p101 = scmp.eq.s32.totalorder %s21, 1
      %p102 = scmp.ne.s32.totalorder %s97, %s99
      %p103 = scmp.eq.s32.totalorder %s21, 0
      %p104 = por %p102, %p103
      %p105 = scmp.ne.s32.totalorder %s97, %s99
      %p106 = scmp.eq.s32.totalorder %s26, 1
      %p107 = por %p105, %p106
      %p108 = scmp.ne.s32.totalorder %s99, %s100
      %p109 = scmp.eq.s32.totalorder %s26, 0
      %p110 = por %p108, %p109
      %p111 = scmp.ne.s32.totalorder %s99, %s100
      %p112 = scmp.eq.s32.totalorder %s27, 1
      %p113 = por %p111, %p112
      %p115 = scmp.ne.s32.totalorder %s100, %s114
      %p116 = scmp.eq.s32.totalorder %s27, 0
      %p117 = por %p115, %p116
      %s119 = sadd.s32 %s118, 1
      %p122 = scmp.eq.s32.totalorder %s21, 1
      %p123 = scmp.ne.s32.totalorder %s118, %s120
      %p124 = scmp.eq.s32.totalorder %s21, 0
      %p125 = por %p123, %p124
      %p126 = scmp.ne.s32.totalorder %s118, %s120
      %p127 = scmp.eq.s32.totalorder %s26, 1
      %p128 = por %p126, %p127
      %p129 = scmp.ne.s32.totalorder %s120, %s121
      %p130 = scmp.eq.s32.totalorder %s26, 0
      %p131 = por %p129, %p130
      %p132 = scmp.ne.s32.totalorder %s120, %s121
      %p133 = scmp.eq.s32.totalorder %s27, 1
      %p134 = por %p132, %p133
      %p136 = scmp.ne.s32.totalorder %s121, %s135
      %p137 = scmp.eq.s32.totalorder %s27, 0
      %p138 = por %p136, %p137
      %s140 = sadd.s32 %s139, 1
      %p143 = scmp.eq.s32.totalorder %s21, 1
      %p144 = scmp.ne.s32.totalorder %s139, %s141
      %p145 = scmp.eq.s32.totalorder %s21, 0
      %p146 = por %p144, %p145
      %p147 = scmp.ne.s32.totalorder %s139, %s141
      %p148 = scmp.eq.s32.totalorder %s26, 1
      %p149 = por %p147, %p148
      %p150 = scmp.ne.s32.totalorder %s141, %s142
      %p151 = scmp.eq.s32.totalorder %s26, 0
      %p152 = por %p150, %p151
      %p153 = scmp.ne.s32.totalorder %s141, %s142
      %p154 = scmp.eq.s32.totalorder %s27, 1
      %p155 = por %p153, %p154
      %p157 = scmp.ne.s32.totalorder %s142, %s156
      %p158 = scmp.eq.s32.totalorder %s27, 0
      %p159 = por %p157, %p158
      %s160 = ssub.s32 %s21, %s28
      %p161 = scmp.eq.s32.totalorder %s160, 0
      %s163 = sadd.s32 %s162, 1
      %s164 = scalar_select %p161, %s162, %s163
      %p167 = pneg %p161
      %p168 = scmp.eq.s32.totalorder %s21, 1
      %p169 = por %p167, %p168
      %p170 = scmp.ne.s32.totalorder %s162, %s165
      %p171 = scmp.eq.s32.totalorder %s21, 0
      %p172 = por %p170, %p171
      %p173 = scmp.ne.s32.totalorder %s162, %s165
      %p174 = scmp.eq.s32.totalorder %s26, 1
      %p175 = por %p173, %p174
      %p176 = scmp.ne.s32.totalorder %s165, %s166
      %p177 = scmp.eq.s32.totalorder %s26, 0
      %p178 = por %p176, %p177
      %p179 = scmp.ne.s32.totalorder %s165, %s166
      %p180 = scmp.eq.s32.totalorder %s27, 1
      %p181 = por %p179, %p180
      %p183 = scmp.ne.s32.totalorder %s166, %s182
      %p184 = scmp.eq.s32.totalorder %s27, 0
      %p185 = por %p183, %p184
      %s186 = ssub.s32 %s21, %s28
      %p187 = scmp.eq.s32.totalorder %s186, 0
      %s189 = sadd.s32 %s188, 1
      %s190 = scalar_select %p187, %s188, %s189
      %p193 = pneg %p187
      %p194 = scmp.eq.s32.totalorder %s21, 1
      %p195 = por %p193, %p194
      %p196 = scmp.ne.s32.totalorder %s188, %s191
      %p197 = scmp.eq.s32.totalorder %s21, 0
      %p198 = por %p196, %p197
      %p199 = scmp.ne.s32.totalorder %s188, %s191
      %p200 = scmp.eq.s32.totalorder %s26, 1
      %p201 = por %p199, %p200
      %p202 = scmp.ne.s32.totalorder %s191, %s192
      %p203 = scmp.eq.s32.totalorder %s26, 0
      %p204 = por %p202, %p203
      %p205 = scmp.ne.s32.totalorder %s191, %s192
      %p206 = scmp.eq.s32.totalorder %s27, 1
      %p207 = por %p205, %p206
      %p209 = scmp.ne.s32.totalorder %s192, %s208
      %p210 = scmp.eq.s32.totalorder %s27, 0
      %p211 = por %p209, %p210
      %s212 = ssub.s32 %s21, %s28
      %p213 = scmp.eq.s32.totalorder %s212, 0
      %s215 = sadd.s32 %s214, 1
      %s216 = scalar_select %p213, %s214, %s215
      %p219 = pneg %p213
      %p220 = scmp.eq.s32.totalorder %s21, 1
      %p221 = por %p219, %p220
      %p222 = scmp.ne.s32.totalorder %s214, %s217
      %p223 = scmp.eq.s32.totalorder %s21, 0
      %p224 = por %p222, %p223
      %p225 = scmp.ne.s32.totalorder %s214, %s217
      %p226 = scmp.eq.s32.totalorder %s26, 1
      %p227 = por %p225, %p226
      %p228 = scmp.ne.s32.totalorder %s217, %s218
      %p229 = scmp.eq.s32.totalorder %s26, 0
      %p230 = por %p228, %p229
      %p231 = scmp.ne.s32.totalorder %s217, %s218
      %p232 = scmp.eq.s32.totalorder %s27, 1
      %p233 = por %p231, %p232
      %p235 = scmp.ne.s32.totalorder %s218, %s234
      %p236 = scmp.eq.s32.totalorder %s27, 0
      %p237 = por %p235, %p236
      %p238 = scmp.le.s32.totalorder 1, %s21
      %p239 = scmp.lt.s32.totalorder %s21, 3
      %p240 = pnand %p238, %p239
      %p241 = pneg %p240
      // Predicated region
      $region9: #{dctgcn_forward.1} parent=5 // pred_check
        _
      $region10: #{dctgcn_forward.1} parent=5 // pred_check_branch
        %243 = sbr.rel (%p240) target = $region12
      $region11: #{dctgcn_forward.1} parent=5 // pred_region
        %s244 = ssub.s32 %s21, 1
        // Predicated region
        $region13: #{dctgcn_forward.1} parent=11 // pred_check
          %p245 = pneg %p68
        $region14: #{dctgcn_forward.1} parent=11 // pred_check_branch
          %247 = sbr.rel (%p245) target = $region16
        $region15: #{dctgcn_forward.1} parent=11 // pred_region
          _
        $region16: #{dctgcn_forward.1} parent=11 // pred_fallthru
          _
        // Predicated region
        $region17: #{dctgcn_forward.1} parent=11 // pred_check
          %p248 = pneg %p89
        $region18: #{dctgcn_forward.1} parent=11 // pred_check_branch
          %250 = sbr.rel (%p248) target = $region20
        $region19: #{dctgcn_forward.1} parent=11 // pred_region
          _
        $region20: #{dctgcn_forward.1} parent=11 // pred_fallthru
          _
        // Predicated region
        $region21: #{dctgcn_forward.1} parent=11 // pred_check
          %p251 = pneg %p110
        $region22: #{dctgcn_forward.1} parent=11 // pred_check_branch
          %253 = sbr.rel (%p251) target = $region24
        $region23: #{dctgcn_forward.1} parent=11 // pred_region
          _
        $region24: #{dctgcn_forward.1} parent=11 // pred_fallthru
          _
        // Predicated region
        $region25: #{dctgcn_forward.1} parent=11 // pred_check
          %p254 = pneg %p131
        $region26: #{dctgcn_forward.1} parent=11 // pred_check_branch
          %256 = sbr.rel (%p254) target = $region28
        $region27: #{dctgcn_forward.1} parent=11 // pred_region
          _
        $region28: #{dctgcn_forward.1} parent=11 // pred_fallthru
          _
        // Predicated region
        $region29: #{dctgcn_forward.1} parent=11 // pred_check
          %p257 = pneg %p152
        $region30: #{dctgcn_forward.1} parent=11 // pred_check_branch
          %259 = sbr.rel (%p257) target = $region32
        $region31: #{dctgcn_forward.1} parent=11 // pred_region
          _
        $region32: #{dctgcn_forward.1} parent=11 // pred_fallthru
          _
      $region12: #{dctgcn_forward.1} parent=5 // pred_fallthru
        _
      %p260 = scmp.lt.s32.totalorder %s21, 2
      // Predicated region
      $region33: #{dctgcn_forward.1} parent=5 // pred_check
        %p261 = pneg %p260
      $region34: #{dctgcn_forward.1} parent=5 // pred_check_branch
        %263 = sbr.rel (%p261) target = $region36
      $region35: #{dctgcn_forward.1} parent=5 // pred_region
        // Predicated region
        $region37: #{dctgcn_forward.1} parent=35 // pred_check
          %p264 = pneg %p41
        $region38: #{dctgcn_forward.1} parent=35 // pred_check_branch
          %266 = sbr.rel (%p264) target = $region40
        $region39: #{dctgcn_forward.1} parent=35 // pred_region
          %s267 = smul.u32 3, %s21
          %p268 = scmp.lt.s32.totalorder %s267, 5
          %s269 = scalar_select %p268, %s267, 5
          %s270 = smul.addr %s269, 10
          %s271 = smul.addr %s270, 8
          %s272 = scalar_lea.vmem %s0, %s271
          %s273 = smul.u32 3, %s21
        $region40: #{dctgcn_forward.1} parent=35 // pred_fallthru
          _
      $region36: #{dctgcn_forward.1} parent=5 // pred_fallthru
        _
      %p274 = scmp.le.s32.totalorder 1, %s21
      %p275 = scmp.lt.s32.totalorder %s21, 3
      %p276 = pnand %p274, %p275
      %p277 = pneg %p276
      // Predicated region
      $region41: #{dctgcn_forward.1} parent=5 // pred_check
        _
      $region42: #{dctgcn_forward.1} parent=5 // pred_check_branch
        %279 = sbr.rel (%p276) target = $region44
      $region43: #{dctgcn_forward.1} parent=5 // pred_region
        %s280 = ssub.s32 %s21, 1
        %s281 = smul.u32 3, %s26
        %p282 = scmp.lt.s32.totalorder %s281, 5
        %s283 = scalar_select %p282, %s281, 5
        %s284 = smul.addr %s283, 10
        %s285 = smul.addr %s284, 8
        %s286 = scalar_lea.vmem %s0, %s285
        %p287 = pneg %p47
        %p288 = pneg %p44
        %p289 = pneg %p68
        %p290 = pneg %p65
        %p291 = pneg %p89
        %p292 = pneg %p86
        %p293 = pneg %p110
        %p294 = pneg %p107
        %p295 = pneg %p131
        %p296 = pneg %p128
        %p297 = pneg %p152
        %p298 = pneg %p149
        %p299 = pneg %p178
        %p300 = pneg %p175
        %s301 = smul.u32 3, %s26
        %p302 = scmp.lt.s32.totalorder %s301, 5
        %s303 = scalar_select %p302, %s301, 5
        %s304 = smul.addr %s303, 3
        %s305 = smul.addr %s304, 8
        %s306 = scalar_lea.vmem %s6, %s305
        %p307 = pneg %p204
        %p308 = pneg %p201
        %s309 = sand.u32 %s191, 1
        %s310 = scalar_lea.sflag [#allocation3], %s309
        %s311 = sand.u32 %s191, 1
        %s312 = smul.addr %s311, 240
        %s313 = scalar_lea.vmem [#allocation2], %s312
        %p314 = pneg %p230
        %p315 = pneg %p227
        %s316 = sand.u32 %s217, 1
        %s317 = scalar_lea.sflag [#allocation5], %s316
        %s318 = sand.u32 %s217, 1
        %s319 = smul.addr %s318, 96
        %s320 = scalar_lea.vmem [#allocation4], %s319
        %s321 = smul.u32 3, %s26
        %p322 = scmp.lt.s32.totalorder %s321, 5
        %s323 = scalar_select %p322, %s321, 5
        %s324 = smul.addr %s323, 10
        %s325 = smul.addr %s324, 8
        %s326 = scalar_lea.vmem %s0, %s325
        %s327 = smul.u32 3, %s26
        %s328 = smul.u32 3, %s26
        %p329 = scmp.lt.s32.totalorder %s328, 5
        %s330 = scalar_select %p329, %s328, 5
        %s331 = smul.addr %s330, 3
        %s332 = smul.addr %s331, 8
        %s333 = scalar_lea.vmem %s6, %s332
        %s334 = smul.u32 3, %s26
        %s335 = smul.u32 3, %s26
        %s336 = smul.u32 3, %s26
        %v338 = vld [vmem:[%s1] sm:$0x1]
        %v339 = vld [vmem:[%s1 + $0x1] sm:$0x1]
        %v340 = vld [vmem:[%s2] sm:$0xff]
        %v341 = vld [vmem:[%s2 + $0x8] sm:$0xff]
        %v342 = vld [vmem:[%s2 + $0x10] sm:$0xff]
        %v343 = vld [vmem:[%s2 + $0x18] sm:$0xff]
        %v344 = vld [vmem:[%s2 + $0x20] sm:$0xff]
        %v345 = vld [vmem:[%s2 + $0x28] sm:$0xff]
        %v346 = vld [vmem:[%s2 + $0x30] sm:$0xff]
        %v347 = vld [vmem:[%s2 + $0x38] sm:$0xff]
        %v348 = vld [vmem:[%s2 + $0x40] sm:$0xff]
        %v349 = vld [vmem:[%s2 + $0x48] sm:$0xff]
        %v350 = vld [vmem:[%s2 + $0x50] sm:$0xff]
        %v351 = vld [vmem:[%s2 + $0x58] sm:$0xff]
        %v352 = vld [vmem:[%s2 + $0x60] sm:$0xff]
        %v353 = vld [vmem:[%s2 + $0x68] sm:$0xff]
        %v354 = vld [vmem:[%s2 + $0x70] sm:$0xff]
        %v355 = vld [vmem:[%s2 + $0x78] sm:$0xff]
        %v356 = vld [vmem:[%s2 + $0x80] sm:$0xff]
        %v357 = vld [vmem:[%s2 + $0x88] sm:$0xff]
        %v358 = vld [vmem:[%s2 + $0x90] sm:$0xff]
        %v359 = vld [vmem:[%s2 + $0x98] sm:$0xff]
        %v360 = vld [vmem:[%s2 + $0xa0] sm:$0xff]
        %v361 = vld [vmem:[%s2 + $0xa8] sm:$0xff]
        %v362 = vld [vmem:[%s2 + $0xb0] sm:$0xff]
        %v363 = vld [vmem:[%s2 + $0xb8] sm:$0xff]
        %v364 = vld [vmem:[%s2 + $0xc0] sm:$0xff]
        %v365 = vld [vmem:[%s2 + $0xc8] sm:$0xff]
        %v366 = vld [vmem:[%s2 + $0xd0] sm:$0xff]
        %v367 = vld [vmem:[%s2 + $0xd8] sm:$0xff]
        %v368 = vld [vmem:[%s3] sm:$0xff]
        %v369 = vld [vmem:[%s3 + $0x8] sm:$0xff]
        %v370 = vld [vmem:[%s3 + $0x10] sm:$0xff]
        %v371 = vld [vmem:[%s3 + $0x18] sm:$0xf]
        %v372 = vld [vmem:[%s4] sm:$0xff]
        %v373 = vld [vmem:[%s4 + $0x8] sm:$0xff]
        %v374 = vld [vmem:[%s4 + $0x10] sm:$0xff]
        %v375 = vld [vmem:[%s4 + $0x18] sm:$0xff]
        %v376 = vld [vmem:[%s4 + $0x20] sm:$0xff]
        %v377 = vld [vmem:[%s4 + $0x28] sm:$0xff]
        %v378 = vld [vmem:[%s4 + $0x30] sm:$0xff]
        %v379 = vld [vmem:[%s4 + $0x38] sm:$0xff]
        %v380 = vld [vmem:[%s4 + $0x40] sm:$0xff]
        %v381 = vld [vmem:[%s4 + $0x48] sm:$0xf]
        %v382 = vld [vmem:[%s5] sm:$0xff]
        %v383 = vld [vmem:[%s5 + $0x8] sm:$0xff]
        %v384 = vld [vmem:[%s5 + $0x10] sm:$0xff]
        %v385 = vld [vmem:[%s5 + $0x18] sm:$0xff]
        %v386 = vld [vmem:[%s5 + $0x20] sm:$0xff]
        %v387 = vld [vmem:[%s5 + $0x28] sm:$0xff]
        %v388 = vld [vmem:[%s5 + $0x30] sm:$0xff]
        %v389 = vld [vmem:[%s5 + $0x38] sm:$0xff]
        %v390 = vld [vmem:[%s5 + $0x40] sm:$0xff]
        %v391 = vld [vmem:[%s5 + $0x48] sm:$0xf]
        %v392 = vld [vmem:[%s326] sm:$0xff]
        %v393 = vld [vmem:[%s326 + $0x8] sm:$0xff]
        %v394 = vld [vmem:[%s326 + $0x10] sm:$0xff]
        %v395 = vld [vmem:[%s326 + $0x18] sm:$0xff]
        %v396 = vld [vmem:[%s326 + $0x20] sm:$0xff]
        %v397 = vld [vmem:[%s326 + $0x28] sm:$0xff]
        %v398 = vld [vmem:[%s326 + $0x30] sm:$0xff]
        %v399 = vld [vmem:[%s326 + $0x38] sm:$0xff]
        %v400 = vld [vmem:[%s326 + $0x40] sm:$0xff]
        %v401 = vld [vmem:[%s326 + $0x48] sm:$0xf]
        %v402 = vlaneseq
        %v403 = vshrl.u32 %v402, 7
        %v404 = vsub.s32 0, %v403
        %v405 = vrot.slane %v338, %v404
        %v406 = vsub.f32 %v392, %v405
        %v407 = vsub.f32 %v393, %v405
        %v408 = vsub.f32 %v394, %v405
        %v409 = vsub.f32 %v395, %v405
        %v410 = vsub.f32 %v396, %v405
        %v411 = vsub.f32 %v397, %v405
        %v412 = vsub.f32 %v398, %v405
        %v413 = vsub.f32 %v399, %v405
        %v414 = vsub.f32 %v400, %v405
        %v415 = vsub.f32 %v401, %v405
        %v416 = vlaneseq
        %v417 = vshrl.u32 %v416, 7
        %v418 = vsub.s32 0, %v417
        %v419 = vrot.slane %v339, %v418
        %v420 = vmul.f32 %v406, %v419
        %v421 = vmul.f32 %v407, %v419
        %v422 = vmul.f32 %v408, %v419
        %v423 = vmul.f32 %v409, %v419
        %v424 = vmul.f32 %v410, %v419
        %v425 = vmul.f32 %v411, %v419
        %v426 = vmul.f32 %v412, %v419
        %v427 = vmul.f32 %v413, %v419
        %v428 = vmul.f32 %v414, %v419
        %v429 = vmul.f32 %v415, %v419
        %v430 = vpack.c.bf16 %v421, %v420
        %v431 = vpack.c.bf16 %v423, %v422
        %v432 = vpack.c.bf16 %v425, %v424
        %v433 = vpack.c.bf16 %v427, %v426
        %v434 = vpack.c.bf16 %v429, %v428
        %v435 = vpack.c.bf16 %v341, %v340
        %v436 = vpack.c.bf16 %v343, %v342
        %vm437 = vcmask 261120
        %v439 = vsel %vm437, %v430, 0
        %v442 = vsel %vm437, %v431, 0
        %v445 = vsel %vm437, %v432, 0
        %v448 = vsel %vm437, %v433, 0
        %v451 = vsel %vm437, %v434, 0
        %453 = vmatprep.subr.bf16.mxu0 0
        %454 = vmatpush1.bf16.msra.mxu0 %v435
        %455 = vmatprep.subr.bf16.mxu0 0
        %456 = vmatpush1.bf16.msra.mxu0 %v436
        %457 = vmatprep.subr.bf16.mxu0 0
        %458 = vmatpush1.bf16.msra.mxu0 0
        %459 = vmatprep.subr.bf16.mxu0 0
        %460 = vmatpush1.bf16.msra.mxu0 0
        %461 = vmatprep.subr.bf16.mxu0 0
        %462 = vmatpush1.bf16.msra.mxu0 0
        %463 = vmatprep.subr.bf16.mxu0 0
        %464 = vmatpush1.bf16.msra.mxu0 0
        %465 = vmatprep.subr.bf16.mxu0 0
        %466 = vmatpush1.bf16.msra.mxu0 0
        %467 = vmatprep.subr.bf16.mxu0 0
        %468 = vmatpush1.bf16.msra.mxu0 0
        %469 = vmatprep.subr.bf16.mxu0 0
        %470 = vmatpush1.bf16.msra.mxu0 0
        %471 = vmatprep.subr.bf16.mxu0 0
        %472 = vmatpush1.bf16.msra.mxu0 0
        %473 = vmatprep.subr.bf16.mxu0 0
        %474 = vmatpush1.bf16.msra.mxu0 0
        %475 = vmatprep.subr.bf16.mxu0 0
        %476 = vmatpush1.bf16.msra.mxu0 0
        %477 = vmatprep.subr.bf16.mxu0 0
        %478 = vmatpush1.bf16.msra.mxu0 0
        %479 = vmatprep.subr.bf16.mxu0 0
        %480 = vmatpush1.bf16.msra.mxu0 0
        %481 = vmatprep.subr.bf16.mxu0 0
        %482 = vmatpush1.bf16.msra.mxu0 0
        %483 = vmatprep.subr.bf16.mxu0 0
        %484 = vmatpush1.bf16.msra.mxu0 0
        %485 = vmatprep.mubr.bf16.mxu0 0
        %486 = vmatmul.mubr.bf16.gmra.mrb[0].mxu0 %v439
        %v487 = vpop.f32.mrb[0].mxu0
        %v488 = vadd.f32 0.0, %v487
        %v489 = vpop.f32.mrb[0].mxu0
        %v490 = vpop.f32.mrb[0].mxu0
        %v491 = vadd.f32 0.0, %v490
        %v492 = vpop.f32.mrb[0].mxu0
        %493 = vmatprep.mubr.bf16.mxu0 0
        %494 = vmatmul.mubr.bf16.gmra.mrb[0].mxu0 %v442
        %v495 = vpop.f32.mrb[0].mxu0
        %v496 = vadd.f32 0.0, %v495
        %v497 = vpop.f32.mrb[0].mxu0
        %v498 = vpop.f32.mrb[0].mxu0
        %v499 = vadd.f32 0.0, %v498
        %v500 = vpop.f32.mrb[0].mxu0
        %501 = vmatprep.mubr.bf16.mxu0 0
        %502 = vmatmul.mubr.bf16.gmra.mrb[0].mxu0 %v445
        %v503 = vpop.f32.mrb[0].mxu0
        %v504 = vadd.f32 0.0, %v503
        %v505 = vpop.f32.mrb[0].mxu0
        %v506 = vpop.f32.mrb[0].mxu0
        %v507 = vadd.f32 0.0, %v506
        %v508 = vpop.f32.mrb[0].mxu0
        %509 = vmatprep.mubr.bf16.mxu0 0
        %510 = vmatmul.mubr.bf16.gmra.mrb[0].mxu0 %v448
        %v511 = vpop.f32.mrb[0].mxu0
        %v512 = vadd.f32 0.0, %v511
        %v513 = vpop.f32.mrb[0].mxu0
        %v514 = vpop.f32.mrb[0].mxu0
        %v515 = vadd.f32 0.0, %v514
        %v516 = vpop.f32.mrb[0].mxu0
        %517 = vmatprep.mubr.bf16.mxu0 0
        %518 = vmatmul.mubr.bf16.gmra.mrb[0].mxu0 %v451
        %v519 = vpop.f32.mrb[0].mxu0
        %v520 = vadd.f32 0.0, %v519
        %v521 = vpop.f32.mrb[0].mxu0
        %v522 = vpop.f32.mrb[0].mxu0
        %v523 = vadd.f32 0.0, %v522
        %v524 = vpop.f32.mrb[0].mxu0
        %525 = vdwg.mxu0
        %v526 = vpack.c.bf16 %v491, %v488
        %v527 = vpack.c.bf16 %v499, %v496
        %v528 = vpack.c.bf16 %v507, %v504
        %v529 = vpack.c.bf16 %v515, %v512
        %v530 = vpack.c.bf16 %v523, %v520
        %536 = vrot.lane.b32.xlu0 %v526, 120
        %v537 = vpop.permute.xlu0 %536
        %538 = vrot.lane.b32.xlu0 %v527, 120
        %v539 = vpop.permute.xlu0 %538
        %540 = vrot.lane.b32.xlu0 %v528, 120
        %v541 = vpop.permute.xlu0 %540
        %542 = vrot.lane.b32.xlu0 %v529, 120
        %v543 = vpop.permute.xlu0 %542
        %544 = vrot.lane.b32.xlu0 %v530, 120
        %v545 = vpop.permute.xlu0 %544
        %vm546 = vcmask 64512
        %v548 = vsel %vm546, %v526, 0
        %v551 = vsel %vm546, %v527, 0
        %v554 = vsel %vm546, %v528, 0
        %v557 = vsel %vm546, %v529, 0
        %v560 = vsel %vm546, %v530, 0
        %v563 = vsel %vm546, %v537, 0
        %v566 = vsel %vm546, %v539, 0
        %v569 = vsel %vm546, %v541, 0
        %v572 = vsel %vm546, %v543, 0
        %v575 = vsel %vm546, %v545, 0
        %577 = vmatprep.subr.bf16.mxu0 0
        %578 = vmatpush1.bf16.xpose.msra.mxu0 %v563
        %579 = vmatprep.subr.bf16.mxu0 0
        %580 = vmatpush1.bf16.xpose.msra.mxu0 %v566
        %581 = vmatprep.subr.bf16.mxu0 0
        %582 = vmatpush1.bf16.xpose.msra.mxu0 %v569
        %583 = vmatprep.subr.bf16.mxu0 0
        %584 = vmatpush1.bf16.xpose.msra.mxu0 %v572
        %585 = vmatprep.subr.bf16.mxu0 0
        %586 = vmatpush1.bf16.xpose.msra.mxu0 %v575
        %587 = vmatprep.subr.bf16.mxu0 0
        %588 = vmatpush1.bf16.xpose.msra.mxu0 0
        %589 = vmatprep.subr.bf16.mxu0 0
        %590 = vmatpush1.bf16.xpose.msra.mxu0 0
        %591 = vmatprep.subr.bf16.mxu0 0
        %592 = vmatpush1.bf16.xpose.msra.mxu0 0
        %593 = vmatprep.subr.bf16.mxu0 0
        %594 = vmatpush1.bf16.xpose.msra.mxu0 0
        %595 = vmatprep.subr.bf16.mxu0 0
        %596 = vmatpush1.bf16.xpose.msra.mxu0 0
        %597 = vmatprep.subr.bf16.mxu0 0
        %598 = vmatpush1.bf16.xpose.msra.mxu0 0
        %599 = vmatprep.subr.bf16.mxu0 0
        %600 = vmatpush1.bf16.xpose.msra.mxu0 0
        %601 = vmatprep.subr.bf16.mxu0 0
        %602 = vmatpush1.bf16.xpose.msra.mxu0 0
        %603 = vmatprep.subr.bf16.mxu0 0
        %604 = vmatpush1.bf16.xpose.msra.mxu0 0
        %605 = vmatprep.subr.bf16.mxu0 0
        %606 = vmatpush1.bf16.xpose.msra.mxu0 0
        %607 = vmatprep.subr.bf16.mxu0 0
        %608 = vmatpush1.bf16.xpose.msra.mxu0 0
        %609 = vmatprep.mubr.bf16.mxu0 0
        %610 = vmatmul.mubr.bf16.gmra.mrb[0].mxu0 %v548
        %v611 = vpop.f32.mrb[0].mxu0
        %v612 = vadd.f32 0.0, %v611
        %v613 = vpop.f32.mrb[0].mxu0
        %v614 = vpop.f32.mrb[0].mxu0
        %v615 = vadd.f32 0.0, %v614
        %v616 = vpop.f32.mrb[0].mxu0
        %617 = vmatprep.mubr.bf16.mxu0 0
        %618 = vmatmul.mubr.bf16.gmra.mrb[0].mxu0 %v551
        %v619 = vpop.f32.mrb[0].mxu0
        %v620 = vadd.f32 0.0, %v619
        %v621 = vpop.f32.mrb[0].mxu0
        %v622 = vpop.f32.mrb[0].mxu0
        %v623 = vadd.f32 0.0, %v622
        %v624 = vpop.f32.mrb[0].mxu0
        %625 = vmatprep.mubr.bf16.mxu0 0
        %626 = vmatmul.mubr.bf16.gmra.mrb[0].mxu0 %v554
        %v627 = vpop.f32.mrb[0].mxu0
        %v628 = vadd.f32 0.0, %v627
        %v629 = vpop.f32.mrb[0].mxu0
        %v630 = vpop.f32.mrb[0].mxu0
        %v631 = vadd.f32 0.0, %v630
        %v632 = vpop.f32.mrb[0].mxu0
        %633 = vmatprep.mubr.bf16.mxu0 0
        %634 = vmatmul.mubr.bf16.gmra.mrb[0].mxu0 %v557
        %v635 = vpop.f32.mrb[0].mxu0
        %v636 = vadd.f32 0.0, %v635
        %v637 = vpop.f32.mrb[0].mxu0
        %v638 = vpop.f32.mrb[0].mxu0
        %v639 = vadd.f32 0.0, %v638
        %v640 = vpop.f32.mrb[0].mxu0
        %641 = vmatprep.mubr.bf16.mxu0 0
        %642 = vmatmul.mubr.bf16.gmra.mrb[0].mxu0 %v560
        %v643 = vpop.f32.mrb[0].mxu0
        %v644 = vadd.f32 0.0, %v643
        %v645 = vpop.f32.mrb[0].mxu0
        %v646 = vpop.f32.mrb[0].mxu0
        %v647 = vadd.f32 0.0, %v646
        %v648 = vpop.f32.mrb[0].mxu0
        %649 = vdwg.mxu0
        %vm650 = vcmask 621568
        %v651 = vsel %vm650, %v612, -inf
        %652 = vmax.xlane.f32.xlu0 %v651
        %v653 = vpop.xlane.xlu0 %652
        %v654 = vsel %vm650, %v615, -inf
        %655 = vmax.xlane.f32.xlu0 %v654
        %v656 = vpop.xlane.xlu0 %655
        %v657 = vsel %vm650, %v620, -inf
        %658 = vmax.xlane.f32.xlu0 %v657
        %v659 = vpop.xlane.xlu0 %658
        %v660 = vsel %vm650, %v623, -inf
        %661 = vmax.xlane.f32.xlu0 %v660
        %v662 = vpop.xlane.xlu0 %661
        %v663 = vsel %vm650, %v628, -inf
        %664 = vmax.xlane.f32.xlu0 %v663
        %v665 = vpop.xlane.xlu0 %664
        %v666 = vsel %vm650, %v631, -inf
        %667 = vmax.xlane.f32.xlu0 %v666
        %v668 = vpop.xlane.xlu0 %667
        %v669 = vsel %vm650, %v636, -inf
        %670 = vmax.xlane.f32.xlu0 %v669
        %v671 = vpop.xlane.xlu0 %670
        %v672 = vsel %vm650, %v639, -inf
        %673 = vmax.xlane.f32.xlu0 %v672
        %v674 = vpop.xlane.xlu0 %673
        %v675 = vsel %vm650, %v644, -inf
        %676 = vmax.xlane.f32.xlu0 %v675
        %v677 = vpop.xlane.xlu0 %676
        %vm678 = vcmask 617472
        %v679 = vsel %vm678, %v647, -inf
        %680 = vmax.xlane.f32.xlu0 %v679
        %v681 = vpop.xlane.xlu0 %680
        %v682 = vsub.f32 %v612, %v653
        %v683 = vsub.f32 %v615, %v656
        %v684 = vsub.f32 %v620, %v659
        %v685 = vsub.f32 %v623, %v662
        %v686 = vsub.f32 %v628, %v665
        %v687 = vsub.f32 %v631, %v668
        %v688 = vsub.f32 %v636, %v671
        %v689 = vsub.f32 %v639, %v674
        %v690 = vsub.f32 %v644, %v677
        %v691 = vsub.f32 %v647, %v681
        %v692 = vmul.f32 %v682, 1.442695
        %v693 = vpow.pop %v692
        %v694 = vmul.f32 %v683, 1.442695
        %v695 = vpow.pop %v694
        %v696 = vmul.f32 %v684, 1.442695
        %v697 = vpow.pop %v696
        %v698 = vmul.f32 %v685, 1.442695
        %v699 = vpow.pop %v698
        %v700 = vmul.f32 %v686, 1.442695
        %v701 = vpow.pop %v700
        %v702 = vmul.f32 %v687, 1.442695
        %v703 = vpow.pop %v702
        %v704 = vmul.f32 %v688, 1.442695
        %v705 = vpow.pop %v704
        %v706 = vmul.f32 %v689, 1.442695
        %v707 = vpow.pop %v706
        %v708 = vmul.f32 %v690, 1.442695
        %v709 = vpow.pop %v708
        %v710 = vmul.f32 %v691, 1.442695
        %v711 = vpow.pop %v710
        %v712 = vsel %vm650, %v693, 0.0
        %713 = vadd.xlane.f32.xlu0 %v712
        %v714 = vpop.xlane.xlu0 %713
        %v715 = vsel %vm650, %v695, 0.0
        %716 = vadd.xlane.f32.xlu0 %v715
        %v717 = vpop.xlane.xlu0 %716
        %v718 = vsel %vm650, %v697, 0.0
        %719 = vadd.xlane.f32.xlu0 %v718
        %v720 = vpop.xlane.xlu0 %719
        %v721 = vsel %vm650, %v699, 0.0
        %722 = vadd.xlane.f32.xlu0 %v721
        %v723 = vpop.xlane.xlu0 %722
        %v724 = vsel %vm650, %v701, 0.0
        %725 = vadd.xlane.f32.xlu0 %v724
        %v726 = vpop.xlane.xlu0 %725
        %v727 = vsel %vm650, %v703, 0.0
        %728 = vadd.xlane.f32.xlu0 %v727
        %v729 = vpop.xlane.xlu0 %728
        %v730 = vsel %vm650, %v705, 0.0
        %731 = vadd.xlane.f32.xlu0 %v730
        %v732 = vpop.xlane.xlu0 %731
        %v733 = vsel %vm650, %v707, 0.0
        %734 = vadd.xlane.f32.xlu0 %v733
        %v735 = vpop.xlane.xlu0 %734
        %v736 = vsel %vm650, %v709, 0.0
        %737 = vadd.xlane.f32.xlu0 %v736
        %v738 = vpop.xlane.xlu0 %737
        %v739 = vsel %vm678, %v711, 0.0
        %740 = vadd.xlane.f32.xlu0 %v739
        %v741 = vpop.xlane.xlu0 %740
        %v742 = vrcp.pop %v714
        %v743 = vmul.f32 %v693, %v742
        %v744 = vrcp.pop %v717
        %v745 = vmul.f32 %v695, %v744
        %v746 = vrcp.pop %v720
        %v747 = vmul.f32 %v697, %v746
        %v748 = vrcp.pop %v723
        %v749 = vmul.f32 %v699, %v748
        %v750 = vrcp.pop %v726
        %v751 = vmul.f32 %v701, %v750
        %v752 = vrcp.pop %v729
        %v753 = vmul.f32 %v703, %v752
        %v754 = vrcp.pop %v732
        %v755 = vmul.f32 %v705, %v754
        %v756 = vrcp.pop %v735
        %v757 = vmul.f32 %v707, %v756
        %v758 = vrcp.pop %v738
        %v759 = vmul.f32 %v709, %v758
        %v760 = vrcp.pop %v741
        %v761 = vmul.f32 %v711, %v760
        %v762 = vpack.c.bf16 %v745, %v743
        %v763 = vpack.c.bf16 %v749, %v747
        %v764 = vpack.c.bf16 %v753, %v751
        %v765 = vpack.c.bf16 %v757, %v755
        %v766 = vpack.c.bf16 %v761, %v759
        %v768 = vsel %vm650, %v762, 0
        %v771 = vsel %vm650, %v763, 0
        %v774 = vsel %vm650, %v764, 0
        %v777 = vsel %vm650, %v765, 0
        %v780 = vsel %vm650, %v766, 0
        %vm782 = vcmask 1045504
        %v783 = vsel %vm782, %v434, 0
        %785 = vmatprep.subr.bf16.mxu0 0
        %786 = vmatpush1.bf16.msra.mxu0 %v430
        %787 = vmatprep.subr.bf16.mxu0 0
        %788 = vmatpush1.bf16.msra.mxu0 %v431
        %789 = vmatprep.subr.bf16.mxu0 0
        %790 = vmatpush1.bf16.msra.mxu0 %v432
        %791 = vmatprep.subr.bf16.mxu0 0
        %792 = vmatpush1.bf16.msra.mxu0 %v433
        %793 = vmatprep.subr.bf16.mxu0 0
        %794 = vmatpush1.bf16.msra.mxu0 %v783
        %795 = vmatprep.subr.bf16.mxu0 0
        %796 = vmatpush1.bf16.msra.mxu0 0
        %797 = vmatprep.subr.bf16.mxu0 0
        %798 = vmatpush1.bf16.msra.mxu0 0
        %799 = vmatprep.subr.bf16.mxu0 0
        %800 = vmatpush1.bf16.msra.mxu0 0
        %801 = vmatprep.subr.bf16.mxu0 0
        %802 = vmatpush1.bf16.msra.mxu0 0
        %803 = vmatprep.subr.bf16.mxu0 0
        %804 = vmatpush1.bf16.msra.mxu0 0
        %805 = vmatprep.subr.bf16.mxu0 0
        %806 = vmatpush1.bf16.msra.mxu0 0
        %807 = vmatprep.subr.bf16.mxu0 0
        %808 = vmatpush1.bf16.msra.mxu0 0
        %809 = vmatprep.subr.bf16.mxu0 0
        %810 = vmatpush1.bf16.msra.mxu0 0
        %811 = vmatprep.subr.bf16.mxu0 0
        %812 = vmatpush1.bf16.msra.mxu0 0
        %813 = vmatprep.subr.bf16.mxu0 0
        %814 = vmatpush1.bf16.msra.mxu0 0
        %815 = vmatprep.subr.bf16.mxu0 0
        %816 = vmatpush1.bf16.msra.mxu0 0
        %817 = vmatprep.mubr.bf16.mxu0 0
        %818 = vmatmul.mubr.bf16.gmra.mrb[0].mxu0 %v768
        %v819 = vpop.f32.mrb[0].mxu0
        %v820 = vadd.f32 0.0, %v819
        %v821 = vpop.f32.mrb[0].mxu0
        %v822 = vpop.f32.mrb[0].mxu0
        %v823 = vadd.f32 0.0, %v822
        %v824 = vpop.f32.mrb[0].mxu0
        %825 = vmatprep.mubr.bf16.mxu0 0
        %826 = vmatmul.mubr.bf16.gmra.mrb[0].mxu0 %v771
        %v827 = vpop.f32.mrb[0].mxu0
        %v828 = vadd.f32 0.0, %v827
        %v829 = vpop.f32.mrb[0].mxu0
        %v830 = vpop.f32.mrb[0].mxu0
        %v831 = vadd.f32 0.0, %v830
        %v832 = vpop.f32.mrb[0].mxu0
        %833 = vmatprep.mubr.bf16.mxu0 0
        %834 = vmatmul.mubr.bf16.gmra.mrb[0].mxu0 %v774
        %v835 = vpop.f32.mrb[0].mxu0
        %v836 = vadd.f32 0.0, %v835
        %v837 = vpop.f32.mrb[0].mxu0
        %v838 = vpop.f32.mrb[0].mxu0
        %v839 = vadd.f32 0.0, %v838
        %v840 = vpop.f32.mrb[0].mxu0
        %841 = vmatprep.mubr.bf16.mxu0 0
        %842 = vmatmul.mubr.bf16.gmra.mrb[0].mxu0 %v777
        %v843 = vpop.f32.mrb[0].mxu0
        %v844 = vadd.f32 0.0, %v843
        %v845 = vpop.f32.mrb[0].mxu0
        %v846 = vpop.f32.mrb[0].mxu0
        %v847 = vadd.f32 0.0, %v846
        %v848 = vpop.f32.mrb[0].mxu0
        %849 = vmatprep.mubr.bf16.mxu0 0
        %850 = vmatmul.mubr.bf16.gmra.mrb[0].mxu0 %v780
        %v851 = vpop.f32.mrb[0].mxu0
        %v852 = vadd.f32 0.0, %v851
        %v853 = vpop.f32.mrb[0].mxu0
        %v854 = vpop.f32.mrb[0].mxu0
        %v855 = vadd.f32 0.0, %v854
        %v856 = vpop.f32.mrb[0].mxu0
        %857 = vdwg.mxu0
        %v858 = vpack.c.bf16 %v823, %v820
        %v859 = vpack.c.bf16 %v831, %v828
        %v860 = vpack.c.bf16 %v839, %v836
        %v861 = vpack.c.bf16 %v847, %v844
        %v862 = vpack.c.bf16 %v855, %v852
        %v864 = vsel %vm782, %v862, 0
        %866 = vmatprep.subr.bf16.mxu0 0
        %867 = vmatpush1.bf16.msra.mxu0 %v858
        %868 = vmatprep.subr.bf16.mxu0 0
        %869 = vmatpush1.bf16.msra.mxu0 %v859
        %870 = vmatprep.subr.bf16.mxu0 0
        %871 = vmatpush1.bf16.msra.mxu0 %v860
        %872 = vmatprep.subr.bf16.mxu0 0
        %873 = vmatpush1.bf16.msra.mxu0 %v861
        %874 = vmatprep.subr.bf16.mxu0 0
        %875 = vmatpush1.bf16.msra.mxu0 %v864
        %876 = vmatprep.subr.bf16.mxu0 0
        %877 = vmatpush1.bf16.msra.mxu0 0
        %878 = vmatprep.subr.bf16.mxu0 0
        %879 = vmatpush1.bf16.msra.mxu0 0
        %880 = vmatprep.subr.bf16.mxu0 0
        %881 = vmatpush1.bf16.msra.mxu0 0
        %882 = vmatprep.subr.bf16.mxu0 0
        %883 = vmatpush1.bf16.msra.mxu0 0
        %884 = vmatprep.subr.bf16.mxu0 0
        %885 = vmatpush1.bf16.msra.mxu0 0
        %886 = vmatprep.subr.bf16.mxu0 0
        %887 = vmatpush1.bf16.msra.mxu0 0
        %888 = vmatprep.subr.bf16.mxu0 0
        %889 = vmatpush1.bf16.msra.mxu0 0
        %890 = vmatprep.subr.bf16.mxu0 0
        %891 = vmatpush1.bf16.msra.mxu0 0
        %892 = vmatprep.subr.bf16.mxu0 0
        %893 = vmatpush1.bf16.msra.mxu0 0
        %894 = vmatprep.subr.bf16.mxu0 0
        %895 = vmatpush1.bf16.msra.mxu0 0
        %896 = vmatprep.subr.bf16.mxu0 0
        %897 = vmatpush1.bf16.msra.mxu0 0
        %898 = vmatprep.mubr.bf16.mxu0 0
        %899 = vmatmul.mubr.bf16.gmra.mrb[0].mxu0 %v768
        %v900 = vpop.f32.mrb[0].mxu0
        %v901 = vadd.f32 0.0, %v900
        %v902 = vpop.f32.mrb[0].mxu0
        %v903 = vpop.f32.mrb[0].mxu0
        %v904 = vadd.f32 0.0, %v903
        %v905 = vpop.f32.mrb[0].mxu0
        %906 = vmatprep.mubr.bf16.mxu0 0
        %907 = vmatmul.mubr.bf16.gmra.mrb[0].mxu0 %v771
        %v908 = vpop.f32.mrb[0].mxu0
        %v909 = vadd.f32 0.0, %v908
        %v910 = vpop.f32.mrb[0].mxu0
        %v911 = vpop.f32.mrb[0].mxu0
        %v912 = vadd.f32 0.0, %v911
        %v913 = vpop.f32.mrb[0].mxu0
        %914 = vmatprep.mubr.bf16.mxu0 0
        %915 = vmatmul.mubr.bf16.gmra.mrb[0].mxu0 %v774
        %v916 = vpop.f32.mrb[0].mxu0
        %v917 = vadd.f32 0.0, %v916
        %v918 = vpop.f32.mrb[0].mxu0
        %v919 = vpop.f32.mrb[0].mxu0
        %v920 = vadd.f32 0.0, %v919
        %v921 = vpop.f32.mrb[0].mxu0
        %922 = vmatprep.mubr.bf16.mxu0 0
        %923 = vmatmul.mubr.bf16.gmra.mrb[0].mxu0 %v777
        %v924 = vpop.f32.mrb[0].mxu0
        %v925 = vadd.f32 0.0, %v924
        %v926 = vpop.f32.mrb[0].mxu0
        %v927 = vpop.f32.mrb[0].mxu0
        %v928 = vadd.f32 0.0, %v927
        %v929 = vpop.f32.mrb[0].mxu0
        %930 = vmatprep.mubr.bf16.mxu0 0
        %931 = vmatmul.mubr.bf16.gmra.mrb[0].mxu0 %v780
        %v932 = vpop.f32.mrb[0].mxu0
        %v933 = vadd.f32 0.0, %v932
        %v934 = vpop.f32.mrb[0].mxu0
        %v935 = vpop.f32.mrb[0].mxu0
        %v936 = vadd.f32 0.0, %v935
        %v937 = vpop.f32.mrb[0].mxu0
        %938 = vdwg.mxu0
        %949 = vrot.lane.b32.xlu0 %v820, 32
        %v950 = vpop.permute.xlu0 %949
        %951 = vrot.lane.b32.xlu0 %v823, 32
        %v952 = vpop.permute.xlu0 %951
        %953 = vrot.lane.b32.xlu0 %v828, 32
        %v954 = vpop.permute.xlu0 %953
        %955 = vrot.lane.b32.xlu0 %v831, 32
        %v956 = vpop.permute.xlu0 %955
        %957 = vrot.lane.b32.xlu0 %v836, 32
        %v958 = vpop.permute.xlu0 %957
        %959 = vrot.lane.b32.xlu0 %v839, 32
        %v960 = vpop.permute.xlu0 %959
        %961 = vrot.lane.b32.xlu0 %v844, 32
        %v962 = vpop.permute.xlu0 %961
        %963 = vrot.lane.b32.xlu0 %v847, 32
        %v964 = vpop.permute.xlu0 %963
        %965 = vrot.lane.b32.xlu0 %v852, 32
        %v966 = vpop.permute.xlu0 %965
        %967 = vrot.lane.b32.xlu0 %v855, 32
        %v968 = vpop.permute.xlu0 %967
        %989 = vrot.lane.b32.xlu0 %v901, 64
        %v990 = vpop.permute.xlu0 %989
        %991 = vrot.lane.b32.xlu0 %v904, 64
        %v992 = vpop.permute.xlu0 %991
        %993 = vrot.lane.b32.xlu0 %v909, 64
        %v994 = vpop.permute.xlu0 %993
        %995 = vrot.lane.b32.xlu0 %v912, 64
        %v996 = vpop.permute.xlu0 %995
        %997 = vrot.lane.b32.xlu0 %v917, 64
        %v998 = vpop.permute.xlu0 %997
        %999 = vrot.lane.b32.xlu0 %v920, 64
        %v1000 = vpop.permute.xlu0 %999
        %1001 = vrot.lane.b32.xlu0 %v925, 64
        %v1002 = vpop.permute.xlu0 %1001
        %1003 = vrot.lane.b32.xlu0 %v928, 64
        %v1004 = vpop.permute.xlu0 %1003
        %1005 = vrot.lane.b32.xlu0 %v933, 64
        %v1006 = vpop.permute.xlu0 %1005
        %1007 = vrot.lane.b32.xlu0 %v936, 64
        %v1008 = vpop.permute.xlu0 %1007
        %v1019 = vsel %vm437, %v420, %v950
        %v1020 = vsel %vm437, %v421, %v952
        %v1021 = vsel %vm437, %v422, %v954
        %v1022 = vsel %vm437, %v423, %v956
        %v1023 = vsel %vm437, %v424, %v958
        %v1024 = vsel %vm437, %v425, %v960
        %v1025 = vsel %vm437, %v426, %v962
        %v1026 = vsel %vm437, %v427, %v964
        %v1027 = vsel %vm437, %v428, %v966
        %v1028 = vsel %vm437, %v429, %v968
        %vm1029 = vcmask 523264
        %v1030 = vsel %vm1029, %v1019, %v990
        %v1031 = vsel %vm1029, %v1020, %v992
        %v1032 = vsel %vm1029, %v1021, %v994
        %v1033 = vsel %vm1029, %v1022, %v996
        %v1034 = vsel %vm1029, %v1023, %v998
        %v1035 = vsel %vm1029, %v1024, %v1000
        %v1036 = vsel %vm1029, %v1025, %v1002
        %v1037 = vsel %vm1029, %v1026, %v1004
        %v1038 = vsel %vm1029, %v1027, %v1006
        %v1039 = vsel %vm1029, %v1028, %v1008
        %v1040 = vpack.c.bf16 %v1031, %v1030
        %v1041 = vpack.c.bf16 %v1033, %v1032
        %v1042 = vpack.c.bf16 %v1035, %v1034
        %v1043 = vpack.c.bf16 %v1037, %v1036
        %v1044 = vpack.c.bf16 %v1039, %v1038
        %v1045 = vpack.c.bf16 %v349, %v348
        %v1046 = vpack.c.bf16 %v351, %v350
        %v1047 = vpack.c.bf16 %v353, %v352
        %v1048 = vpack.c.bf16 %v355, %v354
        %v1049 = vpack.c.bf16 %v357, %v356
        %v1050 = vpack.c.bf16 %v359, %v358
        %vm1051 = vcmask 785408
        %v1053 = vsel %vm1051, %v1040, 0
        %v1056 = vsel %vm1051, %v1041, 0
        %v1059 = vsel %vm1051, %v1042, 0
        %v1062 = vsel %vm1051, %v1043, 0
        %v1065 = vsel %vm1051, %v1044, 0
        %1067 = vmatprep.subr.bf16.mxu0 0
        %1068 = vmatpush1.bf16.msra.mxu0 %v1045
        %1069 = vmatprep.subr.bf16.mxu0 0
        %1070 = vmatpush1.bf16.msra.mxu0 %v1046
        %1071 = vmatprep.subr.bf16.mxu0 0
        %1072 = vmatpush1.bf16.msra.mxu0 %v1047
        %1073 = vmatprep.subr.bf16.mxu0 0
        %1074 = vmatpush1.bf16.msra.mxu0 %v1048
        %1075 = vmatprep.subr.bf16.mxu0 0
        %1076 = vmatpush1.bf16.msra.mxu0 %v1049
        %1077 = vmatprep.subr.bf16.mxu0 0
        %1078 = vmatpush1.bf16.msra.mxu0 %v1050
        %1079 = vmatprep.subr.bf16.mxu0 0
        %1080 = vmatpush1.bf16.msra.mxu0 0
        %1081 = vmatprep.subr.bf16.mxu0 0
        %1082 = vmatpush1.bf16.msra.mxu0 0
        %1083 = vmatprep.subr.bf16.mxu0 0
        %1084 = vmatpush1.bf16.msra.mxu0 0
        %1085 = vmatprep.subr.bf16.mxu0 0
        %1086 = vmatpush1.bf16.msra.mxu0 0
        %1087 = vmatprep.subr.bf16.mxu0 0
        %1088 = vmatpush1.bf16.msra.mxu0 0
        %1089 = vmatprep.subr.bf16.mxu0 0
        %1090 = vmatpush1.bf16.msra.mxu0 0
        %1091 = vmatprep.subr.bf16.mxu0 0
        %1092 = vmatpush1.bf16.msra.mxu0 0
        %1093 = vmatprep.subr.bf16.mxu0 0
        %1094 = vmatpush1.bf16.msra.mxu0 0
        %1095 = vmatprep.subr.bf16.mxu0 0
        %1096 = vmatpush1.bf16.msra.mxu0 0
        %1097 = vmatprep.subr.bf16.mxu0 0
        %1098 = vmatpush1.bf16.msra.mxu0 0
        %1099 = vmatprep.mubr.bf16.mxu0 0
        %1100 = vmatmul.mubr.bf16.gmra.mrb[0].mxu0 %v1053
        %v1101 = vpop.f32.mrb[0].mxu0
        %v1102 = vadd.f32 0.0, %v1101
        %v1103 = vpop.f32.mrb[0].mxu0
        %v1104 = vpop.f32.mrb[0].mxu0
        %v1105 = vadd.f32 0.0, %v1104
        %v1106 = vpop.f32.mrb[0].mxu0
        %1107 = vmatprep.mubr.bf16.mxu0 0
        %1108 = vmatmul.mubr.bf16.gmra.mrb[0].mxu0 %v1056
        %v1109 = vpop.f32.mrb[0].mxu0
        %v1110 = vadd.f32 0.0, %v1109
        %v1111 = vpop.f32.mrb[0].mxu0
        %v1112 = vpop.f32.mrb[0].mxu0
        %v1113 = vadd.f32 0.0, %v1112
        %v1114 = vpop.f32.mrb[0].mxu0
        %1115 = vmatprep.mubr.bf16.mxu0 0
        %1116 = vmatmul.mubr.bf16.gmra.mrb[0].mxu0 %v1059
        %v1117 = vpop.f32.mrb[0].mxu0
        %v1118 = vadd.f32 0.0, %v1117
        %v1119 = vpop.f32.mrb[0].mxu0
        %v1120 = vpop.f32.mrb[0].mxu0
        %v1121 = vadd.f32 0.0, %v1120
        %v1122 = vpop.f32.mrb[0].mxu0
        %1123 = vmatprep.mubr.bf16.mxu0 0
        %1124 = vmatmul.mubr.bf16.gmra.mrb[0].mxu0 %v1062
        %v1125 = vpop.f32.mrb[0].mxu0
        %v1126 = vadd.f32 0.0, %v1125
        %v1127 = vpop.f32.mrb[0].mxu0
        %v1128 = vpop.f32.mrb[0].mxu0
        %v1129 = vadd.f32 0.0, %v1128
        %v1130 = vpop.f32.mrb[0].mxu0
        %1131 = vmatprep.mubr.bf16.mxu0 0
        %1132 = vmatmul.mubr.bf16.gmra.mrb[0].mxu0 %v1065
        %v1133 = vpop.f32.mrb[0].mxu0
        %v1134 = vadd.f32 0.0, %v1133
        %v1135 = vpop.f32.mrb[0].mxu0
        %v1136 = vpop.f32.mrb[0].mxu0
        %v1137 = vadd.f32 0.0, %v1136
        %v1138 = vpop.f32.mrb[0].mxu0
        %1139 = vdwg.mxu0
        %v1140 = vmax.f32 %v1102, 0.0
        %v1141 = vmax.f32 %v1105, 0.0
        %v1142 = vmax.f32 %v1110, 0.0
        %v1143 = vmax.f32 %v1113, 0.0
        %v1144 = vmax.f32 %v1118, 0.0
        %v1145 = vmax.f32 %v1121, 0.0
        %v1146 = vmax.f32 %v1126, 0.0
        %v1147 = vmax.f32 %v1129, 0.0
        %v1148 = vmax.f32 %v1134, 0.0
        %v1149 = vmax.f32 %v1137, 0.0
        %v1150 = vmul.f32 %v382, %v420
        %v1151 = vmul.f32 %v383, %v421
        %v1152 = vmul.f32 %v384, %v422
        %v1153 = vmul.f32 %v385, %v423
        %v1154 = vmul.f32 %v386, %v424
        %v1155 = vmul.f32 %v387, %v425
        %v1156 = vmul.f32 %v388, %v426
        %v1157 = vmul.f32 %v389, %v427
        %v1158 = vmul.f32 %v390, %v428
        %v1159 = vmul.f32 %v391, %v429
        %v1160 = vmax.f32 %v1150, 0.0
        %v1161 = vmax.f32 %v1151, 0.0
        %v1162 = vmax.f32 %v1152, 0.0
        %v1163 = vmax.f32 %v1153, 0.0
        %v1164 = vmax.f32 %v1154, 0.0
        %v1165 = vmax.f32 %v1155, 0.0
        %v1166 = vmax.f32 %v1156, 0.0
        %v1167 = vmax.f32 %v1157, 0.0
        %v1168 = vmax.f32 %v1158, 0.0
        %v1169 = vmax.f32 %v1159, 0.0
        %v1170 = vpack.c.bf16 %v369, %v368
        %v1171 = vpack.c.bf16 %v371, %v370
        %v1172 = vpack.c.bf16 %v1161, %v1160
        %v1173 = vpack.c.bf16 %v1163, %v1162
        %v1174 = vpack.c.bf16 %v1165, %v1164
        %v1175 = vpack.c.bf16 %v1167, %v1166
        %v1176 = vpack.c.bf16 %v1169, %v1168
        %v1178 = vsel %vm650, %v1170, 0
        %v1181 = vsel %vm650, %v1171, 0
        %v1184 = vsel %vm782, %v1176, 0
        %1186 = vmatprep.subr.bf16.mxu0 0
        %1187 = vmatpush1.bf16.msra.mxu0 %v1172
        %1188 = vmatprep.subr.bf16.mxu0 0
        %1189 = vmatpush1.bf16.msra.mxu0 %v1173
        %1190 = vmatprep.subr.bf16.mxu0 0
        %1191 = vmatpush1.bf16.msra.mxu0 %v1174
        %1192 = vmatprep.subr.bf16.mxu0 0
        %1193 = vmatpush1.bf16.msra.mxu0 %v1175
        %1194 = vmatprep.subr.bf16.mxu0 0
        %1195 = vmatpush1.bf16.msra.mxu0 %v1184
        %1196 = vmatprep.subr.bf16.mxu0 0
        %1197 = vmatpush1.bf16.msra.mxu0 0
        %1198 = vmatprep.subr.bf16.mxu0 0
        %1199 = vmatpush1.bf16.msra.mxu0 0
        %1200 = vmatprep.subr.bf16.mxu0 0
        %1201 = vmatpush1.bf16.msra.mxu0 0
        %1202 = vmatprep.subr.bf16.mxu0 0
        %1203 = vmatpush1.bf16.msra.mxu0 0
        %1204 = vmatprep.subr.bf16.mxu0 0
        %1205 = vmatpush1.bf16.msra.mxu0 0
        %1206 = vmatprep.subr.bf16.mxu0 0
        %1207 = vmatpush1.bf16.msra.mxu0 0
        %1208 = vmatprep.subr.bf16.mxu0 0
        %1209 = vmatpush1.bf16.msra.mxu0 0
        %1210 = vmatprep.subr.bf16.mxu0 0
        %1211 = vmatpush1.bf16.msra.mxu0 0
        %1212 = vmatprep.subr.bf16.mxu0 0
        %1213 = vmatpush1.bf16.msra.mxu0 0
        %1214 = vmatprep.subr.bf16.mxu0 0
        %1215 = vmatpush1.bf16.msra.mxu0 0
        %1216 = vmatprep.subr.bf16.mxu0 0
        %1217 = vmatpush1.bf16.msra.mxu0 0
        %1218 = vmatprep.mubr.bf16.mxu0 0
        %1219 = vmatmul.mubr.bf16.gmra.mrb[0].mxu0 %v1178
        %v1220 = vpop.f32.mrb[0].mxu0
        %v1221 = vadd.f32 0.0, %v1220
        %v1222 = vpop.f32.mrb[0].mxu0
        %v1223 = vpop.f32.mrb[0].mxu0
        %v1224 = vadd.f32 0.0, %v1223
        %v1225 = vpop.f32.mrb[0].mxu0
        %1226 = vmatprep.mubr.bf16.mxu0 0
        %1227 = vmatmul.mubr.bf16.gmra.mrb[0].mxu0 %v1181
        %v1228 = vpop.f32.mrb[0].mxu0
        %v1229 = vadd.f32 0.0, %v1228
        %v1230 = vpop.f32.mrb[0].mxu0
        %v1231 = vpop.f32.mrb[0].mxu0
        %v1232 = vadd.f32 0.0, %v1231
        %v1233 = vpop.f32.mrb[0].mxu0
        %1234 = vdwg.mxu0
        %v1235 = vpack.c.bf16 %v1224, %v1221
        %v1236 = vpack.c.bf16 %v1232, %v1229
        %v1237 = vpack.c.bf16 %v345, %v344
        %v1238 = vpack.c.bf16 %v347, %v346
        %v1240 = vsel %vm437, %v1235, 0
        %v1243 = vsel %vm437, %v1236, 0
        %1245 = vmatprep.subr.bf16.mxu0 0
        %1246 = vmatpush1.bf16.msra.mxu0 %v1237
        %1247 = vmatprep.subr.bf16.mxu0 0
        %1248 = vmatpush1.bf16.msra.mxu0 %v1238
        %1249 = vmatprep.subr.bf16.mxu0 0
        %1250 = vmatpush1.bf16.msra.mxu0 0
        %1251 = vmatprep.subr.bf16.mxu0 0
        %1252 = vmatpush1.bf16.msra.mxu0 0
        %1253 = vmatprep.subr.bf16.mxu0 0
        %1254 = vmatpush1.bf16.msra.mxu0 0
        %1255 = vmatprep.subr.bf16.mxu0 0
        %1256 = vmatpush1.bf16.msra.mxu0 0
        %1257 = vmatprep.subr.bf16.mxu0 0
        %1258 = vmatpush1.bf16.msra.mxu0 0
        %1259 = vmatprep.subr.bf16.mxu0 0
        %1260 = vmatpush1.bf16.msra.mxu0 0
        %1261 = vmatprep.subr.bf16.mxu0 0
        %1262 = vmatpush1.bf16.msra.mxu0 0
        %1263 = vmatprep.subr.bf16.mxu0 0
        %1264 = vmatpush1.bf16.msra.mxu0 0
        %1265 = vmatprep.subr.bf16.mxu0 0
        %1266 = vmatpush1.bf16.msra.mxu0 0
        %1267 = vmatprep.subr.bf16.mxu0 0
        %1268 = vmatpush1.bf16.msra.mxu0 0
        %1269 = vmatprep.subr.bf16.mxu0 0
        %1270 = vmatpush1.bf16.msra.mxu0 0
        %1271 = vmatprep.subr.bf16.mxu0 0
        %1272 = vmatpush1.bf16.msra.mxu0 0
        %1273 = vmatprep.subr.bf16.mxu0 0
        %1274 = vmatpush1.bf16.msra.mxu0 0
        %1275 = vmatprep.subr.bf16.mxu0 0
        %1276 = vmatpush1.bf16.msra.mxu0 0
        %1277 = vmatprep.mubr.bf16.mxu0 0
        %1278 = vmatmul.mubr.bf16.gmra.mrb[0].mxu0 %v1240
        %v1279 = vpop.f32.mrb[0].mxu0
        %v1280 = vadd.f32 0.0, %v1279
        %v1281 = vpop.f32.mrb[0].mxu0
        %v1282 = vpop.f32.mrb[0].mxu0
        %v1283 = vadd.f32 0.0, %v1282
        %v1284 = vpop.f32.mrb[0].mxu0
        %1285 = vmatprep.mubr.bf16.mxu0 0
        %1286 = vmatmul.mubr.bf16.gmra.mrb[0].mxu0 %v1243
        %v1287 = vpop.f32.mrb[0].mxu0
        %v1288 = vadd.f32 0.0, %v1287
        %v1289 = vpop.f32.mrb[0].mxu0
        %v1290 = vpop.f32.mrb[0].mxu0
        %v1291 = vadd.f32 0.0, %v1290
        %v1292 = vpop.f32.mrb[0].mxu0
        %1293 = vdwg.mxu0
        %v1294 = vpack.c.bf16 %v1283, %v1280
        %v1295 = vpack.c.bf16 %v1291, %v1288
        %1298 = vrot.lane.b32.xlu0 %v1294, 120
        %v1299 = vpop.permute.xlu0 %1298
        %1300 = vrot.lane.b32.xlu0 %v1295, 120
        %v1301 = vpop.permute.xlu0 %1300
        %v1303 = vsel %vm546, %v1294, 0
        %v1306 = vsel %vm546, %v1295, 0
        %v1309 = vsel %vm546, %v1299, 0
        %v1312 = vsel %vm546, %v1301, 0
        %1314 = vmatprep.subr.bf16.mxu0 0
        %1315 = vmatpush1.bf16.xpose.msra.mxu0 %v1309
        %1316 = vmatprep.subr.bf16.mxu0 0
        %1317 = vmatpush1.bf16.xpose.msra.mxu0 %v1312
        %1318 = vmatprep.subr.bf16.mxu0 0
        %1319 = vmatpush1.bf16.xpose.msra.mxu0 0
        %1320 = vmatprep.subr.bf16.mxu0 0
        %1321 = vmatpush1.bf16.xpose.msra.mxu0 0
        %1322 = vmatprep.subr.bf16.mxu0 0
        %1323 = vmatpush1.bf16.xpose.msra.mxu0 0
        %1324 = vmatprep.subr.bf16.mxu0 0
        %1325 = vmatpush1.bf16.xpose.msra.mxu0 0
        %1326 = vmatprep.subr.bf16.mxu0 0
        %1327 = vmatpush1.bf16.xpose.msra.mxu0 0
        %1328 = vmatprep.subr.bf16.mxu0 0
        %1329 = vmatpush1.bf16.xpose.msra.mxu0 0
        %1330 = vmatprep.subr.bf16.mxu0 0
        %1331 = vmatpush1.bf16.xpose.msra.mxu0 0
        %1332 = vmatprep.subr.bf16.mxu0 0
        %1333 = vmatpush1.bf16.xpose.msra.mxu0 0
        %1334 = vmatprep.subr.bf16.mxu0 0
        %1335 = vmatpush1.bf16.xpose.msra.mxu0 0
        %1336 = vmatprep.subr.bf16.mxu0 0
        %1337 = vmatpush1.bf16.xpose.msra.mxu0 0
        %1338 = vmatprep.subr.bf16.mxu0 0
        %1339 = vmatpush1.bf16.xpose.msra.mxu0 0
        %1340 = vmatprep.subr.bf16.mxu0 0
        %1341 = vmatpush1.bf16.xpose.msra.mxu0 0
        %1342 = vmatprep.subr.bf16.mxu0 0
        %1343 = vmatpush1.bf16.xpose.msra.mxu0 0
        %1344 = vmatprep.subr.bf16.mxu0 0
        %1345 = vmatpush1.bf16.xpose.msra.mxu0 0
        %1346 = vmatprep.mubr.bf16.mxu0 0
        %1347 = vmatmul.mubr.bf16.gmra.mrb[0].mxu0 %v1303
        %v1348 = vpop.f32.mrb[0].mxu0
        %v1349 = vadd.f32 0.0, %v1348
        %v1350 = vpop.f32.mrb[0].mxu0
        %v1351 = vpop.f32.mrb[0].mxu0
        %v1352 = vadd.f32 0.0, %v1351
        %v1353 = vpop.f32.mrb[0].mxu0
        %1354 = vmatprep.mubr.bf16.mxu0 0
        %1355 = vmatmul.mubr.bf16.gmra.mrb[0].mxu0 %v1306
        %v1356 = vpop.f32.mrb[0].mxu0
        %v1357 = vadd.f32 0.0, %v1356
        %v1358 = vpop.f32.mrb[0].mxu0
        %v1359 = vpop.f32.mrb[0].mxu0
        %v1360 = vadd.f32 0.0, %v1359
        %v1361 = vpop.f32.mrb[0].mxu0
        %1362 = vdwg.mxu0
        %vm1363 = vcmask 228352
        %v1364 = vsel %vm1363, %v1349, -inf
        %1365 = vmax.xlane.f32.xlu0 %v1364
        %v1366 = vpop.xlane.xlu0 %1365
        %v1367 = vsel %vm1363, %v1352, -inf
        %1368 = vmax.xlane.f32.xlu0 %v1367
        %v1369 = vpop.xlane.xlu0 %1368
        %v1370 = vsel %vm1363, %v1357, -inf
        %1371 = vmax.xlane.f32.xlu0 %v1370
        %v1372 = vpop.xlane.xlu0 %1371
        %vm1373 = vcmask 224256
        %v1374 = vsel %vm1373, %v1360, -inf
        %1375 = vmax.xlane.f32.xlu0 %v1374
        %v1376 = vpop.xlane.xlu0 %1375
        %v1377 = vsub.f32 %v1349, %v1366
        %v1378 = vsub.f32 %v1352, %v1369
        %v1379 = vsub.f32 %v1357, %v1372
        %v1380 = vsub.f32 %v1360, %v1376
        %v1381 = vmul.f32 %v1377, 1.442695
        %v1382 = vpow.pop %v1381
        %v1383 = vmul.f32 %v1378, 1.442695
        %v1384 = vpow.pop %v1383
        %v1385 = vmul.f32 %v1379, 1.442695
        %v1386 = vpow.pop %v1385
        %v1387 = vmul.f32 %v1380, 1.442695
        %v1388 = vpow.pop %v1387
        %v1389 = vsel %vm1363, %v1382, 0.0
        %1390 = vadd.xlane.f32.xlu0 %v1389
        %v1391 = vpop.xlane.xlu0 %1390
        %v1392 = vsel %vm1363, %v1384, 0.0
        %1393 = vadd.xlane.f32.xlu0 %v1392
        %v1394 = vpop.xlane.xlu0 %1393
        %v1395 = vsel %vm1363, %v1386, 0.0
        %1396 = vadd.xlane.f32.xlu0 %v1395
        %v1397 = vpop.xlane.xlu0 %1396
        %v1398 = vsel %vm1373, %v1388, 0.0
        %1399 = vadd.xlane.f32.xlu0 %v1398
        %v1400 = vpop.xlane.xlu0 %1399
        %v1401 = vrcp.pop %v1391
        %v1402 = vmul.f32 %v1382, %v1401
        %v1403 = vrcp.pop %v1394
        %v1404 = vmul.f32 %v1384, %v1403
        %v1405 = vrcp.pop %v1397
        %v1406 = vmul.f32 %v1386, %v1405
        %v1407 = vrcp.pop %v1400
        %v1408 = vmul.f32 %v1388, %v1407
        %v1409 = vpack.c.bf16 %v1404, %v1402
        %v1410 = vpack.c.bf16 %v1408, %v1406
        %v1412 = vsel %vm1363, %v1409, 0
        %v1415 = vsel %vm1363, %v1410, 0
        %v1417 = vsel %vm782, %v1236, 0
        %1419 = vmatprep.subr.bf16.mxu0 0
        %1420 = vmatpush1.bf16.msra.mxu0 %v1235
        %1421 = vmatprep.subr.bf16.mxu0 0
        %1422 = vmatpush1.bf16.msra.mxu0 %v1417
        %1423 = vmatprep.subr.bf16.mxu0 0
        %1424 = vmatpush1.bf16.msra.mxu0 0
        %1425 = vmatprep.subr.bf16.mxu0 0
        %1426 = vmatpush1.bf16.msra.mxu0 0
        %1427 = vmatprep.subr.bf16.mxu0 0
        %1428 = vmatpush1.bf16.msra.mxu0 0
        %1429 = vmatprep.subr.bf16.mxu0 0
        %1430 = vmatpush1.bf16.msra.mxu0 0
        %1431 = vmatprep.subr.bf16.mxu0 0
        %1432 = vmatpush1.bf16.msra.mxu0 0
        %1433 = vmatprep.subr.bf16.mxu0 0
        %1434 = vmatpush1.bf16.msra.mxu0 0
        %1435 = vmatprep.subr.bf16.mxu0 0
        %1436 = vmatpush1.bf16.msra.mxu0 0
        %1437 = vmatprep.subr.bf16.mxu0 0
        %1438 = vmatpush1.bf16.msra.mxu0 0
        %1439 = vmatprep.subr.bf16.mxu0 0
        %1440 = vmatpush1.bf16.msra.mxu0 0
        %1441 = vmatprep.subr.bf16.mxu0 0
        %1442 = vmatpush1.bf16.msra.mxu0 0
        %1443 = vmatprep.subr.bf16.mxu0 0
        %1444 = vmatpush1.bf16.msra.mxu0 0
        %1445 = vmatprep.subr.bf16.mxu0 0
        %1446 = vmatpush1.bf16.msra.mxu0 0
        %1447 = vmatprep.subr.bf16.mxu0 0
        %1448 = vmatpush1.bf16.msra.mxu0 0
        %1449 = vmatprep.subr.bf16.mxu0 0
        %1450 = vmatpush1.bf16.msra.mxu0 0
        %1451 = vmatprep.mubr.bf16.mxu0 0
        %1452 = vmatmul.mubr.bf16.gmra.mrb[0].mxu0 %v1412
        %v1453 = vpop.f32.mrb[0].mxu0
        %v1454 = vadd.f32 0.0, %v1453
        %v1455 = vpop.f32.mrb[0].mxu0
        %v1456 = vpop.f32.mrb[0].mxu0
        %v1457 = vadd.f32 0.0, %v1456
        %v1458 = vpop.f32.mrb[0].mxu0
        %1459 = vmatprep.mubr.bf16.mxu0 0
        %1460 = vmatmul.mubr.bf16.gmra.mrb[0].mxu0 %v1415
        %v1461 = vpop.f32.mrb[0].mxu0
        %v1462 = vadd.f32 0.0, %v1461
        %v1463 = vpop.f32.mrb[0].mxu0
        %v1464 = vpop.f32.mrb[0].mxu0
        %v1465 = vadd.f32 0.0, %v1464
        %v1466 = vpop.f32.mrb[0].mxu0
        %1467 = vdwg.mxu0
        %1472 = vrot.lane.b32.xlu0 %v1454, 32
        %v1473 = vpop.permute.xlu0 %1472
        %1474 = vrot.lane.b32.xlu0 %v1457, 32
        %v1475 = vpop.permute.xlu0 %1474
        %1476 = vrot.lane.b32.xlu0 %v1462, 32
        %v1477 = vpop.permute.xlu0 %1476
        %1478 = vrot.lane.b32.xlu0 %v1465, 32
        %v1479 = vpop.permute.xlu0 %1478
        %v1484 = vsel %vm437, %v1221, %v1473
        %v1485 = vsel %vm437, %v1224, %v1475
        %v1486 = vsel %vm437, %v1229, %v1477
        %v1487 = vsel %vm437, %v1232, %v1479
        %v1488 = vpack.c.bf16 %v1485, %v1484
        %v1489 = vpack.c.bf16 %v1487, %v1486
        %v1490 = vpack.c.bf16 %v361, %v360
        %v1491 = vpack.c.bf16 %v363, %v362
        %v1492 = vpack.c.bf16 %v365, %v364
        %v1493 = vpack.c.bf16 %v367, %v366
        %v1495 = vsel %vm1029, %v1488, 0
        %v1498 = vsel %vm1029, %v1489, 0
        %1500 = vmatprep.subr.bf16.mxu0 0
        %1501 = vmatpush1.bf16.msra.mxu0 %v1490
        %1502 = vmatprep.subr.bf16.mxu0 0
        %1503 = vmatpush1.bf16.msra.mxu0 %v1491
        %1504 = vmatprep.subr.bf16.mxu0 0
        %1505 = vmatpush1.bf16.msra.mxu0 %v1492
        %1506 = vmatprep.subr.bf16.mxu0 0
        %1507 = vmatpush1.bf16.msra.mxu0 %v1493
        %1508 = vmatprep.subr.bf16.mxu0 0
        %1509 = vmatpush1.bf16.msra.mxu0 0
        %1510 = vmatprep.subr.bf16.mxu0 0
        %1511 = vmatpush1.bf16.msra.mxu0 0
        %1512 = vmatprep.subr.bf16.mxu0 0
        %1513 = vmatpush1.bf16.msra.mxu0 0
        %1514 = vmatprep.subr.bf16.mxu0 0
        %1515 = vmatpush1.bf16.msra.mxu0 0
        %1516 = vmatprep.subr.bf16.mxu0 0
        %1517 = vmatpush1.bf16.msra.mxu0 0
        %1518 = vmatprep.subr.bf16.mxu0 0
        %1519 = vmatpush1.bf16.msra.mxu0 0
        %1520 = vmatprep.subr.bf16.mxu0 0
        %1521 = vmatpush1.bf16.msra.mxu0 0
        %1522 = vmatprep.subr.bf16.mxu0 0
        %1523 = vmatpush1.bf16.msra.mxu0 0
        %1524 = vmatprep.subr.bf16.mxu0 0
        %1525 = vmatpush1.bf16.msra.mxu0 0
        %1526 = vmatprep.subr.bf16.mxu0 0
        %1527 = vmatpush1.bf16.msra.mxu0 0
        %1528 = vmatprep.subr.bf16.mxu0 0
        %1529 = vmatpush1.bf16.msra.mxu0 0
        %1530 = vmatprep.subr.bf16.mxu0 0
        %1531 = vmatpush1.bf16.msra.mxu0 0
        %1532 = vmatprep.mubr.bf16.mxu0 0
        %1533 = vmatmul.mubr.bf16.gmra.mrb[0].mxu0 %v1495
        %v1534 = vpop.f32.mrb[0].mxu0
        %v1535 = vadd.f32 0.0, %v1534
        %v1536 = vpop.f32.mrb[0].mxu0
        %v1537 = vpop.f32.mrb[0].mxu0
        %v1538 = vadd.f32 0.0, %v1537
        %v1539 = vpop.f32.mrb[0].mxu0
        %1540 = vmatprep.mubr.bf16.mxu0 0
        %1541 = vmatmul.mubr.bf16.gmra.mrb[0].mxu0 %v1498
        %v1542 = vpop.f32.mrb[0].mxu0
        %v1543 = vadd.f32 0.0, %v1542
        %v1544 = vpop.f32.mrb[0].mxu0
        %v1545 = vpop.f32.mrb[0].mxu0
        %v1546 = vadd.f32 0.0, %v1545
        %v1547 = vpop.f32.mrb[0].mxu0
        %1548 = vdwg.mxu0
        %v1549 = vmax.f32 %v1535, 0.0
        %v1550 = vmax.f32 %v1538, 0.0
        %v1551 = vmax.f32 %v1543, 0.0
        %v1552 = vmax.f32 %v1546, 0.0
        %v1553 = vpack.c.bf16 %v373, %v372
        %v1554 = vpack.c.bf16 %v375, %v374
        %v1555 = vpack.c.bf16 %v377, %v376
        %v1556 = vpack.c.bf16 %v379, %v378
        %v1557 = vpack.c.bf16 %v381, %v380
        %v1558 = vpack.c.bf16 %v1550, %v1549
        %v1559 = vpack.c.bf16 %v1552, %v1551
        %v1561 = vsel %vm1363, %v1553, 0
        %v1564 = vsel %vm1363, %v1554, 0
        %v1567 = vsel %vm1363, %v1555, 0
        %v1570 = vsel %vm1363, %v1556, 0
        %v1573 = vsel %vm1363, %v1557, 0
        %v1576 = vsel %vm782, %v1559, 0
        %1578 = vmatprep.subr.bf16.mxu0 0
        %1579 = vmatpush1.bf16.msra.mxu0 %v1558
        %1580 = vmatprep.subr.bf16.mxu0 0
        %1581 = vmatpush1.bf16.msra.mxu0 %v1576
        %1582 = vmatprep.subr.bf16.mxu0 0
        %1583 = vmatpush1.bf16.msra.mxu0 0
        %1584 = vmatprep.subr.bf16.mxu0 0
        %1585 = vmatpush1.bf16.msra.mxu0 0
        %1586 = vmatprep.subr.bf16.mxu0 0
        %1587 = vmatpush1.bf16.msra.mxu0 0
        %1588 = vmatprep.subr.bf16.mxu0 0
        %1589 = vmatpush1.bf16.msra.mxu0 0
        %1590 = vmatprep.subr.bf16.mxu0 0
        %1591 = vmatpush1.bf16.msra.mxu0 0
        %1592 = vmatprep.subr.bf16.mxu0 0
        %1593 = vmatpush1.bf16.msra.mxu0 0
        %1594 = vmatprep.subr.bf16.mxu0 0
        %1595 = vmatpush1.bf16.msra.mxu0 0
        %1596 = vmatprep.subr.bf16.mxu0 0
        %1597 = vmatpush1.bf16.msra.mxu0 0
        %1598 = vmatprep.subr.bf16.mxu0 0
        %1599 = vmatpush1.bf16.msra.mxu0 0
        %1600 = vmatprep.subr.bf16.mxu0 0
        %1601 = vmatpush1.bf16.msra.mxu0 0
        %1602 = vmatprep.subr.bf16.mxu0 0
        %1603 = vmatpush1.bf16.msra.mxu0 0
        %1604 = vmatprep.subr.bf16.mxu0 0
        %1605 = vmatpush1.bf16.msra.mxu0 0
        %1606 = vmatprep.subr.bf16.mxu0 0
        %1607 = vmatpush1.bf16.msra.mxu0 0
        %1608 = vmatprep.subr.bf16.mxu0 0
        %1609 = vmatpush1.bf16.msra.mxu0 0
        %1610 = vmatprep.mubr.bf16.mxu0 0
        %1611 = vmatmul.mubr.bf16.gmra.mrb[0].mxu0 %v1561
        %v1612 = vpop.f32.mrb[0].mxu0
        %v1613 = vadd.f32 0.0, %v1612
        %v1614 = vpop.f32.mrb[0].mxu0
        %v1615 = vpop.f32.mrb[0].mxu0
        %v1616 = vadd.f32 0.0, %v1615
        %v1617 = vpop.f32.mrb[0].mxu0
        %1618 = vmatprep.mubr.bf16.mxu0 0
        %1619 = vmatmul.mubr.bf16.gmra.mrb[0].mxu0 %v1564
        %v1620 = vpop.f32.mrb[0].mxu0
        %v1621 = vadd.f32 0.0, %v1620
        %v1622 = vpop.f32.mrb[0].mxu0
        %v1623 = vpop.f32.mrb[0].mxu0
        %v1624 = vadd.f32 0.0, %v1623
        %v1625 = vpop.f32.mrb[0].mxu0
        %1626 = vmatprep.mubr.bf16.mxu0 0
        %1627 = vmatmul.mubr.bf16.gmra.mrb[0].mxu0 %v1567
        %v1628 = vpop.f32.mrb[0].mxu0
        %v1629 = vadd.f32 0.0, %v1628
        %v1630 = vpop.f32.mrb[0].mxu0
        %v1631 = vpop.f32.mrb[0].mxu0
        %v1632 = vadd.f32 0.0, %v1631
        %v1633 = vpop.f32.mrb[0].mxu0
        %1634 = vmatprep.mubr.bf16.mxu0 0
        %1635 = vmatmul.mubr.bf16.gmra.mrb[0].mxu0 %v1570
        %v1636 = vpop.f32.mrb[0].mxu0
        %v1637 = vadd.f32 0.0, %v1636
        %v1638 = vpop.f32.mrb[0].mxu0
        %v1639 = vpop.f32.mrb[0].mxu0
        %v1640 = vadd.f32 0.0, %v1639
        %v1641 = vpop.f32.mrb[0].mxu0
        %1642 = vmatprep.mubr.bf16.mxu0 0
        %1643 = vmatmul.mubr.bf16.gmra.mrb[0].mxu0 %v1573
        %v1644 = vpop.f32.mrb[0].mxu0
        %v1645 = vadd.f32 0.0, %v1644
        %v1646 = vpop.f32.mrb[0].mxu0
        %v1647 = vpop.f32.mrb[0].mxu0
        %v1648 = vadd.f32 0.0, %v1647
        %v1649 = vpop.f32.mrb[0].mxu0
        %1650 = vdwg.mxu0
        %v1651 = vadd.f32 %v1140, %v1613
        %v1652 = vadd.f32 %v1141, %v1616
        %v1653 = vadd.f32 %v1142, %v1621
        %v1654 = vadd.f32 %v1143, %v1624
        %v1655 = vadd.f32 %v1144, %v1629
        %v1656 = vadd.f32 %v1145, %v1632
        %v1657 = vadd.f32 %v1146, %v1637
        %v1658 = vadd.f32 %v1147, %v1640
        %v1659 = vadd.f32 %v1148, %v1645
        %v1660 = vadd.f32 %v1149, %v1648
        %vm1664 = vcmask 1044480
        %v1665 = vrot.slane %v1653, 3
        %v1666 = vrot.slane %v1654, 3
        %v1667 = vsel %vm1664, %v1665, %v1666
        %v1668 = vrot.slane %v1655, 3
        %v1669 = vsel %vm1664, %v1666, %v1668
        %v1673 = vadd.f32 %v1651, %v1667
        %v1674 = vadd.f32 %v1652, %v1669
        %v1675 = vadd.f32 %v1653, %v1668
        %vm1679 = vcmask 1041408
        %v1680 = vrot.slane %v1655, 6
        %v1681 = vrot.slane %v1656, 6
        %v1682 = vsel %vm1679, %v1680, %v1681
        %v1683 = vrot.slane %v1657, 6
        %v1684 = vsel %vm1679, %v1681, %v1683
        %v1685 = vrot.slane %v1658, 6
        %v1686 = vsel %vm1679, %v1683, %v1685
        %v1690 = vadd.f32 %v1673, %v1682
        %v1691 = vadd.f32 %v1674, %v1684
        %v1692 = vadd.f32 %v1675, %v1686
        %vm1695 = vcmask 1046528
        %v1696 = vrot.slane %v1658, 1
        %v1697 = vrot.slane %v1659, 1
        %v1698 = vsel %vm1695, %v1696, %v1697
        %v1699 = vrot.slane %v1660, 1
        %v1700 = vsel %vm1695, %v1697, %v1699
        %v1704 = vadd.f32 %v1690, %v1698
        %v1705 = vadd.f32 %v1691, %v1700
        %v1706 = vadd.f32 %v1692, %v1699
        %v1707 = vmul.f32 %v1704, 0.25
        %v1708 = vmul.f32 %v1705, 0.25
        %v1709 = vmul.f32 %v1706, 0.25
        %1710 = vst.msk [vmem:[%s333] sm:$0xff] %vm546, %v1707
        %1711 = vst.msk [vmem:[%s333 + $0x8] sm:$0xff] %vm546, %v1708
        %vm1712 = vcmask 59392
        %1713 = vst.msk [vmem:[%s333 + $0x10] sm:$0x7] %vm1712, %v1709
        %1714 = vst.msk [vmem:[%s313] sm:$0xff] %vm650, %v743
        %1715 = vst.msk [vmem:[%s313 + $0x8] sm:$0xff] %vm650, %v745
        %1716 = vst.msk [vmem:[%s313 + $0x10] sm:$0xff] %vm650, %v747
        %1717 = vst.msk [vmem:[%s313 + $0x18] sm:$0xff] %vm650, %v749
        %1718 = vst.msk [vmem:[%s313 + $0x20] sm:$0xff] %vm650, %v751
        %1719 = vst.msk [vmem:[%s313 + $0x28] sm:$0xff] %vm650, %v753
        %1720 = vst.msk [vmem:[%s313 + $0x30] sm:$0xff] %vm650, %v755
        %1721 = vst.msk [vmem:[%s313 + $0x38] sm:$0xff] %vm650, %v757
        %1722 = vst.msk [vmem:[%s313 + $0x40] sm:$0xff] %vm650, %v759
        %1723 = vst.msk [vmem:[%s313 + $0x48] sm:$0xf] %vm678, %v761
        %1724 = vst.msk [vmem:[%s320] sm:$0xff] %vm1363, %v1402
        %1725 = vst.msk [vmem:[%s320 + $0x8] sm:$0xff] %vm1363, %v1404
        %1726 = vst.msk [vmem:[%s320 + $0x10] sm:$0xff] %vm1363, %v1406
        %1727 = vst.msk [vmem:[%s320 + $0x18] sm:$0xf] %vm1373, %v1408
        %s1728 = scalar_lea.vmem %s326, 80
        %v1729 = vld [vmem:[%s1728] sm:$0xff]
        %v1730 = vld [vmem:[%s1728 + $0x8] sm:$0xff]
        %v1731 = vld [vmem:[%s1728 + $0x10] sm:$0xff]
        %v1732 = vld [vmem:[%s1728 + $0x18] sm:$0xff]
        %v1733 = vld [vmem:[%s1728 + $0x20] sm:$0xff]
        %v1734 = vld [vmem:[%s1728 + $0x28] sm:$0xff]
        %v1735 = vld [vmem:[%s1728 + $0x30] sm:$0xff]
        %v1736 = vld [vmem:[%s1728 + $0x38] sm:$0xff]
        %v1737 = vld [vmem:[%s1728 + $0x40] sm:$0xff]
        %v1738 = vld [vmem:[%s1728 + $0x48] sm:$0xf]
        %v1739 = vsub.f32 %v1729, %v405
        %v1740 = vsub.f32 %v1730, %v405
        %v1741 = vsub.f32 %v1731, %v405
        %v1742 = vsub.f32 %v1732, %v405
        %v1743 = vsub.f32 %v1733, %v405
        %v1744 = vsub.f32 %v1734, %v405
        %v1745 = vsub.f32 %v1735, %v405
        %v1746 = vsub.f32 %v1736, %v405
        %v1747 = vsub.f32 %v1737, %v405
        %v1748 = vsub.f32 %v1738, %v405
        %v1749 = vmul.f32 %v1739, %v419
        %v1750 = vmul.f32 %v1740, %v419
        %v1751 = vmul.f32 %v1741, %v419
        %v1752 = vmul.f32 %v1742, %v419
        %v1753 = vmul.f32 %v1743, %v419
        %v1754 = vmul.f32 %v1744, %v419
        %v1755 = vmul.f32 %v1745, %v419
        %v1756 = vmul.f32 %v1746, %v419
        %v1757 = vmul.f32 %v1747, %v419
        %v1758 = vmul.f32 %v1748, %v419
        %v1759 = vpack.c.bf16 %v1750, %v1749
        %v1760 = vpack.c.bf16 %v1752, %v1751
        %v1761 = vpack.c.bf16 %v1754, %v1753
        %v1762 = vpack.c.bf16 %v1756, %v1755
        %v1763 = vpack.c.bf16 %v1758, %v1757
        %v1765 = vsel %vm437, %v1759, 0
        %v1768 = vsel %vm437, %v1760, 0
        %v1771 = vsel %vm437, %v1761, 0
        %v1774 = vsel %vm437, %v1762, 0
        %v1777 = vsel %vm437, %v1763, 0
        %1779 = vmatprep.subr.bf16.mxu0 0
        %1780 = vmatpush1.bf16.msra.mxu0 %v435
        %1781 = vmatprep.subr.bf16.mxu0 0
        %1782 = vmatpush1.bf16.msra.mxu0 %v436
        %1783 = vmatprep.subr.bf16.mxu0 0
        %1784 = vmatpush1.bf16.msra.mxu0 0
        %1785 = vmatprep.subr.bf16.mxu0 0
        %1786 = vmatpush1.bf16.msra.mxu0 0
        %1787 = vmatprep.subr.bf16.mxu0 0
        %1788 = vmatpush1.bf16.msra.mxu0 0
        %1789 = vmatprep.subr.bf16.mxu0 0
        %1790 = vmatpush1.bf16.msra.mxu0 0
        %1791 = vmatprep.subr.bf16.mxu0 0
        %1792 = vmatpush1.bf16.msra.mxu0 0
        %1793 = vmatprep.subr.bf16.mxu0 0
        %1794 = vmatpush1.bf16.msra.mxu0 0
        %1795 = vmatprep.subr.bf16.mxu0 0
        %1796 = vmatpush1.bf16.msra.mxu0 0
        %1797 = vmatprep.subr.bf16.mxu0 0
        %1798 = vmatpush1.bf16.msra.mxu0 0
        %1799 = vmatprep.subr.bf16.mxu0 0
        %1800 = vmatpush1.bf16.msra.mxu0 0
        %1801 = vmatprep.subr.bf16.mxu0 0
        %1802 = vmatpush1.bf16.msra.mxu0 0
        %1803 = vmatprep.subr.bf16.mxu0 0
        %1804 = vmatpush1.bf16.msra.mxu0 0
        %1805 = vmatprep.subr.bf16.mxu0 0
        %1806 = vmatpush1.bf16.msra.mxu0 0
        %1807 = vmatprep.subr.bf16.mxu0 0
        %1808 = vmatpush1.bf16.msra.mxu0 0
        %1809 = vmatprep.subr.bf16.mxu0 0
        %1810 = vmatpush1.bf16.msra.mxu0 0
        %1811 = vmatprep.mubr.bf16.mxu0 0
        %1812 = vmatmul.mubr.bf16.gmra.mrb[0].mxu0 %v1765
        %v1813 = vpop.f32.mrb[0].mxu0
        %v1814 = vadd.f32 0.0, %v1813
        %v1815 = vpop.f32.mrb[0].mxu0
        %v1816 = vpop.f32.mrb[0].mxu0
        %v1817 = vadd.f32 0.0, %v1816
        %v1818 = vpop.f32.mrb[0].mxu0
        %1819 = vmatprep.mubr.bf16.mxu0 0
        %1820 = vmatmul.mubr.bf16.gmra.mrb[0].mxu0 %v1768
        %v1821 = vpop.f32.mrb[0].mxu0
        %v1822 = vadd.f32 0.0, %v1821
        %v1823 = vpop.f32.mrb[0].mxu0
        %v1824 = vpop.f32.mrb[0].mxu0
        %v1825 = vadd.f32 0.0, %v1824
        %v1826 = vpop.f32.mrb[0].mxu0
        %1827 = vmatprep.mubr.bf16.mxu0 0
        %1828 = vmatmul.mubr.bf16.gmra.mrb[0].mxu0 %v1771
        %v1829 = vpop.f32.mrb[0].mxu0
        %v1830 = vadd.f32 0.0, %v1829
        %v1831 = vpop.f32.mrb[0].mxu0
        %v1832 = vpop.f32.mrb[0].mxu0
        %v1833 = vadd.f32 0.0, %v1832
        %v1834 = vpop.f32.mrb[0].mxu0
        %1835 = vmatprep.mubr.bf16.mxu0 0
        %1836 = vmatmul.mubr.bf16.gmra.mrb[0].mxu0 %v1774
        %v1837 = vpop.f32.mrb[0].mxu0
        %v1838 = vadd.f32 0.0, %v1837
        %v1839 = vpop.f32.mrb[0].mxu0
        %v1840 = vpop.f32.mrb[0].mxu0
        %v1841 = vadd.f32 0.0, %v1840
        %v1842 = vpop.f32.mrb[0].mxu0
        %1843 = vmatprep.mubr.bf16.mxu0 0
        %1844 = vmatmul.mubr.bf16.gmra.mrb[0].mxu0 %v1777
        %v1845 = vpop.f32.mrb[0].mxu0
        %v1846 = vadd.f32 0.0, %v1845
        %v1847 = vpop.f32.mrb[0].mxu0
        %v1848 = vpop.f32.mrb[0].mxu0
        %v1849 = vadd.f32 0.0, %v1848
        %v1850 = vpop.f32.mrb[0].mxu0
        %1851 = vdwg.mxu0
        %v1852 = vpack.c.bf16 %v1817, %v1814
        %v1853 = vpack.c.bf16 %v1825, %v1822
        %v1854 = vpack.c.bf16 %v1833, %v1830
        %v1855 = vpack.c.bf16 %v1841, %v1838
        %v1856 = vpack.c.bf16 %v1849, %v1846
        %1862 = vrot.lane.b32.xlu0 %v1852, 120
        %v1863 = vpop.permute.xlu0 %1862
        %1864 = vrot.lane.b32.xlu0 %v1853, 120
        %v1865 = vpop.permute.xlu0 %1864
        %1866 = vrot.lane.b32.xlu0 %v1854, 120
        %v1867 = vpop.permute.xlu0 %1866
        %1868 = vrot.lane.b32.xlu0 %v1855, 120
        %v1869 = vpop.permute.xlu0 %1868
        %1870 = vrot.lane.b32.xlu0 %v1856, 120
        %v1871 = vpop.permute.xlu0 %1870
        %v1873 = vsel %vm546, %v1852, 0
        %v1876 = vsel %vm546, %v1853, 0
        %v1879 = vsel %vm546, %v1854, 0
        %v1882 = vsel %vm546, %v1855, 0
        %v1885 = vsel %vm546, %v1856, 0
        %v1888 = vsel %vm546, %v1863, 0
        %v1891 = vsel %vm546, %v1865, 0
        %v1894 = vsel %vm546, %v1867, 0
        %v1897 = vsel %vm546, %v1869, 0
        %v1900 = vsel %vm546, %v1871, 0
        %1902 = vmatprep.subr.bf16.mxu0 0
        %1903 = vmatpush1.bf16.xpose.msra.mxu0 %v1888
        %1904 = vmatprep.subr.bf16.mxu0 0
        %1905 = vmatpush1.bf16.xpose.msra.mxu0 %v1891
        %1906 = vmatprep.subr.bf16.mxu0 0
        %1907 = vmatpush1.bf16.xpose.msra.mxu0 %v1894
        %1908 = vmatprep.subr.bf16.mxu0 0
        %1909 = vmatpush1.bf16.xpose.msra.mxu0 %v1897
        %1910 = vmatprep.subr.bf16.mxu0 0
        %1911 = vmatpush1.bf16.xpose.msra.mxu0 %v1900
        %1912 = vmatprep.subr.bf16.mxu0 0
        %1913 = vmatpush1.bf16.xpose.msra.mxu0 0
        %1914 = vmatprep.subr.bf16.mxu0 0
        %1915 = vmatpush1.bf16.xpose.msra.mxu0 0
        %1916 = vmatprep.subr.bf16.mxu0 0
        %1917 = vmatpush1.bf16.xpose.msra.mxu0 0
        %1918 = vmatprep.subr.bf16.mxu0 0
        %1919 = vmatpush1.bf16.xpose.msra.mxu0 0
        %1920 = vmatprep.subr.bf16.mxu0 0
        %1921 = vmatpush1.bf16.xpose.msra.mxu0 0
        %1922 = vmatprep.subr.bf16.mxu0 0
        %1923 = vmatpush1.bf16.xpose.msra.mxu0 0
        %1924 = vmatprep.subr.bf16.mxu0 0
        %1925 = vmatpush1.bf16.xpose.msra.mxu0 0
        %1926 = vmatprep.subr.bf16.mxu0 0
        %1927 = vmatpush1.bf16.xpose.msra.mxu0 0
        %1928 = vmatprep.subr.bf16.mxu0 0
        %1929 = vmatpush1.bf16.xpose.msra.mxu0 0
        %1930 = vmatprep.subr.bf16.mxu0 0
        %1931 = vmatpush1.bf16.xpose.msra.mxu0 0
        %1932 = vmatprep.subr.bf16.mxu0 0
        %1933 = vmatpush1.bf16.xpose.msra.mxu0 0
        %1934 = vmatprep.mubr.bf16.mxu0 0
        %1935 = vmatmul.mubr.bf16.gmra.mrb[0].mxu0 %v1873
        %v1936 = vpop.f32.mrb[0].mxu0
        %v1937 = vadd.f32 0.0, %v1936
        %v1938 = vpop.f32.mrb[0].mxu0
        %v1939 = vpop.f32.mrb[0].mxu0
        %v1940 = vadd.f32 0.0, %v1939
        %v1941 = vpop.f32.mrb[0].mxu0
        %1942 = vmatprep.mubr.bf16.mxu0 0
        %1943 = vmatmul.mubr.bf16.gmra.mrb[0].mxu0 %v1876
        %v1944 = vpop.f32.mrb[0].mxu0
        %v1945 = vadd.f32 0.0, %v1944
        %v1946 = vpop.f32.mrb[0].mxu0
        %v1947 = vpop.f32.mrb[0].mxu0
        %v1948 = vadd.f32 0.0, %v1947
        %v1949 = vpop.f32.mrb[0].mxu0
        %1950 = vmatprep.mubr.bf16.mxu0 0
        %1951 = vmatmul.mubr.bf16.gmra.mrb[0].mxu0 %v1879
        %v1952 = vpop.f32.mrb[0].mxu0
        %v1953 = vadd.f32 0.0, %v1952
        %v1954 = vpop.f32.mrb[0].mxu0
        %v1955 = vpop.f32.mrb[0].mxu0
        %v1956 = vadd.f32 0.0, %v1955
        %v1957 = vpop.f32.mrb[0].mxu0
        %1958 = vmatprep.mubr.bf16.mxu0 0
        %1959 = vmatmul.mubr.bf16.gmra.mrb[0].mxu0 %v1882
        %v1960 = vpop.f32.mrb[0].mxu0
        %v1961 = vadd.f32 0.0, %v1960
        %v1962 = vpop.f32.mrb[0].mxu0
        %v1963 = vpop.f32.mrb[0].mxu0
        %v1964 = vadd.f32 0.0, %v1963
        %v1965 = vpop.f32.mrb[0].mxu0
        %1966 = vmatprep.mubr.bf16.mxu0 0
        %1967 = vmatmul.mubr.bf16.gmra.mrb[0].mxu0 %v1885
        %v1968 = vpop.f32.mrb[0].mxu0
        %v1969 = vadd.f32 0.0, %v1968
        %v1970 = vpop.f32.mrb[0].mxu0
        %v1971 = vpop.f32.mrb[0].mxu0
        %v1972 = vadd.f32 0.0, %v1971
        %v1973 = vpop.f32.mrb[0].mxu0
        %1974 = vdwg.mxu0
        %v1975 = vsel %vm650, %v1937, -inf
        %1976 = vmax.xlane.f32.xlu0 %v1975
        %v1977 = vpop.xlane.xlu0 %1976
        %v1978 = vsel %vm650, %v1940, -inf
        %1979 = vmax.xlane.f32.xlu0 %v1978
        %v1980 = vpop.xlane.xlu0 %1979
        %v1981 = vsel %vm650, %v1945, -inf
        %1982 = vmax.xlane.f32.xlu0 %v1981
        %v1983 = vpop.xlane.xlu0 %1982
        %v1984 = vsel %vm650, %v1948, -inf
        %1985 = vmax.xlane.f32.xlu0 %v1984
        %v1986 = vpop.xlane.xlu0 %1985
        %v1987 = vsel %vm650, %v1953, -inf
        %1988 = vmax.xlane.f32.xlu0 %v1987
        %v1989 = vpop.xlane.xlu0 %1988
        %v1990 = vsel %vm650, %v1956, -inf
        %1991 = vmax.xlane.f32.xlu0 %v1990
        %v1992 = vpop.xlane.xlu0 %1991
        %v1993 = vsel %vm650, %v1961, -inf
        %1994 = vmax.xlane.f32.xlu0 %v1993
        %v1995 = vpop.xlane.xlu0 %1994
        %v1996 = vsel %vm650, %v1964, -inf
        %1997 = vmax.xlane.f32.xlu0 %v1996
        %v1998 = vpop.xlane.xlu0 %1997
        %v1999 = vsel %vm650, %v1969, -inf
        %2000 = vmax.xlane.f32.xlu0 %v1999
        %v2001 = vpop.xlane.xlu0 %2000
        %v2002 = vsel %vm678, %v1972, -inf
        %2003 = vmax.xlane.f32.xlu0 %v2002
        %v2004 = vpop.xlane.xlu0 %2003
        %v2005 = vsub.f32 %v1937, %v1977
        %v2006 = vsub.f32 %v1940, %v1980
        %v2007 = vsub.f32 %v1945, %v1983
        %v2008 = vsub.f32 %v1948, %v1986
        %v2009 = vsub.f32 %v1953, %v1989
        %v2010 = vsub.f32 %v1956, %v1992
        %v2011 = vsub.f32 %v1961, %v1995
        %v2012 = vsub.f32 %v1964, %v1998
        %v2013 = vsub.f32 %v1969, %v2001
        %v2014 = vsub.f32 %v1972, %v2004
        %v2015 = vmul.f32 %v2005, 1.442695
        %v2016 = vpow.pop %v2015
        %v2017 = vmul.f32 %v2006, 1.442695
        %v2018 = vpow.pop %v2017
        %v2019 = vmul.f32 %v2007, 1.442695
        %v2020 = vpow.pop %v2019
        %v2021 = vmul.f32 %v2008, 1.442695
        %v2022 = vpow.pop %v2021
        %v2023 = vmul.f32 %v2009, 1.442695
        %v2024 = vpow.pop %v2023
        %v2025 = vmul.f32 %v2010, 1.442695
        %v2026 = vpow.pop %v2025
        %v2027 = vmul.f32 %v2011, 1.442695
        %v2028 = vpow.pop %v2027
        %v2029 = vmul.f32 %v2012, 1.442695
        %v2030 = vpow.pop %v2029
        %v2031 = vmul.f32 %v2013, 1.442695
        %v2032 = vpow.pop %v2031
        %v2033 = vmul.f32 %v2014, 1.442695
        %v2034 = vpow.pop %v2033
        %v2035 = vsel %vm650, %v2016, 0.0
        %2036 = vadd.xlane.f32.xlu0 %v2035
        %v2037 = vpop.xlane.xlu0 %2036
        %v2038 = vsel %vm650, %v2018, 0.0
        %2039 = vadd.xlane.f32.xlu0 %v2038
        %v2040 = vpop.xlane.xlu0 %2039
        %v2041 = vsel %vm650, %v2020, 0.0
        %2042 = vadd.xlane.f32.xlu0 %v2041
        %v2043 = vpop.xlane.xlu0 %2042
        %v2044 = vsel %vm650, %v2022, 0.0
        %2045 = vadd.xlane.f32.xlu0 %v2044
        %v2046 = vpop.xlane.xlu0 %2045
        %v2047 = vsel %vm650, %v2024, 0.0
        %2048 = vadd.xlane.f32.xlu0 %v2047
        %v2049 = vpop.xlane.xlu0 %2048
        %v2050 = vsel %vm650, %v2026, 0.0
        %2051 = vadd.xlane.f32.xlu0 %v2050
        %v2052 = vpop.xlane.xlu0 %2051
        %v2053 = vsel %vm650, %v2028, 0.0
        %2054 = vadd.xlane.f32.xlu0 %v2053
        %v2055 = vpop.xlane.xlu0 %2054
        %v2056 = vsel %vm650, %v2030, 0.0
        %2057 = vadd.xlane.f32.xlu0 %v2056
        %v2058 = vpop.xlane.xlu0 %2057
        %v2059 = vsel %vm650, %v2032, 0.0
        %2060 = vadd.xlane.f32.xlu0 %v2059
        %v2061 = vpop.xlane.xlu0 %2060
        %v2062 = vsel %vm678, %v2034, 0.0
        %2063 = vadd.xlane.f32.xlu0 %v2062
        %v2064 = vpop.xlane.xlu0 %2063
        %v2065 = vrcp.pop %v2037
        %v2066 = vmul.f32 %v2016, %v2065
        %v2067 = vrcp.pop %v2040
        %v2068 = vmul.f32 %v2018, %v2067
        %v2069 = vrcp.pop %v2043
        %v2070 = vmul.f32 %v2020, %v2069
        %v2071 = vrcp.pop %v2046
        %v2072 = vmul.f32 %v2022, %v2071
        %v2073 = vrcp.pop %v2049
        %v2074 = vmul.f32 %v2024, %v2073
        %v2075 = vrcp.pop %v2052
        %v2076 = vmul.f32 %v2026, %v2075
        %v2077 = vrcp.pop %v2055
        %v2078 = vmul.f32 %v2028, %v2077
        %v2079 = vrcp.pop %v2058
        %v2080 = vmul.f32 %v2030, %v2079
        %v2081 = vrcp.pop %v2061
        %v2082 = vmul.f32 %v2032, %v2081
        %v2083 = vrcp.pop %v2064
        %v2084 = vmul.f32 %v2034, %v2083
        %v2085 = vpack.c.bf16 %v2068, %v2066
        %v2086 = vpack.c.bf16 %v2072, %v2070
        %v2087 = vpack.c.bf16 %v2076, %v2074
        %v2088 = vpack.c.bf16 %v2080, %v2078
        %v2089 = vpack.c.bf16 %v2084, %v2082
        %v2091 = vsel %vm650, %v2085, 0
        %v2094 = vsel %vm650, %v2086, 0
        %v2097 = vsel %vm650, %v2087, 0
        %v2100 = vsel %vm650, %v2088, 0
        %v2103 = vsel %vm650, %v2089, 0
        %v2105 = vsel %vm782, %v1763, 0
        %2107 = vmatprep.subr.bf16.mxu0 0
        %2108 = vmatpush1.bf16.msra.mxu0 %v1759
        %2109 = vmatprep.subr.bf16.mxu0 0
        %2110 = vmatpush1.bf16.msra.mxu0 %v1760
        %2111 = vmatprep.subr.bf16.mxu0 0
        %2112 = vmatpush1.bf16.msra.mxu0 %v1761
        %2113 = vmatprep.subr.bf16.mxu0 0
        %2114 = vmatpush1.bf16.msra.mxu0 %v1762
        %2115 = vmatprep.subr.bf16.mxu0 0
        %2116 = vmatpush1.bf16.msra.mxu0 %v2105
        %2117 = vmatprep.subr.bf16.mxu0 0
        %2118 = vmatpush1.bf16.msra.mxu0 0
        %2119 = vmatprep.subr.bf16.mxu0 0
        %2120 = vmatpush1.bf16.msra.mxu0 0
        %2121 = vmatprep.subr.bf16.mxu0 0
        %2122 = vmatpush1.bf16.msra.mxu0 0
        %2123 = vmatprep.subr.bf16.mxu0 0
        %2124 = vmatpush1.bf16.msra.mxu0 0
        %2125 = vmatprep.subr.bf16.mxu0 0
        %2126 = vmatpush1.bf16.msra.mxu0 0
        %2127 = vmatprep.subr.bf16.mxu0 0
        %2128 = vmatpush1.bf16.msra.mxu0 0
        %2129 = vmatprep.subr.bf16.mxu0 0
        %2130 = vmatpush1.bf16.msra.mxu0 0
        %2131 = vmatprep.subr.bf16.mxu0 0
        %2132 = vmatpush1.bf16.msra.mxu0 0
        %2133 = vmatprep.subr.bf16.mxu0 0
        %2134 = vmatpush1.bf16.msra.mxu0 0
        %2135 = vmatprep.subr.bf16.mxu0 0
        %2136 = vmatpush1.bf16.msra.mxu0 0
        %2137 = vmatprep.subr.bf16.mxu0 0
        %2138 = vmatpush1.bf16.msra.mxu0 0
        %2139 = vmatprep.mubr.bf16.mxu0 0
        %2140 = vmatmul.mubr.bf16.gmra.mrb[0].mxu0 %v2091
        %v2141 = vpop.f32.mrb[0].mxu0
        %v2142 = vadd.f32 0.0, %v2141
        %v2143 = vpop.f32.mrb[0].mxu0
        %v2144 = vpop.f32.mrb[0].mxu0
        %v2145 = vadd.f32 0.0, %v2144
        %v2146 = vpop.f32.mrb[0].mxu0
        %2147 = vmatprep.mubr.bf16.mxu0 0
        %2148 = vmatmul.mubr.bf16.gmra.mrb[0].mxu0 %v2094
        %v2149 = vpop.f32.mrb[0].mxu0
        %v2150 = vadd.f32 0.0, %v2149
        %v2151 = vpop.f32.mrb[0].mxu0
        %v2152 = vpop.f32.mrb[0].mxu0
        %v2153 = vadd.f32 0.0, %v2152
        %v2154 = vpop.f32.mrb[0].mxu0
        %2155 = vmatprep.mubr.bf16.mxu0 0
        %2156 = vmatmul.mubr.bf16.gmra.mrb[0].mxu0 %v2097
        %v2157 = vpop.f32.mrb[0].mxu0
        %v2158 = vadd.f32 0.0, %v2157
        %v2159 = vpop.f32.mrb[0].mxu0
        %v2160 = vpop.f32.mrb[0].mxu0
        %v2161 = vadd.f32 0.0, %v2160
        %v2162 = vpop.f32.mrb[0].mxu0
        %2163 = vmatprep.mubr.bf16.mxu0 0
        %2164 = vmatmul.mubr.bf16.gmra.mrb[0].mxu0 %v2100
        %v2165 = vpop.f32.mrb[0].mxu0
        %v2166 = vadd.f32 0.0, %v2165
        %v2167 = vpop.f32.mrb[0].mxu0
        %v2168 = vpop.f32.mrb[0].mxu0
        %v2169 = vadd.f32 0.0, %v2168
        %v2170 = vpop.f32.mrb[0].mxu0
        %2171 = vmatprep.mubr.bf16.mxu0 0
        %2172 = vmatmul.mubr.bf16.gmra.mrb[0].mxu0 %v2103
        %v2173 = vpop.f32.mrb[0].mxu0
        %v2174 = vadd.f32 0.0, %v2173
        %v2175 = vpop.f32.mrb[0].mxu0
        %v2176 = vpop.f32.mrb[0].mxu0
        %v2177 = vadd.f32 0.0, %v2176
        %v2178 = vpop.f32.mrb[0].mxu0
        %2179 = vdwg.mxu0
        %v2180 = vpack.c.bf16 %v2145, %v2142
        %v2181 = vpack.c.bf16 %v2153, %v2150
        %v2182 = vpack.c.bf16 %v2161, %v2158
        %v2183 = vpack.c.bf16 %v2169, %v2166
        %v2184 = vpack.c.bf16 %v2177, %v2174
        %v2186 = vsel %vm782, %v2184, 0
        %2188 = vmatprep.subr.bf16.mxu0 0
        %2189 = vmatpush1.bf16.msra.mxu0 %v2180
        %2190 = vmatprep.subr.bf16.mxu0 0
        %2191 = vmatpush1.bf16.msra.mxu0 %v2181
        %2192 = vmatprep.subr.bf16.mxu0 0
        %2193 = vmatpush1.bf16.msra.mxu0 %v2182
        %2194 = vmatprep.subr.bf16.mxu0 0
        %2195 = vmatpush1.bf16.msra.mxu0 %v2183
        %2196 = vmatprep.subr.bf16.mxu0 0
        %2197 = vmatpush1.bf16.msra.mxu0 %v2186
        %2198 = vmatprep.subr.bf16.mxu0 0
        %2199 = vmatpush1.bf16.msra.mxu0 0
        %2200 = vmatprep.subr.bf16.mxu0 0
        %2201 = vmatpush1.bf16.msra.mxu0 0
        %2202 = vmatprep.subr.bf16.mxu0 0
        %2203 = vmatpush1.bf16.msra.mxu0 0
        %2204 = vmatprep.subr.bf16.mxu0 0
        %2205 = vmatpush1.bf16.msra.mxu0 0
        %2206 = vmatprep.subr.bf16.mxu0 0
        %2207 = vmatpush1.bf16.msra.mxu0 0
        %2208 = vmatprep.subr.bf16.mxu0 0
        %2209 = vmatpush1.bf16.msra.mxu0 0
        %2210 = vmatprep.subr.bf16.mxu0 0
        %2211 = vmatpush1.bf16.msra.mxu0 0
        %2212 = vmatprep.subr.bf16.mxu0 0
        %2213 = vmatpush1.bf16.msra.mxu0 0
        %2214 = vmatprep.subr.bf16.mxu0 0
        %2215 = vmatpush1.bf16.msra.mxu0 0
        %2216 = vmatprep.subr.bf16.mxu0 0
        %2217 = vmatpush1.bf16.msra.mxu0 0
        %2218 = vmatprep.subr.bf16.mxu0 0
        %2219 = vmatpush1.bf16.msra.mxu0 0
        %2220 = vmatprep.mubr.bf16.mxu0 0
        %2221 = vmatmul.mubr.bf16.gmra.mrb[0].mxu0 %v2091
        %v2222 = vpop.f32.mrb[0].mxu0
        %v2223 = vadd.f32 0.0, %v2222
        %v2224 = vpop.f32.mrb[0].mxu0
        %v2225 = vpop.f32.mrb[0].mxu0
        %v2226 = vadd.f32 0.0, %v2225
        %v2227 = vpop.f32.mrb[0].mxu0
        %2228 = vmatprep.mubr.bf16.mxu0 0
        %2229 = vmatmul.mubr.bf16.gmra.mrb[0].mxu0 %v2094
        %v2230 = vpop.f32.mrb[0].mxu0
        %v2231 = vadd.f32 0.0, %v2230
        %v2232 = vpop.f32.mrb[0].mxu0
        %v2233 = vpop.f32.mrb[0].mxu0
        %v2234 = vadd.f32 0.0, %v2233
        %v2235 = vpop.f32.mrb[0].mxu0
        %2236 = vmatprep.mubr.bf16.mxu0 0
        %2237 = vmatmul.mubr.bf16.gmra.mrb[0].mxu0 %v2097
        %v2238 = vpop.f32.mrb[0].mxu0
        %v2239 = vadd.f32 0.0, %v2238
        %v2240 = vpop.f32.mrb[0].mxu0
        %v2241 = vpop.f32.mrb[0].mxu0
        %v2242 = vadd.f32 0.0, %v2241
        %v2243 = vpop.f32.mrb[0].mxu0
        %2244 = vmatprep.mubr.bf16.mxu0 0
        %2245 = vmatmul.mubr.bf16.gmra.mrb[0].mxu0 %v2100
        %v2246 = vpop.f32.mrb[0].mxu0
        %v2247 = vadd.f32 0.0, %v2246
        %v2248 = vpop.f32.mrb[0].mxu0
        %v2249 = vpop.f32.mrb[0].mxu0
        %v2250 = vadd.f32 0.0, %v2249
        %v2251 = vpop.f32.mrb[0].mxu0
        %2252 = vmatprep.mubr.bf16.mxu0 0
        %2253 = vmatmul.mubr.bf16.gmra.mrb[0].mxu0 %v2103
        %v2254 = vpop.f32.mrb[0].mxu0
        %v2255 = vadd.f32 0.0, %v2254
        %v2256 = vpop.f32.mrb[0].mxu0
        %v2257 = vpop.f32.mrb[0].mxu0
        %v2258 = vadd.f32 0.0, %v2257
        %v2259 = vpop.f32.mrb[0].mxu0
        %2260 = vdwg.mxu0
        %2271 = vrot.lane.b32.xlu0 %v2142, 32
        %v2272 = vpop.permute.xlu0 %2271
        %2273 = vrot.lane.b32.xlu0 %v2145, 32
        %v2274 = vpop.permute.xlu0 %2273
        %2275 = vrot.lane.b32.xlu0 %v2150, 32
        %v2276 = vpop.permute.xlu0 %2275
        %2277 = vrot.lane.b32.xlu0 %v2153, 32
        %v2278 = vpop.permute.xlu0 %2277
        %2279 = vrot.lane.b32.xlu0 %v2158, 32
        %v2280 = vpop.permute.xlu0 %2279
        %2281 = vrot.lane.b32.xlu0 %v2161, 32
        %v2282 = vpop.permute.xlu0 %2281
        %2283 = vrot.lane.b32.xlu0 %v2166, 32
        %v2284 = vpop.permute.xlu0 %2283
        %2285 = vrot.lane.b32.xlu0 %v2169, 32
        %v2286 = vpop.permute.xlu0 %2285
        %2287 = vrot.lane.b32.xlu0 %v2174, 32
        %v2288 = vpop.permute.xlu0 %2287
        %2289 = vrot.lane.b32.xlu0 %v2177, 32
        %v2290 = vpop.permute.xlu0 %2289
        %2311 = vrot.lane.b32.xlu0 %v2223, 64
        %v2312 = vpop.permute.xlu0 %2311
        %2313 = vrot.lane.b32.xlu0 %v2226, 64
        %v2314 = vpop.permute.xlu0 %2313
        %2315 = vrot.lane.b32.xlu0 %v2231, 64
        %v2316 = vpop.permute.xlu0 %2315
        %2317 = vrot.lane.b32.xlu0 %v2234, 64
        %v2318 = vpop.permute.xlu0 %2317
        %2319 = vrot.lane.b32.xlu0 %v2239, 64
        %v2320 = vpop.permute.xlu0 %2319
        %2321 = vrot.lane.b32.xlu0 %v2242, 64
        %v2322 = vpop.permute.xlu0 %2321
        %2323 = vrot.lane.b32.xlu0 %v2247, 64
        %v2324 = vpop.permute.xlu0 %2323
        %2325 = vrot.lane.b32.xlu0 %v2250, 64
        %v2326 = vpop.permute.xlu0 %2325
        %2327 = vrot.lane.b32.xlu0 %v2255, 64
        %v2328 = vpop.permute.xlu0 %2327
        %2329 = vrot.lane.b32.xlu0 %v2258, 64
        %v2330 = vpop.permute.xlu0 %2329
        %v2341 = vsel %vm437, %v1749, %v2272
        %v2342 = vsel %vm437, %v1750, %v2274
        %v2343 = vsel %vm437, %v1751, %v2276
        %v2344 = vsel %vm437, %v1752, %v2278
        %v2345 = vsel %vm437, %v1753, %v2280
        %v2346 = vsel %vm437, %v1754, %v2282
        %v2347 = vsel %vm437, %v1755, %v2284
        %v2348 = vsel %vm437, %v1756, %v2286
        %v2349 = vsel %vm437, %v1757, %v2288
        %v2350 = vsel %vm437, %v1758, %v2290
        %v2351 = vsel %vm1029, %v2341, %v2312
        %v2352 = vsel %vm1029, %v2342, %v2314
        %v2353 = vsel %vm1029, %v2343, %v2316
        %v2354 = vsel %vm1029, %v2344, %v2318
        %v2355 = vsel %vm1029, %v2345, %v2320
        %v2356 = vsel %vm1029, %v2346, %v2322
        %v2357 = vsel %vm1029, %v2347, %v2324
        %v2358 = vsel %vm1029, %v2348, %v2326
        %v2359 = vsel %vm1029, %v2349, %v2328
        %v2360 = vsel %vm1029, %v2350, %v2330
        %v2361 = vpack.c.bf16 %v2352, %v2351
        %v2362 = vpack.c.bf16 %v2354, %v2353
        %v2363 = vpack.c.bf16 %v2356, %v2355
        %v2364 = vpack.c.bf16 %v2358, %v2357
        %v2365 = vpack.c.bf16 %v2360, %v2359
        %v2367 = vsel %vm1051, %v2361, 0
        %v2370 = vsel %vm1051, %v2362, 0
        %v2373 = vsel %vm1051, %v2363, 0
        %v2376 = vsel %vm1051, %v2364, 0
        %v2379 = vsel %vm1051, %v2365, 0
        %2381 = vmatprep.subr.bf16.mxu0 0
        %2382 = vmatpush1.bf16.msra.mxu0 %v1045
        %2383 = vmatprep.subr.bf16.mxu0 0
        %2384 = vmatpush1.bf16.msra.mxu0 %v1046
        %2385 = vmatprep.subr.bf16.mxu0 0
        %2386 = vmatpush1.bf16.msra.mxu0 %v1047
        %2387 = vmatprep.subr.bf16.mxu0 0
        %2388 = vmatpush1.bf16.msra.mxu0 %v1048
        %2389 = vmatprep.subr.bf16.mxu0 0
        %2390 = vmatpush1.bf16.msra.mxu0 %v1049
        %2391 = vmatprep.subr.bf16.mxu0 0
        %2392 = vmatpush1.bf16.msra.mxu0 %v1050
        %2393 = vmatprep.subr.bf16.mxu0 0
        %2394 = vmatpush1.bf16.msra.mxu0 0
        %2395 = vmatprep.subr.bf16.mxu0 0
        %2396 = vmatpush1.bf16.msra.mxu0 0
        %2397 = vmatprep.subr.bf16.mxu0 0
        %2398 = vmatpush1.bf16.msra.mxu0 0
        %2399 = vmatprep.subr.bf16.mxu0 0
        %2400 = vmatpush1.bf16.msra.mxu0 0
        %2401 = vmatprep.subr.bf16.mxu0 0
        %2402 = vmatpush1.bf16.msra.mxu0 0
        %2403 = vmatprep.subr.bf16.mxu0 0
        %2404 = vmatpush1.bf16.msra.mxu0 0
        %2405 = vmatprep.subr.bf16.mxu0 0
        %2406 = vmatpush1.bf16.msra.mxu0 0
        %2407 = vmatprep.subr.bf16.mxu0 0
        %2408 = vmatpush1.bf16.msra.mxu0 0
        %2409 = vmatprep.subr.bf16.mxu0 0
        %2410 = vmatpush1.bf16.msra.mxu0 0
        %2411 = vmatprep.subr.bf16.mxu0 0
        %2412 = vmatpush1.bf16.msra.mxu0 0
        %2413 = vmatprep.mubr.bf16.mxu0 0
        %2414 = vmatmul.mubr.bf16.gmra.mrb[0].mxu0 %v2367
        %v2415 = vpop.f32.mrb[0].mxu0
        %v2416 = vadd.f32 0.0, %v2415
        %v2417 = vpop.f32.mrb[0].mxu0
        %v2418 = vpop.f32.mrb[0].mxu0
        %v2419 = vadd.f32 0.0, %v2418
        %v2420 = vpop.f32.mrb[0].mxu0
        %2421 = vmatprep.mubr.bf16.mxu0 0
        %2422 = vmatmul.mubr.bf16.gmra.mrb[0].mxu0 %v2370
        %v2423 = vpop.f32.mrb[0].mxu0
        %v2424 = vadd.f32 0.0, %v2423
        %v2425 = vpop.f32.mrb[0].mxu0
        %v2426 = vpop.f32.mrb[0].mxu0
        %v2427 = vadd.f32 0.0, %v2426
        %v2428 = vpop.f32.mrb[0].mxu0
        %2429 = vmatprep.mubr.bf16.mxu0 0
        %2430 = vmatmul.mubr.bf16.gmra.mrb[0].mxu0 %v2373
        %v2431 = vpop.f32.mrb[0].mxu0
        %v2432 = vadd.f32 0.0, %v2431
        %v2433 = vpop.f32.mrb[0].mxu0
        %v2434 = vpop.f32.mrb[0].mxu0
        %v2435 = vadd.f32 0.0, %v2434
        %v2436 = vpop.f32.mrb[0].mxu0
        %2437 = vmatprep.mubr.bf16.mxu0 0
        %2438 = vmatmul.mubr.bf16.gmra.mrb[0].mxu0 %v2376
        %v2439 = vpop.f32.mrb[0].mxu0
        %v2440 = vadd.f32 0.0, %v2439
        %v2441 = vpop.f32.mrb[0].mxu0
        %v2442 = vpop.f32.mrb[0].mxu0
        %v2443 = vadd.f32 0.0, %v2442
        %v2444 = vpop.f32.mrb[0].mxu0
        %2445 = vmatprep.mubr.bf16.mxu0 0
        %2446 = vmatmul.mubr.bf16.gmra.mrb[0].mxu0 %v2379
        %v2447 = vpop.f32.mrb[0].mxu0
        %v2448 = vadd.f32 0.0, %v2447
        %v2449 = vpop.f32.mrb[0].mxu0
        %v2450 = vpop.f32.mrb[0].mxu0
        %v2451 = vadd.f32 0.0, %v2450
        %v2452 = vpop.f32.mrb[0].mxu0
        %2453 = vdwg.mxu0
        %v2454 = vmax.f32 %v2416, 0.0
        %v2455 = vmax.f32 %v2419, 0.0
        %v2456 = vmax.f32 %v2424, 0.0
        %v2457 = vmax.f32 %v2427, 0.0
        %v2458 = vmax.f32 %v2432, 0.0
        %v2459 = vmax.f32 %v2435, 0.0
        %v2460 = vmax.f32 %v2440, 0.0
        %v2461 = vmax.f32 %v2443, 0.0
        %v2462 = vmax.f32 %v2448, 0.0
        %v2463 = vmax.f32 %v2451, 0.0
        %v2464 = vmul.f32 %v382, %v1749
        %v2465 = vmul.f32 %v383, %v1750
        %v2466 = vmul.f32 %v384, %v1751
        %v2467 = vmul.f32 %v385, %v1752
        %v2468 = vmul.f32 %v386, %v1753
        %v2469 = vmul.f32 %v387, %v1754
        %v2470 = vmul.f32 %v388, %v1755
        %v2471 = vmul.f32 %v389, %v1756
        %v2472 = vmul.f32 %v390, %v1757
        %v2473 = vmul.f32 %v391, %v1758
        %v2474 = vmax.f32 %v2464, 0.0
        %v2475 = vmax.f32 %v2465, 0.0
        %v2476 = vmax.f32 %v2466, 0.0
        %v2477 = vmax.f32 %v2467, 0.0
        %v2478 = vmax.f32 %v2468, 0.0
        %v2479 = vmax.f32 %v2469, 0.0
        %v2480 = vmax.f32 %v2470, 0.0
        %v2481 = vmax.f32 %v2471, 0.0
        %v2482 = vmax.f32 %v2472, 0.0
        %v2483 = vmax.f32 %v2473, 0.0
        %v2484 = vpack.c.bf16 %v2475, %v2474
        %v2485 = vpack.c.bf16 %v2477, %v2476
        %v2486 = vpack.c.bf16 %v2479, %v2478
        %v2487 = vpack.c.bf16 %v2481, %v2480
        %v2488 = vpack.c.bf16 %v2483, %v2482
        %v2490 = vsel %vm782, %v2488, 0
        %2492 = vmatprep.subr.bf16.mxu0 0
        %2493 = vmatpush1.bf16.msra.mxu0 %v2484
        %2494 = vmatprep.subr.bf16.mxu0 0
        %2495 = vmatpush1.bf16.msra.mxu0 %v2485
        %2496 = vmatprep.subr.bf16.mxu0 0
        %2497 = vmatpush1.bf16.msra.mxu0 %v2486
        %2498 = vmatprep.subr.bf16.mxu0 0
        %2499 = vmatpush1.bf16.msra.mxu0 %v2487
        %2500 = vmatprep.subr.bf16.mxu0 0
        %2501 = vmatpush1.bf16.msra.mxu0 %v2490
        %2502 = vmatprep.subr.bf16.mxu0 0
        %2503 = vmatpush1.bf16.msra.mxu0 0
        %2504 = vmatprep.subr.bf16.mxu0 0
        %2505 = vmatpush1.bf16.msra.mxu0 0
        %2506 = vmatprep.subr.bf16.mxu0 0
        %2507 = vmatpush1.bf16.msra.mxu0 0
        %2508 = vmatprep.subr.bf16.mxu0 0
        %2509 = vmatpush1.bf16.msra.mxu0 0
        %2510 = vmatprep.subr.bf16.mxu0 0
        %2511 = vmatpush1.bf16.msra.mxu0 0
        %2512 = vmatprep.subr.bf16.mxu0 0
        %2513 = vmatpush1.bf16.msra.mxu0 0
        %2514 = vmatprep.subr.bf16.mxu0 0
        %2515 = vmatpush1.bf16.msra.mxu0 0
        %2516 = vmatprep.subr.bf16.mxu0 0
        %2517 = vmatpush1.bf16.msra.mxu0 0
        %2518 = vmatprep.subr.bf16.mxu0 0
        %2519 = vmatpush1.bf16.msra.mxu0 0
        %2520 = vmatprep.subr.bf16.mxu0 0
        %2521 = vmatpush1.bf16.msra.mxu0 0
        %2522 = vmatprep.subr.bf16.mxu0 0
        %2523 = vmatpush1.bf16.msra.mxu0 0
        %2524 = vmatprep.mubr.bf16.mxu0 0
        %2525 = vmatmul.mubr.bf16.gmra.mrb[0].mxu0 %v1178
        %v2526 = vpop.f32.mrb[0].mxu0
        %v2527 = vadd.f32 0.0, %v2526
        %v2528 = vpop.f32.mrb[0].mxu0
        %v2529 = vpop.f32.mrb[0].mxu0
        %v2530 = vadd.f32 0.0, %v2529
        %v2531 = vpop.f32.mrb[0].mxu0
        %2532 = vmatprep.mubr.bf16.mxu0 0
        %2533 = vmatmul.mubr.bf16.gmra.mrb[0].mxu0 %v1181
        %v2534 = vpop.f32.mrb[0].mxu0
        %v2535 = vadd.f32 0.0, %v2534
        %v2536 = vpop.f32.mrb[0].mxu0
        %v2537 = vpop.f32.mrb[0].mxu0
        %v2538 = vadd.f32 0.0, %v2537
        %v2539 = vpop.f32.mrb[0].mxu0
        %2540 = vdwg.mxu0
        %v2541 = vpack.c.bf16 %v2530, %v2527
        %v2542 = vpack.c.bf16 %v2538, %v2535
        %v2544 = vsel %vm437, %v2541, 0
        %v2547 = vsel %vm437, %v2542, 0
        %2549 = vmatprep.subr.bf16.mxu0 0
        %2550 = vmatpush1.bf16.msra.mxu0 %v1237
        %2551 = vmatprep.subr.bf16.mxu0 0
        %2552 = vmatpush1.bf16.msra.mxu0 %v1238
        %2553 = vmatprep.subr.bf16.mxu0 0
        %2554 = vmatpush1.bf16.msra.mxu0 0
        %2555 = vmatprep.subr.bf16.mxu0 0
        %2556 = vmatpush1.bf16.msra.mxu0 0
        %2557 = vmatprep.subr.bf16.mxu0 0
        %2558 = vmatpush1.bf16.msra.mxu0 0
        %2559 = vmatprep.subr.bf16.mxu0 0
        %2560 = vmatpush1.bf16.msra.mxu0 0
        %2561 = vmatprep.subr.bf16.mxu0 0
        %2562 = vmatpush1.bf16.msra.mxu0 0
        %2563 = vmatprep.subr.bf16.mxu0 0
        %2564 = vmatpush1.bf16.msra.mxu0 0
        %2565 = vmatprep.subr.bf16.mxu0 0
        %2566 = vmatpush1.bf16.msra.mxu0 0
        %2567 = vmatprep.subr.bf16.mxu0 0
        %2568 = vmatpush1.bf16.msra.mxu0 0
        %2569 = vmatprep.subr.bf16.mxu0 0
        %2570 = vmatpush1.bf16.msra.mxu0 0
        %2571 = vmatprep.subr.bf16.mxu0 0
        %2572 = vmatpush1.bf16.msra.mxu0 0
        %2573 = vmatprep.subr.bf16.mxu0 0
        %2574 = vmatpush1.bf16.msra.mxu0 0
        %2575 = vmatprep.subr.bf16.mxu0 0
        %2576 = vmatpush1.bf16.msra.mxu0 0
        %2577 = vmatprep.subr.bf16.mxu0 0
        %2578 = vmatpush1.bf16.msra.mxu0 0
        %2579 = vmatprep.subr.bf16.mxu0 0
        %2580 = vmatpush1.bf16.msra.mxu0 0
        %2581 = vmatprep.mubr.bf16.mxu0 0
        %2582 = vmatmul.mubr.bf16.gmra.mrb[0].mxu0 %v2544
        %v2583 = vpop.f32.mrb[0].mxu0
        %v2584 = vadd.f32 0.0, %v2583
        %v2585 = vpop.f32.mrb[0].mxu0
        %v2586 = vpop.f32.mrb[0].mxu0
        %v2587 = vadd.f32 0.0, %v2586
        %v2588 = vpop.f32.mrb[0].mxu0
        %2589 = vmatprep.mubr.bf16.mxu0 0
        %2590 = vmatmul.mubr.bf16.gmra.mrb[0].mxu0 %v2547
        %v2591 = vpop.f32.mrb[0].mxu0
        %v2592 = vadd.f32 0.0, %v2591
        %v2593 = vpop.f32.mrb[0].mxu0
        %v2594 = vpop.f32.mrb[0].mxu0
        %v2595 = vadd.f32 0.0, %v2594
        %v2596 = vpop.f32.mrb[0].mxu0
        %2597 = vdwg.mxu0
        %v2598 = vpack.c.bf16 %v2587, %v2584
        %v2599 = vpack.c.bf16 %v2595, %v2592
        %2602 = vrot.lane.b32.xlu0 %v2598, 120
        %v2603 = vpop.permute.xlu0 %2602
        %2604 = vrot.lane.b32.xlu0 %v2599, 120
        %v2605 = vpop.permute.xlu0 %2604
        %v2607 = vsel %vm546, %v2598, 0
        %v2610 = vsel %vm546, %v2599, 0
        %v2613 = vsel %vm546, %v2603, 0
        %v2616 = vsel %vm546, %v2605, 0
        %2618 = vmatprep.subr.bf16.mxu0 0
        %2619 = vmatpush1.bf16.xpose.msra.mxu0 %v2613
        %2620 = vmatprep.subr.bf16.mxu0 0
        %2621 = vmatpush1.bf16.xpose.msra.mxu0 %v2616
        %2622 = vmatprep.subr.bf16.mxu0 0
        %2623 = vmatpush1.bf16.xpose.msra.mxu0 0
        %2624 = vmatprep.subr.bf16.mxu0 0
        %2625 = vmatpush1.bf16.xpose.msra.mxu0 0
        %2626 = vmatprep.subr.bf16.mxu0 0
        %2627 = vmatpush1.bf16.xpose.msra.mxu0 0
        %2628 = vmatprep.subr.bf16.mxu0 0
        %2629 = vmatpush1.bf16.xpose.msra.mxu0 0
        %2630 = vmatprep.subr.bf16.mxu0 0
        %2631 = vmatpush1.bf16.xpose.msra.mxu0 0
        %2632 = vmatprep.subr.bf16.mxu0 0
        %2633 = vmatpush1.bf16.xpose.msra.mxu0 0
        %2634 = vmatprep.subr.bf16.mxu0 0
        %2635 = vmatpush1.bf16.xpose.msra.mxu0 0
        %2636 = vmatprep.subr.bf16.mxu0 0
        %2637 = vmatpush1.bf16.xpose.msra.mxu0 0
        %2638 = vmatprep.subr.bf16.mxu0 0
        %2639 = vmatpush1.bf16.xpose.msra.mxu0 0
        %2640 = vmatprep.subr.bf16.mxu0 0
        %2641 = vmatpush1.bf16.xpose.msra.mxu0 0
        %2642 = vmatprep.subr.bf16.mxu0 0
        %2643 = vmatpush1.bf16.xpose.msra.mxu0 0
        %2644 = vmatprep.subr.bf16.mxu0 0
        %2645 = vmatpush1.bf16.xpose.msra.mxu0 0
        %2646 = vmatprep.subr.bf16.mxu0 0
        %2647 = vmatpush1.bf16.xpose.msra.mxu0 0
        %2648 = vmatprep.subr.bf16.mxu0 0
        %2649 = vmatpush1.bf16.xpose.msra.mxu0 0
        %2650 = vmatprep.mubr.bf16.mxu0 0
        %2651 = vmatmul.mubr.bf16.gmra.mrb[0].mxu0 %v2607
        %v2652 = vpop.f32.mrb[0].mxu0
        %v2653 = vadd.f32 0.0, %v2652
        %v2654 = vpop.f32.mrb[0].mxu0
        %v2655 = vpop.f32.mrb[0].mxu0
        %v2656 = vadd.f32 0.0, %v2655
        %v2657 = vpop.f32.mrb[0].mxu0
        %2658 = vmatprep.mubr.bf16.mxu0 0
        %2659 = vmatmul.mubr.bf16.gmra.mrb[0].mxu0 %v2610
        %v2660 = vpop.f32.mrb[0].mxu0
        %v2661 = vadd.f32 0.0, %v2660
        %v2662 = vpop.f32.mrb[0].mxu0
        %v2663 = vpop.f32.mrb[0].mxu0
        %v2664 = vadd.f32 0.0, %v2663
        %v2665 = vpop.f32.mrb[0].mxu0
        %2666 = vdwg.mxu0
        %v2667 = vsel %vm1363, %v2653, -inf
        %2668 = vmax.xlane.f32.xlu0 %v2667
        %v2669 = vpop.xlane.xlu0 %2668
        %v2670 = vsel %vm1363, %v2656, -inf
        %2671 = vmax.xlane.f32.xlu0 %v2670
        %v2672 = vpop.xlane.xlu0 %2671
        %v2673 = vsel %vm1363, %v2661, -inf
        %2674 = vmax.xlane.f32.xlu0 %v2673
        %v2675 = vpop.xlane.xlu0 %2674
        %v2676 = vsel %vm1373, %v2664, -inf
        %2677 = vmax.xlane.f32.xlu0 %v2676
        %v2678 = vpop.xlane.xlu0 %2677
        %v2679 = vsub.f32 %v2653, %v2669
        %v2680 = vsub.f32 %v2656, %v2672
        %v2681 = vsub.f32 %v2661, %v2675
        %v2682 = vsub.f32 %v2664, %v2678
        %v2683 = vmul.f32 %v2679, 1.442695
        %v2684 = vpow.pop %v2683
        %v2685 = vmul.f32 %v2680, 1.442695
        %v2686 = vpow.pop %v2685
        %v2687 = vmul.f32 %v2681, 1.442695
        %v2688 = vpow.pop %v2687
        %v2689 = vmul.f32 %v2682, 1.442695
        %v2690 = vpow.pop %v2689
        %v2691 = vsel %vm1363, %v2684, 0.0
        %2692 = vadd.xlane.f32.xlu0 %v2691
        %v2693 = vpop.xlane.xlu0 %2692
        %v2694 = vsel %vm1363, %v2686, 0.0
        %2695 = vadd.xlane.f32.xlu0 %v2694
        %v2696 = vpop.xlane.xlu0 %2695
        %v2697 = vsel %vm1363, %v2688, 0.0
        %2698 = vadd.xlane.f32.xlu0 %v2697
        %v2699 = vpop.xlane.xlu0 %2698
        %v2700 = vsel %vm1373, %v2690, 0.0
        %2701 = vadd.xlane.f32.xlu0 %v2700
        %v2702 = vpop.xlane.xlu0 %2701
        %v2703 = vrcp.pop %v2693
        %v2704 = vmul.f32 %v2684, %v2703
        %v2705 = vrcp.pop %v2696
        %v2706 = vmul.f32 %v2686, %v2705
        %v2707 = vrcp.pop %v2699
        %v2708 = vmul.f32 %v2688, %v2707
        %v2709 = vrcp.pop %v2702
        %v2710 = vmul.f32 %v2690, %v2709
        %v2711 = vpack.c.bf16 %v2706, %v2704
        %v2712 = vpack.c.bf16 %v2710, %v2708
        %v2714 = vsel %vm1363, %v2711, 0
        %v2717 = vsel %vm1363, %v2712, 0
        %v2719 = vsel %vm782, %v2542, 0
        %2721 = vmatprep.subr.bf16.mxu0 0
        %2722 = vmatpush1.bf16.msra.mxu0 %v2541
        %2723 = vmatprep.subr.bf16.mxu0 0
        %2724 = vmatpush1.bf16.msra.mxu0 %v2719
        %2725 = vmatprep.subr.bf16.mxu0 0
        %2726 = vmatpush1.bf16.msra.mxu0 0
        %2727 = vmatprep.subr.bf16.mxu0 0
        %2728 = vmatpush1.bf16.msra.mxu0 0
        %2729 = vmatprep.subr.bf16.mxu0 0
        %2730 = vmatpush1.bf16.msra.mxu0 0
        %2731 = vmatprep.subr.bf16.mxu0 0
        %2732 = vmatpush1.bf16.msra.mxu0 0
        %2733 = vmatprep.subr.bf16.mxu0 0
        %2734 = vmatpush1.bf16.msra.mxu0 0
        %2735 = vmatprep.subr.bf16.mxu0 0
        %2736 = vmatpush1.bf16.msra.mxu0 0
        %2737 = vmatprep.subr.bf16.mxu0 0
        %2738 = vmatpush1.bf16.msra.mxu0 0
        %2739 = vmatprep.subr.bf16.mxu0 0
        %2740 = vmatpush1.bf16.msra.mxu0 0
        %2741 = vmatprep.subr.bf16.mxu0 0
        %2742 = vmatpush1.bf16.msra.mxu0 0
        %2743 = vmatprep.subr.bf16.mxu0 0
        %2744 = vmatpush1.bf16.msra.mxu0 0
        %2745 = vmatprep.subr.bf16.mxu0 0
        %2746 = vmatpush1.bf16.msra.mxu0 0
        %2747 = vmatprep.subr.bf16.mxu0 0
        %2748 = vmatpush1.bf16.msra.mxu0 0
        %2749 = vmatprep.subr.bf16.mxu0 0
        %2750 = vmatpush1.bf16.msra.mxu0 0
        %2751 = vmatprep.subr.bf16.mxu0 0
        %2752 = vmatpush1.bf16.msra.mxu0 0
        %2753 = vmatprep.mubr.bf16.mxu0 0
        %2754 = vmatmul.mubr.bf16.gmra.mrb[0].mxu0 %v2714
        %v2755 = vpop.f32.mrb[0].mxu0
        %v2756 = vadd.f32 0.0, %v2755
        %v2757 = vpop.f32.mrb[0].mxu0
        %v2758 = vpop.f32.mrb[0].mxu0
        %v2759 = vadd.f32 0.0, %v2758
        %v2760 = vpop.f32.mrb[0].mxu0
        %2761 = vmatprep.mubr.bf16.mxu0 0
        %2762 = vmatmul.mubr.bf16.gmra.mrb[0].mxu0 %v2717
        %v2763 = vpop.f32.mrb[0].mxu0
        %v2764 = vadd.f32 0.0, %v2763
        %v2765 = vpop.f32.mrb[0].mxu0
        %v2766 = vpop.f32.mrb[0].mxu0
        %v2767 = vadd.f32 0.0, %v2766
        %v2768 = vpop.f32.mrb[0].mxu0
        %2769 = vdwg.mxu0
        %2774 = vrot.lane.b32.xlu0 %v2756, 32
        %v2775 = vpop.permute.xlu0 %2774
        %2776 = vrot.lane.b32.xlu0 %v2759, 32
        %v2777 = vpop.permute.xlu0 %2776
        %2778 = vrot.lane.b32.xlu0 %v2764, 32
        %v2779 = vpop.permute.xlu0 %2778
        %2780 = vrot.lane.b32.xlu0 %v2767, 32
        %v2781 = vpop.permute.xlu0 %2780
        %v2786 = vsel %vm437, %v2527, %v2775
        %v2787 = vsel %vm437, %v2530, %v2777
        %v2788 = vsel %vm437, %v2535, %v2779
        %v2789 = vsel %vm437, %v2538, %v2781
        %v2790 = vpack.c.bf16 %v2787, %v2786
        %v2791 = vpack.c.bf16 %v2789, %v2788
        %v2793 = vsel %vm1029, %v2790, 0
        %v2796 = vsel %vm1029, %v2791, 0
        %2798 = vmatprep.subr.bf16.mxu0 0
        %2799 = vmatpush1.bf16.msra.mxu0 %v1490
        %2800 = vmatprep.subr.bf16.mxu0 0
        %2801 = vmatpush1.bf16.msra.mxu0 %v1491
        %2802 = vmatprep.subr.bf16.mxu0 0
        %2803 = vmatpush1.bf16.msra.mxu0 %v1492
        %2804 = vmatprep.subr.bf16.mxu0 0
        %2805 = vmatpush1.bf16.msra.mxu0 %v1493
        %2806 = vmatprep.subr.bf16.mxu0 0
        %2807 = vmatpush1.bf16.msra.mxu0 0
        %2808 = vmatprep.subr.bf16.mxu0 0
        %2809 = vmatpush1.bf16.msra.mxu0 0
        %2810 = vmatprep.subr.bf16.mxu0 0
        %2811 = vmatpush1.bf16.msra.mxu0 0
        %2812 = vmatprep.subr.bf16.mxu0 0
        %2813 = vmatpush1.bf16.msra.mxu0 0
        %2814 = vmatprep.subr.bf16.mxu0 0
        %2815 = vmatpush1.bf16.msra.mxu0 0
        %2816 = vmatprep.subr.bf16.mxu0 0
        %2817 = vmatpush1.bf16.msra.mxu0 0
        %2818 = vmatprep.subr.bf16.mxu0 0
        %2819 = vmatpush1.bf16.msra.mxu0 0
        %2820 = vmatprep.subr.bf16.mxu0 0
        %2821 = vmatpush1.bf16.msra.mxu0 0
        %2822 = vmatprep.subr.bf16.mxu0 0
        %2823 = vmatpush1.bf16.msra.mxu0 0
        %2824 = vmatprep.subr.bf16.mxu0 0
        %2825 = vmatpush1.bf16.msra.mxu0 0
        %2826 = vmatprep.subr.bf16.mxu0 0
        %2827 = vmatpush1.bf16.msra.mxu0 0
        %2828 = vmatprep.subr.bf16.mxu0 0
        %2829 = vmatpush1.bf16.msra.mxu0 0
        %2830 = vmatprep.mubr.bf16.mxu0 0
        %2831 = vmatmul.mubr.bf16.gmra.mrb[0].mxu0 %v2793
        %v2832 = vpop.f32.mrb[0].mxu0
        %v2833 = vadd.f32 0.0, %v2832
        %v2834 = vpop.f32.mrb[0].mxu0
        %v2835 = vpop.f32.mrb[0].mxu0
        %v2836 = vadd.f32 0.0, %v2835
        %v2837 = vpop.f32.mrb[0].mxu0
        %2838 = vmatprep.mubr.bf16.mxu0 0
        %2839 = vmatmul.mubr.bf16.gmra.mrb[0].mxu0 %v2796
        %v2840 = vpop.f32.mrb[0].mxu0
        %v2841 = vadd.f32 0.0, %v2840
        %v2842 = vpop.f32.mrb[0].mxu0
        %v2843 = vpop.f32.mrb[0].mxu0
        %v2844 = vadd.f32 0.0, %v2843
        %v2845 = vpop.f32.mrb[0].mxu0
        %2846 = vdwg.mxu0
        %v2847 = vmax.f32 %v2833, 0.0
        %v2848 = vmax.f32 %v2836, 0.0
        %v2849 = vmax.f32 %v2841, 0.0
        %v2850 = vmax.f32 %v2844, 0.0
        %v2851 = vpack.c.bf16 %v2848, %v2847
        %v2852 = vpack.c.bf16 %v2850, %v2849
        %v2854 = vsel %vm782, %v2852, 0
        %2856 = vmatprep.subr.bf16.mxu0 0
        %2857 = vmatpush1.bf16.msra.mxu0 %v2851
        %2858 = vmatprep.subr.bf16.mxu0 0
        %2859 = vmatpush1.bf16.msra.mxu0 %v2854
        %2860 = vmatprep.subr.bf16.mxu0 0
        %2861 = vmatpush1.bf16.msra.mxu0 0
        %2862 = vmatprep.subr.bf16.mxu0 0
        %2863 = vmatpush1.bf16.msra.mxu0 0
        %2864 = vmatprep.subr.bf16.mxu0 0
        %2865 = vmatpush1.bf16.msra.mxu0 0
        %2866 = vmatprep.subr.bf16.mxu0 0
        %2867 = vmatpush1.bf16.msra.mxu0 0
        %2868 = vmatprep.subr.bf16.mxu0 0
        %2869 = vmatpush1.bf16.msra.mxu0 0
        %2870 = vmatprep.subr.bf16.mxu0 0
        %2871 = vmatpush1.bf16.msra.mxu0 0
        %2872 = vmatprep.subr.bf16.mxu0 0
        %2873 = vmatpush1.bf16.msra.mxu0 0
        %2874 = vmatprep.subr.bf16.mxu0 0
        %2875 = vmatpush1.bf16.msra.mxu0 0
        %2876 = vmatprep.subr.bf16.mxu0 0
        %2877 = vmatpush1.bf16.msra.mxu0 0
        %2878 = vmatprep.subr.bf16.mxu0 0
        %2879 = vmatpush1.bf16.msra.mxu0 0
        %2880 = vmatprep.subr.bf16.mxu0 0
        %2881 = vmatpush1.bf16.msra.mxu0 0
        %2882 = vmatprep.subr.bf16.mxu0 0
        %2883 = vmatpush1.bf16.msra.mxu0 0
        %2884 = vmatprep.subr.bf16.mxu0 0
        %2885 = vmatpush1.bf16.msra.mxu0 0
        %2886 = vmatprep.subr.bf16.mxu0 0
        %2887 = vmatpush1.bf16.msra.mxu0 0
        %2888 = vmatprep.mubr.bf16.mxu0 0
        %2889 = vmatmul.mubr.bf16.gmra.mrb[0].mxu0 %v1561
        %v2890 = vpop.f32.mrb[0].mxu0
        %v2891 = vadd.f32 0.0, %v2890
        %v2892 = vpop.f32.mrb[0].mxu0
        %v2893 = vpop.f32.mrb[0].mxu0
        %v2894 = vadd.f32 0.0, %v2893
        %v2895 = vpop.f32.mrb[0].mxu0
        %2896 = vmatprep.mubr.bf16.mxu0 0
        %2897 = vmatmul.mubr.bf16.gmra.mrb[0].mxu0 %v1564
        %v2898 = vpop.f32.mrb[0].mxu0
        %v2899 = vadd.f32 0.0, %v2898
        %v2900 = vpop.f32.mrb[0].mxu0
        %v2901 = vpop.f32.mrb[0].mxu0
        %v2902 = vadd.f32 0.0, %v2901
        %v2903 = vpop.f32.mrb[0].mxu0
        %2904 = vmatprep.mubr.bf16.mxu0 0
        %2905 = vmatmul.mubr.bf16.gmra.mrb[0].mxu0 %v1567
        %v2906 = vpop.f32.mrb[0].mxu0
        %v2907 = vadd.f32 0.0, %v2906
        %v2908 = vpop.f32.mrb[0].mxu0
        %v2909 = vpop.f32.mrb[0].mxu0
        %v2910 = vadd.f32 0.0, %v2909
        %v2911 = vpop.f32.mrb[0].mxu0
        %2912 = vmatprep.mubr.bf16.mxu0 0
        %2913 = vmatmul.mubr.bf16.gmra.mrb[0].mxu0 %v1570
        %v2914 = vpop.f32.mrb[0].mxu0
        %v2915 = vadd.f32 0.0, %v2914
        %v2916 = vpop.f32.mrb[0].mxu0
        %v2917 = vpop.f32.mrb[0].mxu0
        %v2918 = vadd.f32 0.0, %v2917
        %v2919 = vpop.f32.mrb[0].mxu0
        %2920 = vmatprep.mubr.bf16.mxu0 0
        %2921 = vmatmul.mubr.bf16.gmra.mrb[0].mxu0 %v1573
        %v2922 = vpop.f32.mrb[0].mxu0
        %v2923 = vadd.f32 0.0, %v2922
        %v2924 = vpop.f32.mrb[0].mxu0
        %v2925 = vpop.f32.mrb[0].mxu0
        %v2926 = vadd.f32 0.0, %v2925
        %v2927 = vpop.f32.mrb[0].mxu0
        %2928 = vdwg.mxu0
        %v2929 = vadd.f32 %v2454, %v2891
        %v2930 = vadd.f32 %v2455, %v2894
        %v2931 = vadd.f32 %v2456, %v2899
        %v2932 = vadd.f32 %v2457, %v2902
        %v2933 = vadd.f32 %v2458, %v2907
        %v2934 = vadd.f32 %v2459, %v2910
        %v2935 = vadd.f32 %v2460, %v2915
        %v2936 = vadd.f32 %v2461, %v2918
        %v2937 = vadd.f32 %v2462, %v2923
        %v2938 = vadd.f32 %v2463, %v2926
        %v2942 = vrot.slane %v2931, 3
        %v2943 = vrot.slane %v2932, 3
        %v2944 = vsel %vm1664, %v2942, %v2943
        %v2945 = vrot.slane %v2933, 3
        %v2946 = vsel %vm1664, %v2943, %v2945
        %v2950 = vadd.f32 %v2929, %v2944
        %v2951 = vadd.f32 %v2930, %v2946
        %v2952 = vadd.f32 %v2931, %v2945
        %v2956 = vrot.slane %v2933, 6
        %v2957 = vrot.slane %v2934, 6
        %v2958 = vsel %vm1679, %v2956, %v2957
        %v2959 = vrot.slane %v2935, 6
        %v2960 = vsel %vm1679, %v2957, %v2959
        %v2961 = vrot.slane %v2936, 6
        %v2962 = vsel %vm1679, %v2959, %v2961
        %v2966 = vadd.f32 %v2950, %v2958
        %v2967 = vadd.f32 %v2951, %v2960
        %v2968 = vadd.f32 %v2952, %v2962
        %v2971 = vrot.slane %v2936, 1
        %v2972 = vrot.slane %v2937, 1
        %v2973 = vsel %vm1695, %v2971, %v2972
        %v2974 = vrot.slane %v2938, 1
        %v2975 = vsel %vm1695, %v2972, %v2974
        %v2979 = vadd.f32 %v2966, %v2973
        %v2980 = vadd.f32 %v2967, %v2975
        %v2981 = vadd.f32 %v2968, %v2974
        %v2982 = vmul.f32 %v2979, 0.25
        %v2983 = vmul.f32 %v2980, 0.25
        %v2984 = vmul.f32 %v2981, 0.25
        %s2985 = scalar_lea.vmem %s333, 24
        %2986 = vst.msk [vmem:[%s2985] sm:$0xff] %vm546, %v2982
        %2987 = vst.msk [vmem:[%s2985 + $0x8] sm:$0xff] %vm546, %v2983
        %2988 = vst.msk [vmem:[%s2985 + $0x10] sm:$0x7] %vm1712, %v2984
        %s2989 = scalar_lea.vmem %s313, 80 [#allocation2]
        %2990 = vst.msk [vmem:[%s2989] sm:$0xff] %vm650, %v2066
        %2991 = vst.msk [vmem:[%s2989 + $0x8] sm:$0xff] %vm650, %v2068
        %2992 = vst.msk [vmem:[%s2989 + $0x10] sm:$0xff] %vm650, %v2070
        %2993 = vst.msk [vmem:[%s2989 + $0x18] sm:$0xff] %vm650, %v2072
        %2994 = vst.msk [vmem:[%s2989 + $0x20] sm:$0xff] %vm650, %v2074
        %2995 = vst.msk [vmem:[%s2989 + $0x28] sm:$0xff] %vm650, %v2076
        %2996 = vst.msk [vmem:[%s2989 + $0x30] sm:$0xff] %vm650, %v2078
        %2997 = vst.msk [vmem:[%s2989 + $0x38] sm:$0xff] %vm650, %v2080
        %2998 = vst.msk [vmem:[%s2989 + $0x40] sm:$0xff] %vm650, %v2082
        %2999 = vst.msk [vmem:[%s2989 + $0x48] sm:$0xf] %vm678, %v2084
        %s3000 = scalar_lea.vmem %s320, 32 [#allocation4]
        %3001 = vst.msk [vmem:[%s3000] sm:$0xff] %vm1363, %v2704
        %3002 = vst.msk [vmem:[%s3000 + $0x8] sm:$0xff] %vm1363, %v2706
        %3003 = vst.msk [vmem:[%s3000 + $0x10] sm:$0xff] %vm1363, %v2708
        %3004 = vst.msk [vmem:[%s3000 + $0x18] sm:$0xf] %vm1373, %v2710
        %s3005 = scalar_lea.vmem %s326, 160
        %v3006 = vld [vmem:[%s3005] sm:$0xff]
        %v3007 = vld [vmem:[%s3005 + $0x8] sm:$0xff]
        %v3008 = vld [vmem:[%s3005 + $0x10] sm:$0xff]
        %v3009 = vld [vmem:[%s3005 + $0x18] sm:$0xff]
        %v3010 = vld [vmem:[%s3005 + $0x20] sm:$0xff]
        %v3011 = vld [vmem:[%s3005 + $0x28] sm:$0xff]
        %v3012 = vld [vmem:[%s3005 + $0x30] sm:$0xff]
        %v3013 = vld [vmem:[%s3005 + $0x38] sm:$0xff]
        %v3014 = vld [vmem:[%s3005 + $0x40] sm:$0xff]
        %v3015 = vld [vmem:[%s3005 + $0x48] sm:$0xf]
        %v3016 = vsub.f32 %v3006, %v405
        %v3017 = vsub.f32 %v3007, %v405
        %v3018 = vsub.f32 %v3008, %v405
        %v3019 = vsub.f32 %v3009, %v405
        %v3020 = vsub.f32 %v3010, %v405
        %v3021 = vsub.f32 %v3011, %v405
        %v3022 = vsub.f32 %v3012, %v405
        %v3023 = vsub.f32 %v3013, %v405
        %v3024 = vsub.f32 %v3014, %v405
        %v3025 = vsub.f32 %v3015, %v405
        %v3026 = vmul.f32 %v3016, %v419
        %v3027 = vmul.f32 %v3017, %v419
        %v3028 = vmul.f32 %v3018, %v419
        %v3029 = vmul.f32 %v3019, %v419
        %v3030 = vmul.f32 %v3020, %v419
        %v3031 = vmul.f32 %v3021, %v419
        %v3032 = vmul.f32 %v3022, %v419
        %v3033 = vmul.f32 %v3023, %v419
        %v3034 = vmul.f32 %v3024, %v419
        %v3035 = vmul.f32 %v3025, %v419
        %v3036 = vpack.c.bf16 %v3027, %v3026
        %v3037 = vpack.c.bf16 %v3029, %v3028
        %v3038 = vpack.c.bf16 %v3031, %v3030
        %v3039 = vpack.c.bf16 %v3033, %v3032
        %v3040 = vpack.c.bf16 %v3035, %v3034
        %v3042 = vsel %vm437, %v3036, 0
        %v3045 = vsel %vm437, %v3037, 0
        %v3048 = vsel %vm437, %v3038, 0
        %v3051 = vsel %vm437, %v3039, 0
        %v3054 = vsel %vm437, %v3040, 0
        %3056 = vmatprep.subr.bf16.mxu0 0
        %3057 = vmatpush1.bf16.msra.mxu0 %v435
        %3058 = vmatprep.subr.bf16.mxu0 0
        %3059 = vmatpush1.bf16.msra.mxu0 %v436
        %3060 = vmatprep.subr.bf16.mxu0 0
        %3061 = vmatpush1.bf16.msra.mxu0 0
        %3062 = vmatprep.subr.bf16.mxu0 0
        %3063 = vmatpush1.bf16.msra.mxu0 0
        %3064 = vmatprep.subr.bf16.mxu0 0
        %3065 = vmatpush1.bf16.msra.mxu0 0
        %3066 = vmatprep.subr.bf16.mxu0 0
        %3067 = vmatpush1.bf16.msra.mxu0 0
        %3068 = vmatprep.subr.bf16.mxu0 0
        %3069 = vmatpush1.bf16.msra.mxu0 0
        %3070 = vmatprep.subr.bf16.mxu0 0
        %3071 = vmatpush1.bf16.msra.mxu0 0
        %3072 = vmatprep.subr.bf16.mxu0 0
        %3073 = vmatpush1.bf16.msra.mxu0 0
        %3074 = vmatprep.subr.bf16.mxu0 0
        %3075 = vmatpush1.bf16.msra.mxu0 0
        %3076 = vmatprep.subr.bf16.mxu0 0
        %3077 = vmatpush1.bf16.msra.mxu0 0
        %3078 = vmatprep.subr.bf16.mxu0 0
        %3079 = vmatpush1.bf16.msra.mxu0 0
        %3080 = vmatprep.subr.bf16.mxu0 0
        %3081 = vmatpush1.bf16.msra.mxu0 0
        %3082 = vmatprep.subr.bf16.mxu0 0
        %3083 = vmatpush1.bf16.msra.mxu0 0
        %3084 = vmatprep.subr.bf16.mxu0 0
        %3085 = vmatpush1.bf16.msra.mxu0 0
        %3086 = vmatprep.subr.bf16.mxu0 0
        %3087 = vmatpush1.bf16.msra.mxu0 0
        %3088 = vmatprep.mubr.bf16.mxu0 0
        %3089 = vmatmul.mubr.bf16.gmra.mrb[0].mxu0 %v3042
        %v3090 = vpop.f32.mrb[0].mxu0
        %v3091 = vadd.f32 0.0, %v3090
        %v3092 = vpop.f32.mrb[0].mxu0
        %v3093 = vpop.f32.mrb[0].mxu0
        %v3094 = vadd.f32 0.0, %v3093
        %v3095 = vpop.f32.mrb[0].mxu0
        %3096 = vmatprep.mubr.bf16.mxu0 0
        %3097 = vmatmul.mubr.bf16.gmra.mrb[0].mxu0 %v3045
        %v3098 = vpop.f32.mrb[0].mxu0
        %v3099 = vadd.f32 0.0, %v3098
        %v3100 = vpop.f32.mrb[0].mxu0
        %v3101 = vpop.f32.mrb[0].mxu0
        %v3102 = vadd.f32 0.0, %v3101
        %v3103 = vpop.f32.mrb[0].mxu0
        %3104 = vmatprep.mubr.bf16.mxu0 0
        %3105 = vmatmul.mubr.bf16.gmra.mrb[0].mxu0 %v3048
        %v3106 = vpop.f32.mrb[0].mxu0
        %v3107 = vadd.f32 0.0, %v3106
        %v3108 = vpop.f32.mrb[0].mxu0
        %v3109 = vpop.f32.mrb[0].mxu0
        %v3110 = vadd.f32 0.0, %v3109
        %v3111 = vpop.f32.mrb[0].mxu0
        %3112 = vmatprep.mubr.bf16.mxu0 0
        %3113 = vmatmul.mubr.bf16.gmra.mrb[0].mxu0 %v3051
        %v3114 = vpop.f32.mrb[0].mxu0
        %v3115 = vadd.f32 0.0, %v3114
        %v3116 = vpop.f32.mrb[0].mxu0
        %v3117 = vpop.f32.mrb[0].mxu0
        %v3118 = vadd.f32 0.0, %v3117
        %v3119 = vpop.f32.mrb[0].mxu0
        %3120 = vmatprep.mubr.bf16.mxu0 0
        %3121 = vmatmul.mubr.bf16.gmra.mrb[0].mxu0 %v3054
        %v3122 = vpop.f32.mrb[0].mxu0
        %v3123 = vadd.f32 0.0, %v3122
        %v3124 = vpop.f32.mrb[0].mxu0
        %v3125 = vpop.f32.mrb[0].mxu0
        %v3126 = vadd.f32 0.0, %v3125
        %v3127 = vpop.f32.mrb[0].mxu0
        %3128 = vdwg.mxu0
        %v3129 = vpack.c.bf16 %v3094, %v3091
        %v3130 = vpack.c.bf16 %v3102, %v3099
        %v3131 = vpack.c.bf16 %v3110, %v3107
        %v3132 = vpack.c.bf16 %v3118, %v3115
        %v3133 = vpack.c.bf16 %v3126, %v3123
        %3139 = vrot.lane.b32.xlu0 %v3129, 120
        %v3140 = vpop.permute.xlu0 %3139
        %3141 = vrot.lane.b32.xlu0 %v3130, 120
        %v3142 = vpop.permute.xlu0 %3141
        %3143 = vrot.lane.b32.xlu0 %v3131, 120
        %v3144 = vpop.permute.xlu0 %3143
        %3145 = vrot.lane.b32.xlu0 %v3132, 120
        %v3146 = vpop.permute.xlu0 %3145
        %3147 = vrot.lane.b32.xlu0 %v3133, 120
        %v3148 = vpop.permute.xlu0 %3147
        %v3150 = vsel %vm546, %v3129, 0
        %v3153 = vsel %vm546, %v3130, 0
        %v3156 = vsel %vm546, %v3131, 0
        %v3159 = vsel %vm546, %v3132, 0
        %v3162 = vsel %vm546, %v3133, 0
        %v3165 = vsel %vm546, %v3140, 0
        %v3168 = vsel %vm546, %v3142, 0
        %v3171 = vsel %vm546, %v3144, 0
        %v3174 = vsel %vm546, %v3146, 0
        %v3177 = vsel %vm546, %v3148, 0
        %3179 = vmatprep.subr.bf16.mxu0 0
        %3180 = vmatpush1.bf16.xpose.msra.mxu0 %v3165
        %3181 = vmatprep.subr.bf16.mxu0 0
        %3182 = vmatpush1.bf16.xpose.msra.mxu0 %v3168
        %3183 = vmatprep.subr.bf16.mxu0 0
        %3184 = vmatpush1.bf16.xpose.msra.mxu0 %v3171
        %3185 = vmatprep.subr.bf16.mxu0 0
        %3186 = vmatpush1.bf16.xpose.msra.mxu0 %v3174
        %3187 = vmatprep.subr.bf16.mxu0 0
        %3188 = vmatpush1.bf16.xpose.msra.mxu0 %v3177
        %3189 = vmatprep.subr.bf16.mxu0 0
        %3190 = vmatpush1.bf16.xpose.msra.mxu0 0
        %3191 = vmatprep.subr.bf16.mxu0 0
        %3192 = vmatpush1.bf16.xpose.msra.mxu0 0
        %3193 = vmatprep.subr.bf16.mxu0 0
        %3194 = vmatpush1.bf16.xpose.msra.mxu0 0
        %3195 = vmatprep.subr.bf16.mxu0 0
        %3196 = vmatpush1.bf16.xpose.msra.mxu0 0
        %3197 = vmatprep.subr.bf16.mxu0 0
        %3198 = vmatpush1.bf16.xpose.msra.mxu0 0
        %3199 = vmatprep.subr.bf16.mxu0 0
        %3200 = vmatpush1.bf16.xpose.msra.mxu0 0
        %3201 = vmatprep.subr.bf16.mxu0 0
        %3202 = vmatpush1.bf16.xpose.msra.mxu0 0
        %3203 = vmatprep.subr.bf16.mxu0 0
        %3204 = vmatpush1.bf16.xpose.msra.mxu0 0
        %3205 = vmatprep.subr.bf16.mxu0 0
        %3206 = vmatpush1.bf16.xpose.msra.mxu0 0
        %3207 = vmatprep.subr.bf16.mxu0 0
        %3208 = vmatpush1.bf16.xpose.msra.mxu0 0
        %3209 = vmatprep.subr.bf16.mxu0 0
        %3210 = vmatpush1.bf16.xpose.msra.mxu0 0
        %3211 = vmatprep.mubr.bf16.mxu0 0
        %3212 = vmatmul.mubr.bf16.gmra.mrb[0].mxu0 %v3150
        %v3213 = vpop.f32.mrb[0].mxu0
        %v3214 = vadd.f32 0.0, %v3213
        %v3215 = vpop.f32.mrb[0].mxu0
        %v3216 = vpop.f32.mrb[0].mxu0
        %v3217 = vadd.f32 0.0, %v3216
        %v3218 = vpop.f32.mrb[0].mxu0
        %3219 = vmatprep.mubr.bf16.mxu0 0
        %3220 = vmatmul.mubr.bf16.gmra.mrb[0].mxu0 %v3153
        %v3221 = vpop.f32.mrb[0].mxu0
        %v3222 = vadd.f32 0.0, %v3221
        %v3223 = vpop.f32.mrb[0].mxu0
        %v3224 = vpop.f32.mrb[0].mxu0
        %v3225 = vadd.f32 0.0, %v3224
        %v3226 = vpop.f32.mrb[0].mxu0
        %3227 = vmatprep.mubr.bf16.mxu0 0
        %3228 = vmatmul.mubr.bf16.gmra.mrb[0].mxu0 %v3156
        %v3229 = vpop.f32.mrb[0].mxu0
        %v3230 = vadd.f32 0.0, %v3229
        %v3231 = vpop.f32.mrb[0].mxu0
        %v3232 = vpop.f32.mrb[0].mxu0
        %v3233 = vadd.f32 0.0, %v3232
        %v3234 = vpop.f32.mrb[0].mxu0
        %3235 = vmatprep.mubr.bf16.mxu0 0
        %3236 = vmatmul.mubr.bf16.gmra.mrb[0].mxu0 %v3159
        %v3237 = vpop.f32.mrb[0].mxu0
        %v3238 = vadd.f32 0.0, %v3237
        %v3239 = vpop.f32.mrb[0].mxu0
        %v3240 = vpop.f32.mrb[0].mxu0
        %v3241 = vadd.f32 0.0, %v3240
        %v3242 = vpop.f32.mrb[0].mxu0
        %3243 = vmatprep.mubr.bf16.mxu0 0
        %3244 = vmatmul.mubr.bf16.gmra.mrb[0].mxu0 %v3162
        %v3245 = vpop.f32.mrb[0].mxu0
        %v3246 = vadd.f32 0.0, %v3245
        %v3247 = vpop.f32.mrb[0].mxu0
        %v3248 = vpop.f32.mrb[0].mxu0
        %v3249 = vadd.f32 0.0, %v3248
        %v3250 = vpop.f32.mrb[0].mxu0
        %3251 = vdwg.mxu0
        %v3252 = vsel %vm650, %v3214, -inf
        %3253 = vmax.xlane.f32.xlu0 %v3252
        %v3254 = vpop.xlane.xlu0 %3253
        %v3255 = vsel %vm650, %v3217, -inf
        %3256 = vmax.xlane.f32.xlu0 %v3255
        %v3257 = vpop.xlane.xlu0 %3256
        %v3258 = vsel %vm650, %v3222, -inf
        %3259 = vmax.xlane.f32.xlu0 %v3258
        %v3260 = vpop.xlane.xlu0 %3259
        %v3261 = vsel %vm650, %v3225, -inf
        %3262 = vmax.xlane.f32.xlu0 %v3261
        %v3263 = vpop.xlane.xlu0 %3262
        %v3264 = vsel %vm650, %v3230, -inf
        %3265 = vmax.xlane.f32.xlu0 %v3264
        %v3266 = vpop.xlane.xlu0 %3265
        %v3267 = vsel %vm650, %v3233, -inf
        %3268 = vmax.xlane.f32.xlu0 %v3267
        %v3269 = vpop.xlane.xlu0 %3268
        %v3270 = vsel %vm650, %v3238, -inf
        %3271 = vmax.xlane.f32.xlu0 %v3270
        %v3272 = vpop.xlane.xlu0 %3271
        %v3273 = vsel %vm650, %v3241, -inf
        %3274 = vmax.xlane.f32.xlu0 %v3273
        %v3275 = vpop.xlane.xlu0 %3274
        %v3276 = vsel %vm650, %v3246, -inf
        %3277 = vmax.xlane.f32.xlu0 %v3276
        %v3278 = vpop.xlane.xlu0 %3277
        %v3279 = vsel %vm678, %v3249, -inf
        %3280 = vmax.xlane.f32.xlu0 %v3279
        %v3281 = vpop.xlane.xlu0 %3280
        %v3282 = vsub.f32 %v3214, %v3254
        %v3283 = vsub.f32 %v3217, %v3257
        %v3284 = vsub.f32 %v3222, %v3260
        %v3285 = vsub.f32 %v3225, %v3263
        %v3286 = vsub.f32 %v3230, %v3266
        %v3287 = vsub.f32 %v3233, %v3269
        %v3288 = vsub.f32 %v3238, %v3272
        %v3289 = vsub.f32 %v3241, %v3275
        %v3290 = vsub.f32 %v3246, %v3278
        %v3291 = vsub.f32 %v3249, %v3281
        %v3292 = vmul.f32 %v3282, 1.442695
        %v3293 = vpow.pop %v3292
        %v3294 = vmul.f32 %v3283, 1.442695
        %v3295 = vpow.pop %v3294
        %v3296 = vmul.f32 %v3284, 1.442695
        %v3297 = vpow.pop %v3296
        %v3298 = vmul.f32 %v3285, 1.442695
        %v3299 = vpow.pop %v3298
        %v3300 = vmul.f32 %v3286, 1.442695
        %v3301 = vpow.pop %v3300
        %v3302 = vmul.f32 %v3287, 1.442695
        %v3303 = vpow.pop %v3302
        %v3304 = vmul.f32 %v3288, 1.442695
        %v3305 = vpow.pop %v3304
        %v3306 = vmul.f32 %v3289, 1.442695
        %v3307 = vpow.pop %v3306
        %v3308 = vmul.f32 %v3290, 1.442695
        %v3309 = vpow.pop %v3308
        %v3310 = vmul.f32 %v3291, 1.442695
        %v3311 = vpow.pop %v3310
        %v3312 = vsel %vm650, %v3293, 0.0
        %3313 = vadd.xlane.f32.xlu0 %v3312
        %v3314 = vpop.xlane.xlu0 %3313
        %v3315 = vsel %vm650, %v3295, 0.0
        %3316 = vadd.xlane.f32.xlu0 %v3315
        %v3317 = vpop.xlane.xlu0 %3316
        %v3318 = vsel %vm650, %v3297, 0.0
        %3319 = vadd.xlane.f32.xlu0 %v3318
        %v3320 = vpop.xlane.xlu0 %3319
        %v3321 = vsel %vm650, %v3299, 0.0
        %3322 = vadd.xlane.f32.xlu0 %v3321
        %v3323 = vpop.xlane.xlu0 %3322
        %v3324 = vsel %vm650, %v3301, 0.0
        %3325 = vadd.xlane.f32.xlu0 %v3324
        %v3326 = vpop.xlane.xlu0 %3325
        %v3327 = vsel %vm650, %v3303, 0.0
        %3328 = vadd.xlane.f32.xlu0 %v3327
        %v3329 = vpop.xlane.xlu0 %3328
        %v3330 = vsel %vm650, %v3305, 0.0
        %3331 = vadd.xlane.f32.xlu0 %v3330
        %v3332 = vpop.xlane.xlu0 %3331
        %v3333 = vsel %vm650, %v3307, 0.0
        %3334 = vadd.xlane.f32.xlu0 %v3333
        %v3335 = vpop.xlane.xlu0 %3334
        %v3336 = vsel %vm650, %v3309, 0.0
        %3337 = vadd.xlane.f32.xlu0 %v3336
        %v3338 = vpop.xlane.xlu0 %3337
        %v3339 = vsel %vm678, %v3311, 0.0
        %3340 = vadd.xlane.f32.xlu0 %v3339
        %v3341 = vpop.xlane.xlu0 %3340
        %v3342 = vrcp.pop %v3314
        %v3343 = vmul.f32 %v3293, %v3342
        %v3344 = vrcp.pop %v3317
        %v3345 = vmul.f32 %v3295, %v3344
        %v3346 = vrcp.pop %v3320
        %v3347 = vmul.f32 %v3297, %v3346
        %v3348 = vrcp.pop %v3323
        %v3349 = vmul.f32 %v3299, %v3348
        %v3350 = vrcp.pop %v3326
        %v3351 = vmul.f32 %v3301, %v3350
        %v3352 = vrcp.pop %v3329
        %v3353 = vmul.f32 %v3303, %v3352
        %v3354 = vrcp.pop %v3332
        %v3355 = vmul.f32 %v3305, %v3354
        %v3356 = vrcp.pop %v3335
        %v3357 = vmul.f32 %v3307, %v3356
        %v3358 = vrcp.pop %v3338
        %v3359 = vmul.f32 %v3309, %v3358
        %v3360 = vrcp.pop %v3341
        %v3361 = vmul.f32 %v3311, %v3360
        %v3362 = vpack.c.bf16 %v3345, %v3343
        %v3363 = vpack.c.bf16 %v3349, %v3347
        %v3364 = vpack.c.bf16 %v3353, %v3351
        %v3365 = vpack.c.bf16 %v3357, %v3355
        %v3366 = vpack.c.bf16 %v3361, %v3359
        %v3368 = vsel %vm650, %v3362, 0
        %v3371 = vsel %vm650, %v3363, 0
        %v3374 = vsel %vm650, %v3364, 0
        %v3377 = vsel %vm650, %v3365, 0
        %v3380 = vsel %vm650, %v3366, 0
        %v3382 = vsel %vm782, %v3040, 0
        %3384 = vmatprep.subr.bf16.mxu0 0
        %3385 = vmatpush1.bf16.msra.mxu0 %v3036
        %3386 = vmatprep.subr.bf16.mxu0 0
        %3387 = vmatpush1.bf16.msra.mxu0 %v3037
        %3388 = vmatprep.subr.bf16.mxu0 0
        %3389 = vmatpush1.bf16.msra.mxu0 %v3038
        %3390 = vmatprep.subr.bf16.mxu0 0
        %3391 = vmatpush1.bf16.msra.mxu0 %v3039
        %3392 = vmatprep.subr.bf16.mxu0 0
        %3393 = vmatpush1.bf16.msra.mxu0 %v3382
        %3394 = vmatprep.subr.bf16.mxu0 0
        %3395 = vmatpush1.bf16.msra.mxu0 0
        %3396 = vmatprep.subr.bf16.mxu0 0
        %3397 = vmatpush1.bf16.msra.mxu0 0
        %3398 = vmatprep.subr.bf16.mxu0 0
        %3399 = vmatpush1.bf16.msra.mxu0 0
        %3400 = vmatprep.subr.bf16.mxu0 0
        %3401 = vmatpush1.bf16.msra.mxu0 0
        %3402 = vmatprep.subr.bf16.mxu0 0
        %3403 = vmatpush1.bf16.msra.mxu0 0
        %3404 = vmatprep.subr.bf16.mxu0 0
        %3405 = vmatpush1.bf16.msra.mxu0 0
        %3406 = vmatprep.subr.bf16.mxu0 0
        %3407 = vmatpush1.bf16.msra.mxu0 0
        %3408 = vmatprep.subr.bf16.mxu0 0
        %3409 = vmatpush1.bf16.msra.mxu0 0
        %3410 = vmatprep.subr.bf16.mxu0 0
        %3411 = vmatpush1.bf16.msra.mxu0 0
        %3412 = vmatprep.subr.bf16.mxu0 0
        %3413 = vmatpush1.bf16.msra.mxu0 0
        %3414 = vmatprep.subr.bf16.mxu0 0
        %3415 = vmatpush1.bf16.msra.mxu0 0
        %3416 = vmatprep.mubr.bf16.mxu0 0
        %3417 = vmatmul.mubr.bf16.gmra.mrb[0].mxu0 %v3368
        %v3418 = vpop.f32.mrb[0].mxu0
        %v3419 = vadd.f32 0.0, %v3418
        %v3420 = vpop.f32.mrb[0].mxu0
        %v3421 = vpop.f32.mrb[0].mxu0
        %v3422 = vadd.f32 0.0, %v3421
        %v3423 = vpop.f32.mrb[0].mxu0
        %3424 = vmatprep.mubr.bf16.mxu0 0
        %3425 = vmatmul.mubr.bf16.gmra.mrb[0].mxu0 %v3371
        %v3426 = vpop.f32.mrb[0].mxu0
        %v3427 = vadd.f32 0.0, %v3426
        %v3428 = vpop.f32.mrb[0].mxu0
        %v3429 = vpop.f32.mrb[0].mxu0
        %v3430 = vadd.f32 0.0, %v3429
        %v3431 = vpop.f32.mrb[0].mxu0
        %3432 = vmatprep.mubr.bf16.mxu0 0
        %3433 = vmatmul.mubr.bf16.gmra.mrb[0].mxu0 %v3374
        %v3434 = vpop.f32.mrb[0].mxu0
        %v3435 = vadd.f32 0.0, %v3434
        %v3436 = vpop.f32.mrb[0].mxu0
        %v3437 = vpop.f32.mrb[0].mxu0
        %v3438 = vadd.f32 0.0, %v3437
        %v3439 = vpop.f32.mrb[0].mxu0
        %3440 = vmatprep.mubr.bf16.mxu0 0
        %3441 = vmatmul.mubr.bf16.gmra.mrb[0].mxu0 %v3377
        %v3442 = vpop.f32.mrb[0].mxu0
        %v3443 = vadd.f32 0.0, %v3442
        %v3444 = vpop.f32.mrb[0].mxu0
        %v3445 = vpop.f32.mrb[0].mxu0
        %v3446 = vadd.f32 0.0, %v3445
        %v3447 = vpop.f32.mrb[0].mxu0
        %3448 = vmatprep.mubr.bf16.mxu0 0
        %3449 = vmatmul.mubr.bf16.gmra.mrb[0].mxu0 %v3380
        %v3450 = vpop.f32.mrb[0].mxu0
        %v3451 = vadd.f32 0.0, %v3450
        %v3452 = vpop.f32.mrb[0].mxu0
        %v3453 = vpop.f32.mrb[0].mxu0
        %v3454 = vadd.f32 0.0, %v3453
        %v3455 = vpop.f32.mrb[0].mxu0
        %3456 = vdwg.mxu0
        %v3457 = vpack.c.bf16 %v3422, %v3419
        %v3458 = vpack.c.bf16 %v3430, %v3427
        %v3459 = vpack.c.bf16 %v3438, %v3435
        %v3460 = vpack.c.bf16 %v3446, %v3443
        %v3461 = vpack.c.bf16 %v3454, %v3451
        %v3463 = vsel %vm782, %v3461, 0
        %3465 = vmatprep.subr.bf16.mxu0 0
        %3466 = vmatpush1.bf16.msra.mxu0 %v3457
        %3467 = vmatprep.subr.bf16.mxu0 0
        %3468 = vmatpush1.bf16.msra.mxu0 %v3458
        %3469 = vmatprep.subr.bf16.mxu0 0
        %3470 = vmatpush1.bf16.msra.mxu0 %v3459
        %3471 = vmatprep.subr.bf16.mxu0 0
        %3472 = vmatpush1.bf16.msra.mxu0 %v3460
        %3473 = vmatprep.subr.bf16.mxu0 0
        %3474 = vmatpush1.bf16.msra.mxu0 %v3463
        %3475 = vmatprep.subr.bf16.mxu0 0
        %3476 = vmatpush1.bf16.msra.mxu0 0
        %3477 = vmatprep.subr.bf16.mxu0 0
        %3478 = vmatpush1.bf16.msra.mxu0 0
        %3479 = vmatprep.subr.bf16.mxu0 0
        %3480 = vmatpush1.bf16.msra.mxu0 0
        %3481 = vmatprep.subr.bf16.mxu0 0
        %3482 = vmatpush1.bf16.msra.mxu0 0
        %3483 = vmatprep.subr.bf16.mxu0 0
        %3484 = vmatpush1.bf16.msra.mxu0 0
        %3485 = vmatprep.subr.bf16.mxu0 0
        %3486 = vmatpush1.bf16.msra.mxu0 0
        %3487 = vmatprep.subr.bf16.mxu0 0
        %3488 = vmatpush1.bf16.msra.mxu0 0
        %3489 = vmatprep.subr.bf16.mxu0 0
        %3490 = vmatpush1.bf16.msra.mxu0 0
        %3491 = vmatprep.subr.bf16.mxu0 0
        %3492 = vmatpush1.bf16.msra.mxu0 0
        %3493 = vmatprep.subr.bf16.mxu0 0
        %3494 = vmatpush1.bf16.msra.mxu0 0
        %3495 = vmatprep.subr.bf16.mxu0 0
        %3496 = vmatpush1.bf16.msra.mxu0 0
        %3497 = vmatprep.mubr.bf16.mxu0 0
        %3498 = vmatmul.mubr.bf16.gmra.mrb[0].mxu0 %v3368
        %v3499 = vpop.f32.mrb[0].mxu0
        %v3500 = vadd.f32 0.0, %v3499
        %v3501 = vpop.f32.mrb[0].mxu0
        %v3502 = vpop.f32.mrb[0].mxu0
        %v3503 = vadd.f32 0.0, %v3502
        %v3504 = vpop.f32.mrb[0].mxu0
        %3505 = vmatprep.mubr.bf16.mxu0 0
        %3506 = vmatmul.mubr.bf16.gmra.mrb[0].mxu0 %v3371
        %v3507 = vpop.f32.mrb[0].mxu0
        %v3508 = vadd.f32 0.0, %v3507
        %v3509 = vpop.f32.mrb[0].mxu0
        %v3510 = vpop.f32.mrb[0].mxu0
        %v3511 = vadd.f32 0.0, %v3510
        %v3512 = vpop.f32.mrb[0].mxu0
        %3513 = vmatprep.mubr.bf16.mxu0 0
        %3514 = vmatmul.mubr.bf16.gmra.mrb[0].mxu0 %v3374
        %v3515 = vpop.f32.mrb[0].mxu0
        %v3516 = vadd.f32 0.0, %v3515
        %v3517 = vpop.f32.mrb[0].mxu0
        %v3518 = vpop.f32.mrb[0].mxu0
        %v3519 = vadd.f32 0.0, %v3518
        %v3520 = vpop.f32.mrb[0].mxu0
        %3521 = vmatprep.mubr.bf16.mxu0 0
        %3522 = vmatmul.mubr.bf16.gmra.mrb[0].mxu0 %v3377
        %v3523 = vpop.f32.mrb[0].mxu0
        %v3524 = vadd.f32 0.0, %v3523
        %v3525 = vpop.f32.mrb[0].mxu0
        %v3526 = vpop.f32.mrb[0].mxu0
        %v3527 = vadd.f32 0.0, %v3526
        %v3528 = vpop.f32.mrb[0].mxu0
        %3529 = vmatprep.mubr.bf16.mxu0 0
        %3530 = vmatmul.mubr.bf16.gmra.mrb[0].mxu0 %v3380
        %v3531 = vpop.f32.mrb[0].mxu0
        %v3532 = vadd.f32 0.0, %v3531
        %v3533 = vpop.f32.mrb[0].mxu0
        %v3534 = vpop.f32.mrb[0].mxu0
        %v3535 = vadd.f32 0.0, %v3534
        %v3536 = vpop.f32.mrb[0].mxu0
        %3537 = vdwg.mxu0
        %3548 = vrot.lane.b32.xlu0 %v3419, 32
        %v3549 = vpop.permute.xlu0 %3548
        %3550 = vrot.lane.b32.xlu0 %v3422, 32
        %v3551 = vpop.permute.xlu0 %3550
        %3552 = vrot.lane.b32.xlu0 %v3427, 32
        %v3553 = vpop.permute.xlu0 %3552
        %3554 = vrot.lane.b32.xlu0 %v3430, 32
        %v3555 = vpop.permute.xlu0 %3554
        %3556 = vrot.lane.b32.xlu0 %v3435, 32
        %v3557 = vpop.permute.xlu0 %3556
        %3558 = vrot.lane.b32.xlu0 %v3438, 32
        %v3559 = vpop.permute.xlu0 %3558
        %3560 = vrot.lane.b32.xlu0 %v3443, 32
        %v3561 = vpop.permute.xlu0 %3560
        %3562 = vrot.lane.b32.xlu0 %v3446, 32
        %v3563 = vpop.permute.xlu0 %3562
        %3564 = vrot.lane.b32.xlu0 %v3451, 32
        %v3565 = vpop.permute.xlu0 %3564
        %3566 = vrot.lane.b32.xlu0 %v3454, 32
        %v3567 = vpop.permute.xlu0 %3566
        %3588 = vrot.lane.b32.xlu0 %v3500, 64
        %v3589 = vpop.permute.xlu0 %3588
        %3590 = vrot.lane.b32.xlu0 %v3503, 64
        %v3591 = vpop.permute.xlu0 %3590
        %3592 = vrot.lane.b32.xlu0 %v3508, 64
        %v3593 = vpop.permute.xlu0 %3592
        %3594 = vrot.lane.b32.xlu0 %v3511, 64
        %v3595 = vpop.permute.xlu0 %3594
        %3596 = vrot.lane.b32.xlu0 %v3516, 64
        %v3597 = vpop.permute.xlu0 %3596
        %3598 = vrot.lane.b32.xlu0 %v3519, 64
        %v3599 = vpop.permute.xlu0 %3598
        %3600 = vrot.lane.b32.xlu0 %v3524, 64
        %v3601 = vpop.permute.xlu0 %3600
        %3602 = vrot.lane.b32.xlu0 %v3527, 64
        %v3603 = vpop.permute.xlu0 %3602
        %3604 = vrot.lane.b32.xlu0 %v3532, 64
        %v3605 = vpop.permute.xlu0 %3604
        %3606 = vrot.lane.b32.xlu0 %v3535, 64
        %v3607 = vpop.permute.xlu0 %3606
        %v3618 = vsel %vm437, %v3026, %v3549
        %v3619 = vsel %vm437, %v3027, %v3551
        %v3620 = vsel %vm437, %v3028, %v3553
        %v3621 = vsel %vm437, %v3029, %v3555
        %v3622 = vsel %vm437, %v3030, %v3557
        %v3623 = vsel %vm437, %v3031, %v3559
        %v3624 = vsel %vm437, %v3032, %v3561
        %v3625 = vsel %vm437, %v3033, %v3563
        %v3626 = vsel %vm437, %v3034, %v3565
        %v3627 = vsel %vm437, %v3035, %v3567
        %v3628 = vsel %vm1029, %v3618, %v3589
        %v3629 = vsel %vm1029, %v3619, %v3591
        %v3630 = vsel %vm1029, %v3620, %v3593
        %v3631 = vsel %vm1029, %v3621, %v3595
        %v3632 = vsel %vm1029, %v3622, %v3597
        %v3633 = vsel %vm1029, %v3623, %v3599
        %v3634 = vsel %vm1029, %v3624, %v3601
        %v3635 = vsel %vm1029, %v3625, %v3603
        %v3636 = vsel %vm1029, %v3626, %v3605
        %v3637 = vsel %vm1029, %v3627, %v3607
        %v3638 = vpack.c.bf16 %v3629, %v3628
        %v3639 = vpack.c.bf16 %v3631, %v3630
        %v3640 = vpack.c.bf16 %v3633, %v3632
        %v3641 = vpack.c.bf16 %v3635, %v3634
        %v3642 = vpack.c.bf16 %v3637, %v3636
        %v3644 = vsel %vm1051, %v3638, 0
        %v3647 = vsel %vm1051, %v3639, 0
        %v3650 = vsel %vm1051, %v3640, 0
        %v3653 = vsel %vm1051, %v3641, 0
        %v3656 = vsel %vm1051, %v3642, 0
        %3658 = vmatprep.subr.bf16.mxu0 0
        %3659 = vmatpush1.bf16.msra.mxu0 %v1045
        %3660 = vmatprep.subr.bf16.mxu0 0
        %3661 = vmatpush1.bf16.msra.mxu0 %v1046
        %3662 = vmatprep.subr.bf16.mxu0 0
        %3663 = vmatpush1.bf16.msra.mxu0 %v1047
        %3664 = vmatprep.subr.bf16.mxu0 0
        %3665 = vmatpush1.bf16.msra.mxu0 %v1048
        %3666 = vmatprep.subr.bf16.mxu0 0
        %3667 = vmatpush1.bf16.msra.mxu0 %v1049
        %3668 = vmatprep.subr.bf16.mxu0 0
        %3669 = vmatpush1.bf16.msra.mxu0 %v1050
        %3670 = vmatprep.subr.bf16.mxu0 0
        %3671 = vmatpush1.bf16.msra.mxu0 0
        %3672 = vmatprep.subr.bf16.mxu0 0
        %3673 = vmatpush1.bf16.msra.mxu0 0
        %3674 = vmatprep.subr.bf16.mxu0 0
        %3675 = vmatpush1.bf16.msra.mxu0 0
        %3676 = vmatprep.subr.bf16.mxu0 0
        %3677 = vmatpush1.bf16.msra.mxu0 0
        %3678 = vmatprep.subr.bf16.mxu0 0
        %3679 = vmatpush1.bf16.msra.mxu0 0
        %3680 = vmatprep.subr.bf16.mxu0 0
        %3681 = vmatpush1.bf16.msra.mxu0 0
        %3682 = vmatprep.subr.bf16.mxu0 0
        %3683 = vmatpush1.bf16.msra.mxu0 0
        %3684 = vmatprep.subr.bf16.mxu0 0
        %3685 = vmatpush1.bf16.msra.mxu0 0
        %3686 = vmatprep.subr.bf16.mxu0 0
        %3687 = vmatpush1.bf16.msra.mxu0 0
        %3688 = vmatprep.subr.bf16.mxu0 0
        %3689 = vmatpush1.bf16.msra.mxu0 0
        %3690 = vmatprep.mubr.bf16.mxu0 0
        %3691 = vmatmul.mubr.bf16.gmra.mrb[0].mxu0 %v3644
        %v3692 = vpop.f32.mrb[0].mxu0
        %v3693 = vadd.f32 0.0, %v3692
        %v3694 = vpop.f32.mrb[0].mxu0
        %v3695 = vpop.f32.mrb[0].mxu0
        %v3696 = vadd.f32 0.0, %v3695
        %v3697 = vpop.f32.mrb[0].mxu0
        %3698 = vmatprep.mubr.bf16.mxu0 0
        %3699 = vmatmul.mubr.bf16.gmra.mrb[0].mxu0 %v3647
        %v3700 = vpop.f32.mrb[0].mxu0
        %v3701 = vadd.f32 0.0, %v3700
        %v3702 = vpop.f32.mrb[0].mxu0
        %v3703 = vpop.f32.mrb[0].mxu0
        %v3704 = vadd.f32 0.0, %v3703
        %v3705 = vpop.f32.mrb[0].mxu0
        %3706 = vmatprep.mubr.bf16.mxu0 0
        %3707 = vmatmul.mubr.bf16.gmra.mrb[0].mxu0 %v3650
        %v3708 = vpop.f32.mrb[0].mxu0
        %v3709 = vadd.f32 0.0, %v3708
        %v3710 = vpop.f32.mrb[0].mxu0
        %v3711 = vpop.f32.mrb[0].mxu0
        %v3712 = vadd.f32 0.0, %v3711
        %v3713 = vpop.f32.mrb[0].mxu0
        %3714 = vmatprep.mubr.bf16.mxu0 0
        %3715 = vmatmul.mubr.bf16.gmra.mrb[0].mxu0 %v3653
        %v3716 = vpop.f32.mrb[0].mxu0
        %v3717 = vadd.f32 0.0, %v3716
        %v3718 = vpop.f32.mrb[0].mxu0
        %v3719 = vpop.f32.mrb[0].mxu0
        %v3720 = vadd.f32 0.0, %v3719
        %v3721 = vpop.f32.mrb[0].mxu0
        %3722 = vmatprep.mubr.bf16.mxu0 0
        %3723 = vmatmul.mubr.bf16.gmra.mrb[0].mxu0 %v3656
        %v3724 = vpop.f32.mrb[0].mxu0
        %v3725 = vadd.f32 0.0, %v3724
        %v3726 = vpop.f32.mrb[0].mxu0
        %v3727 = vpop.f32.mrb[0].mxu0
        %v3728 = vadd.f32 0.0, %v3727
        %v3729 = vpop.f32.mrb[0].mxu0
        %3730 = vdwg.mxu0
        %v3731 = vmax.f32 %v3693, 0.0
        %v3732 = vmax.f32 %v3696, 0.0
        %v3733 = vmax.f32 %v3701, 0.0
        %v3734 = vmax.f32 %v3704, 0.0
        %v3735 = vmax.f32 %v3709, 0.0
        %v3736 = vmax.f32 %v3712, 0.0
        %v3737 = vmax.f32 %v3717, 0.0
        %v3738 = vmax.f32 %v3720, 0.0
        %v3739 = vmax.f32 %v3725, 0.0
        %v3740 = vmax.f32 %v3728, 0.0
        %v3741 = vmul.f32 %v382, %v3026
        %v3742 = vmul.f32 %v383, %v3027
        %v3743 = vmul.f32 %v384, %v3028
        %v3744 = vmul.f32 %v385, %v3029
        %v3745 = vmul.f32 %v386, %v3030
        %v3746 = vmul.f32 %v387, %v3031
        %v3747 = vmul.f32 %v388, %v3032
        %v3748 = vmul.f32 %v389, %v3033
        %v3749 = vmul.f32 %v390, %v3034
        %v3750 = vmul.f32 %v391, %v3035
        %v3751 = vmax.f32 %v3741, 0.0
        %v3752 = vmax.f32 %v3742, 0.0
        %v3753 = vmax.f32 %v3743, 0.0
        %v3754 = vmax.f32 %v3744, 0.0
        %v3755 = vmax.f32 %v3745, 0.0
        %v3756 = vmax.f32 %v3746, 0.0
        %v3757 = vmax.f32 %v3747, 0.0
        %v3758 = vmax.f32 %v3748, 0.0
        %v3759 = vmax.f32 %v3749, 0.0
        %v3760 = vmax.f32 %v3750, 0.0
        %v3761 = vpack.c.bf16 %v3752, %v3751
        %v3762 = vpack.c.bf16 %v3754, %v3753
        %v3763 = vpack.c.bf16 %v3756, %v3755
        %v3764 = vpack.c.bf16 %v3758, %v3757
        %v3765 = vpack.c.bf16 %v3760, %v3759
        %v3767 = vsel %vm782, %v3765, 0
        %3769 = vmatprep.subr.bf16.mxu0 0
        %3770 = vmatpush1.bf16.msra.mxu0 %v3761
        %3771 = vmatprep.subr.bf16.mxu0 0
        %3772 = vmatpush1.bf16.msra.mxu0 %v3762
        %3773 = vmatprep.subr.bf16.mxu0 0
        %3774 = vmatpush1.bf16.msra.mxu0 %v3763
        %3775 = vmatprep.subr.bf16.mxu0 0
        %3776 = vmatpush1.bf16.msra.mxu0 %v3764
        %3777 = vmatprep.subr.bf16.mxu0 0
        %3778 = vmatpush1.bf16.msra.mxu0 %v3767
        %3779 = vmatprep.subr.bf16.mxu0 0
        %3780 = vmatpush1.bf16.msra.mxu0 0
        %3781 = vmatprep.subr.bf16.mxu0 0
        %3782 = vmatpush1.bf16.msra.mxu0 0
        %3783 = vmatprep.subr.bf16.mxu0 0
        %3784 = vmatpush1.bf16.msra.mxu0 0
        %3785 = vmatprep.subr.bf16.mxu0 0
        %3786 = vmatpush1.bf16.msra.mxu0 0
        %3787 = vmatprep.subr.bf16.mxu0 0
        %3788 = vmatpush1.bf16.msra.mxu0 0
        %3789 = vmatprep.subr.bf16.mxu0 0
        %3790 = vmatpush1.bf16.msra.mxu0 0
        %3791 = vmatprep.subr.bf16.mxu0 0
        %3792 = vmatpush1.bf16.msra.mxu0 0
        %3793 = vmatprep.subr.bf16.mxu0 0
        %3794 = vmatpush1.bf16.msra.mxu0 0
        %3795 = vmatprep.subr.bf16.mxu0 0
        %3796 = vmatpush1.bf16.msra.mxu0 0
        %3797 = vmatprep.subr.bf16.mxu0 0
        %3798 = vmatpush1.bf16.msra.mxu0 0
        %3799 = vmatprep.subr.bf16.mxu0 0
        %3800 = vmatpush1.bf16.msra.mxu0 0
        %3801 = vmatprep.mubr.bf16.mxu0 0
        %3802 = vmatmul.mubr.bf16.gmra.mrb[0].mxu0 %v1178
        %v3803 = vpop.f32.mrb[0].mxu0
        %v3804 = vadd.f32 0.0, %v3803
        %v3805 = vpop.f32.mrb[0].mxu0
        %v3806 = vpop.f32.mrb[0].mxu0
        %v3807 = vadd.f32 0.0, %v3806
        %v3808 = vpop.f32.mrb[0].mxu0
        %3809 = vmatprep.mubr.bf16.mxu0 0
        %3810 = vmatmul.mubr.bf16.gmra.mrb[0].mxu0 %v1181
        %v3811 = vpop.f32.mrb[0].mxu0
        %v3812 = vadd.f32 0.0, %v3811
        %v3813 = vpop.f32.mrb[0].mxu0
        %v3814 = vpop.f32.mrb[0].mxu0
        %v3815 = vadd.f32 0.0, %v3814
        %v3816 = vpop.f32.mrb[0].mxu0
        %3817 = vdwg.mxu0
        %v3818 = vpack.c.bf16 %v3807, %v3804
        %v3819 = vpack.c.bf16 %v3815, %v3812
        %v3821 = vsel %vm437, %v3818, 0
        %v3824 = vsel %vm437, %v3819, 0
        %3826 = vmatprep.subr.bf16.mxu0 0
        %3827 = vmatpush1.bf16.msra.mxu0 %v1237
        %3828 = vmatprep.subr.bf16.mxu0 0
        %3829 = vmatpush1.bf16.msra.mxu0 %v1238
        %3830 = vmatprep.subr.bf16.mxu0 0
        %3831 = vmatpush1.bf16.msra.mxu0 0
        %3832 = vmatprep.subr.bf16.mxu0 0
        %3833 = vmatpush1.bf16.msra.mxu0 0
        %3834 = vmatprep.subr.bf16.mxu0 0
        %3835 = vmatpush1.bf16.msra.mxu0 0
        %3836 = vmatprep.subr.bf16.mxu0 0
        %3837 = vmatpush1.bf16.msra.mxu0 0
        %3838 = vmatprep.subr.bf16.mxu0 0
        %3839 = vmatpush1.bf16.msra.mxu0 0
        %3840 = vmatprep.subr.bf16.mxu0 0
        %3841 = vmatpush1.bf16.msra.mxu0 0
        %3842 = vmatprep.subr.bf16.mxu0 0
        %3843 = vmatpush1.bf16.msra.mxu0 0
        %3844 = vmatprep.subr.bf16.mxu0 0
        %3845 = vmatpush1.bf16.msra.mxu0 0
        %3846 = vmatprep.subr.bf16.mxu0 0
        %3847 = vmatpush1.bf16.msra.mxu0 0
        %3848 = vmatprep.subr.bf16.mxu0 0
        %3849 = vmatpush1.bf16.msra.mxu0 0
        %3850 = vmatprep.subr.bf16.mxu0 0
        %3851 = vmatpush1.bf16.msra.mxu0 0
        %3852 = vmatprep.subr.bf16.mxu0 0
        %3853 = vmatpush1.bf16.msra.mxu0 0
        %3854 = vmatprep.subr.bf16.mxu0 0
        %3855 = vmatpush1.bf16.msra.mxu0 0
        %3856 = vmatprep.subr.bf16.mxu0 0
        %3857 = vmatpush1.bf16.msra.mxu0 0
        %3858 = vmatprep.mubr.bf16.mxu0 0
        %3859 = vmatmul.mubr.bf16.gmra.mrb[0].mxu0 %v3821
        %v3860 = vpop.f32.mrb[0].mxu0
        %v3861 = vadd.f32 0.0, %v3860
        %v3862 = vpop.f32.mrb[0].mxu0
        %v3863 = vpop.f32.mrb[0].mxu0
        %v3864 = vadd.f32 0.0, %v3863
        %v3865 = vpop.f32.mrb[0].mxu0
        %3866 = vmatprep.mubr.bf16.mxu0 0
        %3867 = vmatmul.mubr.bf16.gmra.mrb[0].mxu0 %v3824
        %v3868 = vpop.f32.mrb[0].mxu0
        %v3869 = vadd.f32 0.0, %v3868
        %v3870 = vpop.f32.mrb[0].mxu0
        %v3871 = vpop.f32.mrb[0].mxu0
        %v3872 = vadd.f32 0.0, %v3871
        %v3873 = vpop.f32.mrb[0].mxu0
        %3874 = vdwg.mxu0
        %v3875 = vpack.c.bf16 %v3864, %v3861
        %v3876 = vpack.c.bf16 %v3872, %v3869
        %3879 = vrot.lane.b32.xlu0 %v3875, 120
        %v3880 = vpop.permute.xlu0 %3879
        %3881 = vrot.lane.b32.xlu0 %v3876, 120
        %v3882 = vpop.permute.xlu0 %3881
        %v3884 = vsel %vm546, %v3875, 0
        %v3887 = vsel %vm546, %v3876, 0
        %v3890 = vsel %vm546, %v3880, 0
        %v3893 = vsel %vm546, %v3882, 0
        %3895 = vmatprep.subr.bf16.mxu0 0
        %3896 = vmatpush1.bf16.xpose.msra.mxu0 %v3890
        %3897 = vmatprep.subr.bf16.mxu0 0
        %3898 = vmatpush1.bf16.xpose.msra.mxu0 %v3893
        %3899 = vmatprep.subr.bf16.mxu0 0
        %3900 = vmatpush1.bf16.xpose.msra.mxu0 0
        %3901 = vmatprep.subr.bf16.mxu0 0
        %3902 = vmatpush1.bf16.xpose.msra.mxu0 0
        %3903 = vmatprep.subr.bf16.mxu0 0
        %3904 = vmatpush1.bf16.xpose.msra.mxu0 0
        %3905 = vmatprep.subr.bf16.mxu0 0
        %3906 = vmatpush1.bf16.xpose.msra.mxu0 0
        %3907 = vmatprep.subr.bf16.mxu0 0
        %3908 = vmatpush1.bf16.xpose.msra.mxu0 0
        %3909 = vmatprep.subr.bf16.mxu0 0
        %3910 = vmatpush1.bf16.xpose.msra.mxu0 0
        %3911 = vmatprep.subr.bf16.mxu0 0
        %3912 = vmatpush1.bf16.xpose.msra.mxu0 0
        %3913 = vmatprep.subr.bf16.mxu0 0
        %3914 = vmatpush1.bf16.xpose.msra.mxu0 0
        %3915 = vmatprep.subr.bf16.mxu0 0
        %3916 = vmatpush1.bf16.xpose.msra.mxu0 0
        %3917 = vmatprep.subr.bf16.mxu0 0
        %3918 = vmatpush1.bf16.xpose.msra.mxu0 0
        %3919 = vmatprep.subr.bf16.mxu0 0
        %3920 = vmatpush1.bf16.xpose.msra.mxu0 0
        %3921 = vmatprep.subr.bf16.mxu0 0
        %3922 = vmatpush1.bf16.xpose.msra.mxu0 0
        %3923 = vmatprep.subr.bf16.mxu0 0
        %3924 = vmatpush1.bf16.xpose.msra.mxu0 0
        %3925 = vmatprep.subr.bf16.mxu0 0
        %3926 = vmatpush1.bf16.xpose.msra.mxu0 0
        %3927 = vmatprep.mubr.bf16.mxu0 0
        %3928 = vmatmul.mubr.bf16.gmra.mrb[0].mxu0 %v3884
        %v3929 = vpop.f32.mrb[0].mxu0
        %v3930 = vadd.f32 0.0, %v3929
        %v3931 = vpop.f32.mrb[0].mxu0
        %v3932 = vpop.f32.mrb[0].mxu0
        %v3933 = vadd.f32 0.0, %v3932
        %v3934 = vpop.f32.mrb[0].mxu0
        %3935 = vmatprep.mubr.bf16.mxu0 0
        %3936 = vmatmul.mubr.bf16.gmra.mrb[0].mxu0 %v3887
        %v3937 = vpop.f32.mrb[0].mxu0
        %v3938 = vadd.f32 0.0, %v3937
        %v3939 = vpop.f32.mrb[0].mxu0
        %v3940 = vpop.f32.mrb[0].mxu0
        %v3941 = vadd.f32 0.0, %v3940
        %v3942 = vpop.f32.mrb[0].mxu0
        %3943 = vdwg.mxu0
        %v3944 = vsel %vm1363, %v3930, -inf
        %3945 = vmax.xlane.f32.xlu0 %v3944
        %v3946 = vpop.xlane.xlu0 %3945
        %v3947 = vsel %vm1363, %v3933, -inf
        %3948 = vmax.xlane.f32.xlu0 %v3947
        %v3949 = vpop.xlane.xlu0 %3948
        %v3950 = vsel %vm1363, %v3938, -inf
        %3951 = vmax.xlane.f32.xlu0 %v3950
        %v3952 = vpop.xlane.xlu0 %3951
        %v3953 = vsel %vm1373, %v3941, -inf
        %3954 = vmax.xlane.f32.xlu0 %v3953
        %v3955 = vpop.xlane.xlu0 %3954
        %v3956 = vsub.f32 %v3930, %v3946
        %v3957 = vsub.f32 %v3933, %v3949
        %v3958 = vsub.f32 %v3938, %v3952
        %v3959 = vsub.f32 %v3941, %v3955
        %v3960 = vmul.f32 %v3956, 1.442695
        %v3961 = vpow.pop %v3960
        %v3962 = vmul.f32 %v3957, 1.442695
        %v3963 = vpow.pop %v3962
        %v3964 = vmul.f32 %v3958, 1.442695
        %v3965 = vpow.pop %v3964
        %v3966 = vmul.f32 %v3959, 1.442695
        %v3967 = vpow.pop %v3966
        %v3968 = vsel %vm1363, %v3961, 0.0
        %3969 = vadd.xlane.f32.xlu0 %v3968
        %v3970 = vpop.xlane.xlu0 %3969
        %v3971 = vsel %vm1363, %v3963, 0.0
        %3972 = vadd.xlane.f32.xlu0 %v3971
        %v3973 = vpop.xlane.xlu0 %3972
        %v3974 = vsel %vm1363, %v3965, 0.0
        %3975 = vadd.xlane.f32.xlu0 %v3974
        %v3976 = vpop.xlane.xlu0 %3975
        %v3977 = vsel %vm1373, %v3967, 0.0
        %3978 = vadd.xlane.f32.xlu0 %v3977
        %v3979 = vpop.xlane.xlu0 %3978
        %v3980 = vrcp.pop %v3970
        %v3981 = vmul.f32 %v3961, %v3980
        %v3982 = vrcp.pop %v3973
        %v3983 = vmul.f32 %v3963, %v3982
        %v3984 = vrcp.pop %v3976
        %v3985 = vmul.f32 %v3965, %v3984
        %v3986 = vrcp.pop %v3979
        %v3987 = vmul.f32 %v3967, %v3986
        %v3988 = vpack.c.bf16 %v3983, %v3981
        %v3989 = vpack.c.bf16 %v3987, %v3985
        %v3991 = vsel %vm1363, %v3988, 0
        %v3994 = vsel %vm1363, %v3989, 0
        %v3996 = vsel %vm782, %v3819, 0
        %3998 = vmatprep.subr.bf16.mxu0 0
        %3999 = vmatpush1.bf16.msra.mxu0 %v3818
        %4000 = vmatprep.subr.bf16.mxu0 0
        %4001 = vmatpush1.bf16.msra.mxu0 %v3996
        %4002 = vmatprep.subr.bf16.mxu0 0
        %4003 = vmatpush1.bf16.msra.mxu0 0
        %4004 = vmatprep.subr.bf16.mxu0 0
        %4005 = vmatpush1.bf16.msra.mxu0 0
        %4006 = vmatprep.subr.bf16.mxu0 0
        %4007 = vmatpush1.bf16.msra.mxu0 0
        %4008 = vmatprep.subr.bf16.mxu0 0
        %4009 = vmatpush1.bf16.msra.mxu0 0
        %4010 = vmatprep.subr.bf16.mxu0 0
        %4011 = vmatpush1.bf16.msra.mxu0 0
        %4012 = vmatprep.subr.bf16.mxu0 0
        %4013 = vmatpush1.bf16.msra.mxu0 0
        %4014 = vmatprep.subr.bf16.mxu0 0
        %4015 = vmatpush1.bf16.msra.mxu0 0
        %4016 = vmatprep.subr.bf16.mxu0 0
        %4017 = vmatpush1.bf16.msra.mxu0 0
        %4018 = vmatprep.subr.bf16.mxu0 0
        %4019 = vmatpush1.bf16.msra.mxu0 0
        %4020 = vmatprep.subr.bf16.mxu0 0
        %4021 = vmatpush1.bf16.msra.mxu0 0
        %4022 = vmatprep.subr.bf16.mxu0 0
        %4023 = vmatpush1.bf16.msra.mxu0 0
        %4024 = vmatprep.subr.bf16.mxu0 0
        %4025 = vmatpush1.bf16.msra.mxu0 0
        %4026 = vmatprep.subr.bf16.mxu0 0
        %4027 = vmatpush1.bf16.msra.mxu0 0
        %4028 = vmatprep.subr.bf16.mxu0 0
        %4029 = vmatpush1.bf16.msra.mxu0 0
        %4030 = vmatprep.mubr.bf16.mxu0 0
        %4031 = vmatmul.mubr.bf16.gmra.mrb[0].mxu0 %v3991
        %v4032 = vpop.f32.mrb[0].mxu0
        %v4033 = vadd.f32 0.0, %v4032
        %v4034 = vpop.f32.mrb[0].mxu0
        %v4035 = vpop.f32.mrb[0].mxu0
        %v4036 = vadd.f32 0.0, %v4035
        %v4037 = vpop.f32.mrb[0].mxu0
        %4038 = vmatprep.mubr.bf16.mxu0 0
        %4039 = vmatmul.mubr.bf16.gmra.mrb[0].mxu0 %v3994
        %v4040 = vpop.f32.mrb[0].mxu0
        %v4041 = vadd.f32 0.0, %v4040
        %v4042 = vpop.f32.mrb[0].mxu0
        %v4043 = vpop.f32.mrb[0].mxu0
        %v4044 = vadd.f32 0.0, %v4043
        %v4045 = vpop.f32.mrb[0].mxu0
        %4046 = vdwg.mxu0
        %4051 = vrot.lane.b32.xlu0 %v4033, 32
        %v4052 = vpop.permute.xlu0 %4051
        %4053 = vrot.lane.b32.xlu0 %v4036, 32
        %v4054 = vpop.permute.xlu0 %4053
        %4055 = vrot.lane.b32.xlu0 %v4041, 32
        %v4056 = vpop.permute.xlu0 %4055
        %4057 = vrot.lane.b32.xlu0 %v4044, 32
        %v4058 = vpop.permute.xlu0 %4057
        %v4063 = vsel %vm437, %v3804, %v4052
        %v4064 = vsel %vm437, %v3807, %v4054
        %v4065 = vsel %vm437, %v3812, %v4056
        %v4066 = vsel %vm437, %v3815, %v4058
        %v4067 = vpack.c.bf16 %v4064, %v4063
        %v4068 = vpack.c.bf16 %v4066, %v4065
        %v4070 = vsel %vm1029, %v4067, 0
        %v4073 = vsel %vm1029, %v4068, 0
        %4075 = vmatprep.subr.bf16.mxu0 0
        %4076 = vmatpush1.bf16.msra.mxu0 %v1490
        %4077 = vmatprep.subr.bf16.mxu0 0
        %4078 = vmatpush1.bf16.msra.mxu0 %v1491
        %4079 = vmatprep.subr.bf16.mxu0 0
        %4080 = vmatpush1.bf16.msra.mxu0 %v1492
        %4081 = vmatprep.subr.bf16.mxu0 0
        %4082 = vmatpush1.bf16.msra.mxu0 %v1493
        %4083 = vmatprep.subr.bf16.mxu0 0
        %4084 = vmatpush1.bf16.msra.mxu0 0
        %4085 = vmatprep.subr.bf16.mxu0 0
        %4086 = vmatpush1.bf16.msra.mxu0 0
        %4087 = vmatprep.subr.bf16.mxu0 0
        %4088 = vmatpush1.bf16.msra.mxu0 0
        %4089 = vmatprep.subr.bf16.mxu0 0
        %4090 = vmatpush1.bf16.msra.mxu0 0
        %4091 = vmatprep.subr.bf16.mxu0 0
        %4092 = vmatpush1.bf16.msra.mxu0 0
        %4093 = vmatprep.subr.bf16.mxu0 0
        %4094 = vmatpush1.bf16.msra.mxu0 0
        %4095 = vmatprep.subr.bf16.mxu0 0
        %4096 = vmatpush1.bf16.msra.mxu0 0
        %4097 = vmatprep.subr.bf16.mxu0 0
        %4098 = vmatpush1.bf16.msra.mxu0 0
        %4099 = vmatprep.subr.bf16.mxu0 0
        %4100 = vmatpush1.bf16.msra.mxu0 0
        %4101 = vmatprep.subr.bf16.mxu0 0
        %4102 = vmatpush1.bf16.msra.mxu0 0
        %4103 = vmatprep.subr.bf16.mxu0 0
        %4104 = vmatpush1.bf16.msra.mxu0 0
        %4105 = vmatprep.subr.bf16.mxu0 0
        %4106 = vmatpush1.bf16.msra.mxu0 0
        %4107 = vmatprep.mubr.bf16.mxu0 0
        %4108 = vmatmul.mubr.bf16.gmra.mrb[0].mxu0 %v4070
        %v4109 = vpop.f32.mrb[0].mxu0
        %v4110 = vadd.f32 0.0, %v4109
        %v4111 = vpop.f32.mrb[0].mxu0
        %v4112 = vpop.f32.mrb[0].mxu0
        %v4113 = vadd.f32 0.0, %v4112
        %v4114 = vpop.f32.mrb[0].mxu0
        %4115 = vmatprep.mubr.bf16.mxu0 0
        %4116 = vmatmul.mubr.bf16.gmra.mrb[0].mxu0 %v4073
        %v4117 = vpop.f32.mrb[0].mxu0
        %v4118 = vadd.f32 0.0, %v4117
        %v4119 = vpop.f32.mrb[0].mxu0
        %v4120 = vpop.f32.mrb[0].mxu0
        %v4121 = vadd.f32 0.0, %v4120
        %v4122 = vpop.f32.mrb[0].mxu0
        %4123 = vdwg.mxu0
        %v4124 = vmax.f32 %v4110, 0.0
        %v4125 = vmax.f32 %v4113, 0.0
        %v4126 = vmax.f32 %v4118, 0.0
        %v4127 = vmax.f32 %v4121, 0.0
        %v4128 = vpack.c.bf16 %v4125, %v4124
        %v4129 = vpack.c.bf16 %v4127, %v4126
        %v4131 = vsel %vm782, %v4129, 0
        %4133 = vmatprep.subr.bf16.mxu0 0
        %4134 = vmatpush1.bf16.msra.mxu0 %v4128
        %4135 = vmatprep.subr.bf16.mxu0 0
        %4136 = vmatpush1.bf16.msra.mxu0 %v4131
        %4137 = vmatprep.subr.bf16.mxu0 0
        %4138 = vmatpush1.bf16.msra.mxu0 0
        %4139 = vmatprep.subr.bf16.mxu0 0
        %4140 = vmatpush1.bf16.msra.mxu0 0
        %4141 = vmatprep.subr.bf16.mxu0 0
        %4142 = vmatpush1.bf16.msra.mxu0 0
        %4143 = vmatprep.subr.bf16.mxu0 0
        %4144 = vmatpush1.bf16.msra.mxu0 0
        %4145 = vmatprep.subr.bf16.mxu0 0
        %4146 = vmatpush1.bf16.msra.mxu0 0
        %4147 = vmatprep.subr.bf16.mxu0 0
        %4148 = vmatpush1.bf16.msra.mxu0 0
        %4149 = vmatprep.subr.bf16.mxu0 0
        %4150 = vmatpush1.bf16.msra.mxu0 0
        %4151 = vmatprep.subr.bf16.mxu0 0
        %4152 = vmatpush1.bf16.msra.mxu0 0
        %4153 = vmatprep.subr.bf16.mxu0 0
        %4154 = vmatpush1.bf16.msra.mxu0 0
        %4155 = vmatprep.subr.bf16.mxu0 0
        %4156 = vmatpush1.bf16.msra.mxu0 0
        %4157 = vmatprep.subr.bf16.mxu0 0
        %4158 = vmatpush1.bf16.msra.mxu0 0
        %4159 = vmatprep.subr.bf16.mxu0 0
        %4160 = vmatpush1.bf16.msra.mxu0 0
        %4161 = vmatprep.subr.bf16.mxu0 0
        %4162 = vmatpush1.bf16.msra.mxu0 0
        %4163 = vmatprep.subr.bf16.mxu0 0
        %4164 = vmatpush1.bf16.msra.mxu0 0
        %4165 = vmatprep.mubr.bf16.mxu0 0
        %4166 = vmatmul.mubr.bf16.gmra.mrb[0].mxu0 %v1561
        %v4167 = vpop.f32.mrb[0].mxu0
        %v4168 = vadd.f32 0.0, %v4167
        %v4169 = vpop.f32.mrb[0].mxu0
        %v4170 = vpop.f32.mrb[0].mxu0
        %v4171 = vadd.f32 0.0, %v4170
        %v4172 = vpop.f32.mrb[0].mxu0
        %4173 = vmatprep.mubr.bf16.mxu0 0
        %4174 = vmatmul.mubr.bf16.gmra.mrb[0].mxu0 %v1564
        %v4175 = vpop.f32.mrb[0].mxu0
        %v4176 = vadd.f32 0.0, %v4175
        %v4177 = vpop.f32.mrb[0].mxu0
        %v4178 = vpop.f32.mrb[0].mxu0
        %v4179 = vadd.f32 0.0, %v4178
        %v4180 = vpop.f32.mrb[0].mxu0
        %4181 = vmatprep.mubr.bf16.mxu0 0
        %4182 = vmatmul.mubr.bf16.gmra.mrb[0].mxu0 %v1567
        %v4183 = vpop.f32.mrb[0].mxu0
        %v4184 = vadd.f32 0.0, %v4183
        %v4185 = vpop.f32.mrb[0].mxu0
        %v4186 = vpop.f32.mrb[0].mxu0
        %v4187 = vadd.f32 0.0, %v4186
        %v4188 = vpop.f32.mrb[0].mxu0
        %4189 = vmatprep.mubr.bf16.mxu0 0
        %4190 = vmatmul.mubr.bf16.gmra.mrb[0].mxu0 %v1570
        %v4191 = vpop.f32.mrb[0].mxu0
        %v4192 = vadd.f32 0.0, %v4191
        %v4193 = vpop.f32.mrb[0].mxu0
        %v4194 = vpop.f32.mrb[0].mxu0
        %v4195 = vadd.f32 0.0, %v4194
        %v4196 = vpop.f32.mrb[0].mxu0
        %4197 = vmatprep.mubr.bf16.mxu0 0
        %4198 = vmatmul.mubr.bf16.gmra.mrb[0].mxu0 %v1573
        %v4199 = vpop.f32.mrb[0].mxu0
        %v4200 = vadd.f32 0.0, %v4199
        %v4201 = vpop.f32.mrb[0].mxu0
        %v4202 = vpop.f32.mrb[0].mxu0
        %v4203 = vadd.f32 0.0, %v4202
        %v4204 = vpop.f32.mrb[0].mxu0
        %4205 = vdwg.mxu0
        %v4206 = vadd.f32 %v3731, %v4168
        %v4207 = vadd.f32 %v3732, %v4171
        %v4208 = vadd.f32 %v3733, %v4176
        %v4209 = vadd.f32 %v3734, %v4179
        %v4210 = vadd.f32 %v3735, %v4184
        %v4211 = vadd.f32 %v3736, %v4187
        %v4212 = vadd.f32 %v3737, %v4192
        %v4213 = vadd.f32 %v3738, %v4195
        %v4214 = vadd.f32 %v3739, %v4200
        %v4215 = vadd.f32 %v3740, %v4203
        %v4219 = vrot.slane %v4208, 3
        %v4220 = vrot.slane %v4209, 3
        %v4221 = vsel %vm1664, %v4219, %v4220
        %v4222 = vrot.slane %v4210, 3
        %v4223 = vsel %vm1664, %v4220, %v4222
        %v4227 = vadd.f32 %v4206, %v4221
        %v4228 = vadd.f32 %v4207, %v4223
        %v4229 = vadd.f32 %v4208, %v4222
        %v4233 = vrot.slane %v4210, 6
        %v4234 = vrot.slane %v4211, 6
        %v4235 = vsel %vm1679, %v4233, %v4234
        %v4236 = vrot.slane %v4212, 6
        %v4237 = vsel %vm1679, %v4234, %v4236
        %v4238 = vrot.slane %v4213, 6
        %v4239 = vsel %vm1679, %v4236, %v4238
        %v4243 = vadd.f32 %v4227, %v4235
        %v4244 = vadd.f32 %v4228, %v4237
        %v4245 = vadd.f32 %v4229, %v4239
        %v4248 = vrot.slane %v4213, 1
        %v4249 = vrot.slane %v4214, 1
        %v4250 = vsel %vm1695, %v4248, %v4249
        %v4251 = vrot.slane %v4215, 1
        %v4252 = vsel %vm1695, %v4249, %v4251
        %v4256 = vadd.f32 %v4243, %v4250
        %v4257 = vadd.f32 %v4244, %v4252
        %v4258 = vadd.f32 %v4245, %v4251
        %v4259 = vmul.f32 %v4256, 0.25
        %v4260 = vmul.f32 %v4257, 0.25
        %v4261 = vmul.f32 %v4258, 0.25
        %s4262 = scalar_lea.vmem %s333, 48
        %4263 = vst.msk [vmem:[%s4262] sm:$0xff] %vm546, %v4259
        %4264 = vst.msk [vmem:[%s4262 + $0x8] sm:$0xff] %vm546, %v4260
        %4265 = vst.msk [vmem:[%s4262 + $0x10] sm:$0x7] %vm1712, %v4261
        %s4266 = scalar_lea.vmem %s313, 160 [#allocation2]
        %4267 = vst.msk [vmem:[%s4266] sm:$0xff] %vm650, %v3343
        %4268 = vst.msk [vmem:[%s4266 + $0x8] sm:$0xff] %vm650, %v3345
        %4269 = vst.msk [vmem:[%s4266 + $0x10] sm:$0xff] %vm650, %v3347
        %4270 = vst.msk [vmem:[%s4266 + $0x18] sm:$0xff] %vm650, %v3349
        %4271 = vst.msk [vmem:[%s4266 + $0x20] sm:$0xff] %vm650, %v3351
        %4272 = vst.msk [vmem:[%s4266 + $0x28] sm:$0xff] %vm650, %v3353
        %4273 = vst.msk [vmem:[%s4266 + $0x30] sm:$0xff] %vm650, %v3355
        %4274 = vst.msk [vmem:[%s4266 + $0x38] sm:$0xff] %vm650, %v3357
        %4275 = vst.msk [vmem:[%s4266 + $0x40] sm:$0xff] %vm650, %v3359
        %4276 = vst.msk [vmem:[%s4266 + $0x48] sm:$0xf] %vm678, %v3361
        %s4277 = scalar_lea.vmem %s320, 64 [#allocation4]
        %4278 = vst.msk [vmem:[%s4277] sm:$0xff] %vm1363, %v3981
        %4279 = vst.msk [vmem:[%s4277 + $0x8] sm:$0xff] %vm1363, %v3983
        %4280 = vst.msk [vmem:[%s4277 + $0x10] sm:$0xff] %vm1363, %v3985
        %4281 = vst.msk [vmem:[%s4277 + $0x18] sm:$0xf] %vm1373, %v3987
        %s4282 = smul.u32 3, %s26
        %p4283 = scmp.lt.s32.totalorder %s4282, 5
        %s4284 = scalar_select %p4283, %s4282, 5
        %s4285 = smul.addr %s4284, 3
        %s4286 = smul.addr %s4285, 8
        %s4287 = scalar_lea.vmem %s6, %s4286
        %s4288 = sand.u32 %s191, 1
        %s4289 = scalar_lea.sflag [#allocation3], %s4288
        %s4290 = sand.u32 %s191, 1
        %s4291 = smul.addr %s4290, 240
        %s4292 = scalar_lea.vmem [#allocation2], %s4291
        %s4293 = sand.u32 %s217, 1
        %s4294 = scalar_lea.sflag [#allocation5], %s4293
        %s4295 = sand.u32 %s217, 1
        %s4296 = smul.addr %s4295, 96
        %s4297 = scalar_lea.vmem [#allocation4], %s4296
        // Predicated region
        $region45: #{dctgcn_forward.1} parent=43 // pred_check
          %p4298 = pneg %p175
        $region46: #{dctgcn_forward.1} parent=43 // pred_check_branch
          %4300 = sbr.rel (%p4298) target = $region48
        $region47: #{dctgcn_forward.1} parent=43 // pred_region
          %s4301 = smul.u32 3, %s26
        $region48: #{dctgcn_forward.1} parent=43 // pred_fallthru
          _
        // Predicated region
        $region49: #{dctgcn_forward.1} parent=43 // pred_check
          %p4302 = pneg %p201
        $region50: #{dctgcn_forward.1} parent=43 // pred_check_branch
          %4304 = sbr.rel (%p4302) target = $region52
        $region51: #{dctgcn_forward.1} parent=43 // pred_region
          %s4305 = smul.u32 3, %s26
          %s4307 = ssub.s32 3840, 3840
          %4308 = vsyncadd %s4289, %s4307
          %s4309 = smul.addr %s4305, 10
          %s4310 = smul.addr %s4309, 128
          %s4311 = scalar_lea.hbm %s7, %s4310
          %s4312 = sshll.u32 %s4292, 4
          %s4313 = int_to_ptr.vmem [resolvable:$true] %s4312
          %4318 = dma.vmem_to_hbm [thread:$0]  %s4313, 3840, %s4311, %s4289, 128, 128, 8
        $region52: #{dctgcn_forward.1} parent=43 // pred_fallthru
          _
        // Predicated region
        $region53: #{dctgcn_forward.1} parent=43 // pred_check
          %p4319 = pneg %p227
        $region54: #{dctgcn_forward.1} parent=43 // pred_check_branch
          %4321 = sbr.rel (%p4319) target = $region56
        $region55: #{dctgcn_forward.1} parent=43 // pred_region
          %s4322 = smul.u32 3, %s26
          %s4324 = ssub.s32 1536, 1536
          %4325 = vsyncadd %s4294, %s4324
          %s4326 = smul.addr %s4322, 4
          %s4327 = smul.addr %s4326, 128
          %s4328 = scalar_lea.hbm %s8, %s4327
          %s4329 = sshll.u32 %s4297, 4
          %s4330 = int_to_ptr.vmem [resolvable:$true] %s4329
          %4335 = dma.vmem_to_hbm [thread:$0]  %s4330, 1536, %s4328, %s4294, 128, 128, 8
        $region56: #{dctgcn_forward.1} parent=43 // pred_fallthru
          _
      $region44: #{dctgcn_forward.1} parent=5 // pred_fallthru
        _
      %p4336 = scmp.le.s32.totalorder 2, %s21
      // Predicated region
      $region57: #{dctgcn_forward.1} parent=5 // pred_check
        %p4337 = pneg %p4336
      $region58: #{dctgcn_forward.1} parent=5 // pred_check_branch
        %4339 = sbr.rel (%p4337) target = $region60
      $region59: #{dctgcn_forward.1} parent=5 // pred_region
        %s4340 = ssub.s32 %s21, 2
        // Predicated region
        $region61: #{dctgcn_forward.1} parent=59 // pred_check
          %p4341 = pneg %p181
        $region62: #{dctgcn_forward.1} parent=59 // pred_check_branch
          %4343 = sbr.rel (%p4341) target = $region64
        $region63: #{dctgcn_forward.1} parent=59 // pred_region
          %s4344 = smul.u32 3, %s27
          %p4345 = scmp.lt.s32.totalorder %s4344, 5
          %s4346 = scalar_select %p4345, %s4344, 5
          %s4347 = smul.addr %s4346, 3
          %s4348 = smul.addr %s4347, 8
          %s4349 = scalar_lea.vmem %s6, %s4348
        $region64: #{dctgcn_forward.1} parent=59 // pred_fallthru
          _
        // Predicated region
        $region65: #{dctgcn_forward.1} parent=59 // pred_check
          %p4350 = pneg %p207
        $region66: #{dctgcn_forward.1} parent=59 // pred_check_branch
          %4352 = sbr.rel (%p4350) target = $region68
        $region67: #{dctgcn_forward.1} parent=59 // pred_region
          %s4353 = sand.u32 %s192, 1
          %s4354 = scalar_lea.sflag [#allocation3], %s4353
          %s4355 = sand.u32 %s192, 1
          %s4356 = smul.addr %s4355, 240
          %s4357 = scalar_lea.vmem [#allocation2], %s4356
          %4358 = dma.done %s4354, 3840
        $region68: #{dctgcn_forward.1} parent=59 // pred_fallthru
          _
        // Predicated region
        $region69: #{dctgcn_forward.1} parent=59 // pred_check
          %p4359 = pneg %p233
        $region70: #{dctgcn_forward.1} parent=59 // pred_check_branch
          %4361 = sbr.rel (%p4359) target = $region72
        $region71: #{dctgcn_forward.1} parent=59 // pred_region
          %s4362 = sand.u32 %s218, 1
          %s4363 = scalar_lea.sflag [#allocation5], %s4362
          %s4364 = sand.u32 %s218, 1
          %s4365 = smul.addr %s4364, 96
          %s4366 = scalar_lea.vmem [#allocation4], %s4365
          %4367 = dma.done %s4363, 1536
        $region72: #{dctgcn_forward.1} parent=59 // pred_fallthru
          _
      $region60: #{dctgcn_forward.1} parent=5 // pred_fallthru
        _
    $region6: #{dctgcn_forward.1} parent=1 // loop_footer
      %s25 = sadd.s32 1, %s21
    $region7: #{dctgcn_forward.1} parent=1 // loop_footer_branch
      %20 = sbr.rel target = $region3
    $region8: #{dctgcn_forward.1} parent=1 // loop_exit
      _
    %4368 = vsyncpa [#allocation3], 1
    %s4369 = scalar_lea.sflag [#allocation3], 1
    %4370 = vsyncpa %s4369, 1
    %4371 = vsyncpa [#allocation5], 1
    %s4372 = scalar_lea.sflag [#allocation5], 1
    %4373 = vsyncpa %s4372, 1

</llo_original>
